<compile_context>
chip_gen: v7x
topology: tpu7x:2x2x1
jax: 0.10.0
libtpu: 0.0.40
codegen_flags: <defaults>
</compile_context>

<pallas_src>
import math
import numpy as np
import jax
import jax.numpy as jnp
from jax import lax
from jax.experimental import pallas as pl
from jax.experimental.pallas import tpu as pltpu

N_FREQ  = 32
IN_DIM  = 3
ENC_DIM = IN_DIM * N_FREQ * 2      # 192 (tcnn Frequency encoding output dims)
HIDDEN  = 128                      # n_neurons
OUT_DIM = 3                        # n_output_dims
OUT_SUB = 8                        # sublane-padded output rows (rows 3..7 unused)
PER_FEAT = 2 * N_FREQ              # 64 encoding rows per input feature


def sunsky_kernel(d_ref, freq_ref, phase_ref, w1t_ref, w2t_ref, o_ref):
    # d_ref:   (3, tn)   batch on lanes
    # freq:    (192, 1)  pi * 2^f per encoding row
    # phase:   (192, 1)  0 / pi/2 per encoding row
    # w1t:     (128, 192) bf16   (W1 transposed)
    # w2t:     (8, 128)   f32    (W2 transposed, rows 3..7 zero)
    # o_ref:   (8, tn)
    d = d_ref[...].astype(jnp.float32)                                    # (3, tn)

    # normalize along the feature (sublane) axis; rsqrt rides the EUP slot.
    # (no eps: matches the reference's raw d / torch.norm(d) divide)
    inv_norm = lax.rsqrt(jnp.sum(d * d, axis=0, keepdims=True))           # (1, tn)
    x = (d * inv_norm + 1.0) * 0.5                                        # (3, tn)

    tn = d.shape[1]
    # Frequency encoding on the VPU: rows 0..63 read x[0], 64..127 x[1], 128..191 x[2].
    x_b = jnp.concatenate(
        [jnp.broadcast_to(x[f:f + 1, :], (PER_FEAT, tn)) for f in range(IN_DIM)],
        axis=0)                                                            # (192, tn)
    arg = x_b * freq_ref[...] + phase_ref[...]                             # (192, tn)
    enc = jnp.sin(arg).astype(jnp.bfloat16)                                # (192, tn) bf16

    # CutlassMLP (bias-free): 192 -> 128 (ReLU) -> 3 (Sigmoid), all batch-on-lanes.
    h = jnp.maximum(
        jnp.dot(w1t_ref[...], enc, preferred_element_type=jnp.float32), 0.0)   # (128, tn)
    logits = jnp.dot(w2t_ref[...], h, preferred_element_type=jnp.float32)      # (8, tn)

    # sigmoid(x) = 0.5 * (tanh(x/2) + 1): one EUP op per element, no VALU divide.
    o_ref[...] = (0.5 * (jnp.tanh(0.5 * logits) + 1.0)).astype(o_ref.dtype)


def build_frequency_encoding_params():
    """(192,1) frequency column and (192,1) phase column for the tcnn Frequency encoding."""
    idx = np.arange(ENC_DIM)
    freq = (idx // 2) % N_FREQ                      # log2 frequency
    phase = (idx % 2) * (math.pi / 2.0)             # 0 -> sin, pi/2 -> cos
    freq_col = (math.pi * (2.0 ** freq)).astype(np.float32).reshape(ENC_DIM, 1)
    phase_col = phase.astype(np.float32).reshape(ENC_DIM, 1)
    return jnp.asarray(freq_col), jnp.asarray(phase_col)


def sunsky_forward(d, w1, w2, *, tn=4096):
    """d: (N, 3) f32, w1: (192, 128) f32, w2: (128, 3) f32 -> (N, 3) f32."""
    n = d.shape[0]

    # Tile selection: multiple of 128, no larger than the lane-aligned batch, and
    # shrunk so the parallel grid has >= 2 steps when possible (v7x: 2 TensorCores).
    n_aligned = pl.cdiv(n, 128) * 128
    tn = min(tn, n_aligned)
    if n_aligned >= 256:
        tn = min(tn, pl.cdiv(n_aligned, 2 * 128) * 128)
    tn = max(tn, 128)
    n_pad = pl.cdiv(n_aligned, tn) * tn

    # Batch-on-lanes: transpose d to (3, N) and pad the batch with ones (no NaNs).
    dt = d.T.astype(jnp.float32)                                    # (3, n)
    if n_pad != n:
        dt = jnp.concatenate([dt, jnp.ones((IN_DIM, n_pad - n), dt.dtype)], axis=1)

    freq_col, phase_col = build_frequency_encoding_params()

    # W1 transposed to (128, 192) bf16 for the MXU; W2 transposed and padded to 8 rows.
    w1t = w1.T.astype(jnp.bfloat16)                                 # (128, 192)
    w2t = jnp.zeros((OUT_SUB, HIDDEN), jnp.float32).at[:OUT_DIM, :].set(w2.T)

    cost = pl.CostEstimate(
        flops=2 * n_pad * (ENC_DIM + ENC_DIM * HIDDEN + HIDDEN * OUT_SUB),
        transcendentals=n_pad * (ENC_DIM + OUT_SUB + 1),
        bytes_accessed=4 * n_pad * (IN_DIM + OUT_SUB)
        + 2 * ENC_DIM * HIDDEN + 4 * (OUT_SUB * HIDDEN + 2 * ENC_DIM),
    )

    out_t = pl.pallas_call(
        sunsky_kernel,
        out_shape=jax.ShapeDtypeStruct((OUT_SUB, n_pad), jnp.float32),
        grid_spec=pltpu.PrefetchScalarGridSpec(
            num_scalar_prefetch=0,
            grid=(n_pad // tn,),
            in_specs=[
                pl.BlockSpec((IN_DIM, tn), lambda i: (0, i)),          # d (batch on lanes)
                pl.BlockSpec((ENC_DIM, 1), lambda i: (0, 0)),          # frequency column
                pl.BlockSpec((ENC_DIM, 1), lambda i: (0, 0)),          # phase column
                pl.BlockSpec((HIDDEN, ENC_DIM), lambda i: (0, 0)),     # W1^T (bf16)
                pl.BlockSpec((OUT_SUB, HIDDEN), lambda i: (0, 0)),     # W2^T (padded to 8 rows)
            ],
            out_specs=pl.BlockSpec((OUT_SUB, tn), lambda i: (0, i)),   # lane-dense (8, tn)
        ),
        compiler_params=pltpu.CompilerParams(
            dimension_semantics=("parallel",),
            vmem_limit_bytes=32 * 1024 * 1024),
        cost_estimate=cost,
    )(dt, freq_col, phase_col, w1t, w2t)

    # (8, n_pad) -> (N, 3): tiny slice + transpose.
    return out_t[:OUT_DIM, :n].T


if __name__ == "__main__":
    key = jax.random.PRNGKey(0)
    k_d, k_w1, k_w2 = jax.random.split(key, 3)

    N = 256
    d = jax.random.normal(k_d, (N, IN_DIM), dtype=jnp.float32)

    # Deterministic synthetic parameters (tcnn CutlassMLP has no bias terms).
    w1 = jax.random.normal(k_w1, (ENC_DIM, HIDDEN), dtype=jnp.float32) * (1.0 / math.sqrt(ENC_DIM))
    w2 = jax.random.normal(k_w2, (HIDDEN, OUT_DIM), dtype=jnp.float32) * (1.0 / math.sqrt(HIDDEN))

    # `ambient` parameter from the module (unused by forward, kept for fidelity).
    ambient = jnp.array([0.30112045, 0.32212885, 0.35714286], jnp.float32)
    # TODO(synk): `ambient` is never referenced by SunSkyModel.forward; left unused.

    rgbs = sunsky_forward(d, w1, w2)
    jax.block_until_ready(rgbs)
    assert rgbs.shape == (N, OUT_DIM) and rgbs.dtype == jnp.float32
    assert bool(jnp.all(jnp.isfinite(rgbs)))
    assert bool(jnp.all((rgbs >= 0.0) & (rgbs <= 1.0)))
    print("KERNEL_OK")
</pallas_src>

<mosaic_0001>
module attributes {stable_mosaic.version = 11 : i64} {
  func.func @sunsky_kernel(%arg0: i32, %arg1: memref<3x128xf32, #tpu.memory_space<vmem>>, %arg2: memref<192x1xf32, #tpu.memory_space<vmem>>, %arg3: memref<192x1xf32, #tpu.memory_space<vmem>>, %arg4: memref<128x192xbf16, #tpu.memory_space<vmem>>, %arg5: memref<8x128xf32, #tpu.memory_space<vmem>>, %arg6: memref<8x128xf32, #tpu.memory_space<vmem>>) attributes {dimension_semantics = [#tpu.dimension_semantics<parallel>], iteration_bounds = array<i64: 2>, scalar_prefetch = 0 : i64, scratch_operands = 0 : i64, tpu.core_type = #tpu.core_type<tc>, window_params = [{transform_indices = @transform_0, window_bounds = array<i64: 3, 128>}, {pipeline_mode = #tpu.pipeline_mode<synchronous>, transform_indices = @transform_1, window_bounds = array<i64: 192, 1>}, {pipeline_mode = #tpu.pipeline_mode<synchronous>, transform_indices = @transform_2, window_bounds = array<i64: 192, 1>}, {pipeline_mode = #tpu.pipeline_mode<synchronous>, transform_indices = @transform_3, window_bounds = array<i64: 128, 192>}, {pipeline_mode = #tpu.pipeline_mode<synchronous>, transform_indices = @transform_4, window_bounds = array<i64: 8, 128>}, {transform_indices = @transform_5, window_bounds = array<i64: 8, 128>}]} {
    %c0 = arith.constant 0 : index
    %c0_0 = arith.constant 0 : index
    %0 = vector.load %arg1[%c0, %c0_0] : memref<3x128xf32, #tpu.memory_space<vmem>>, vector<3x128xf32>
    %1 = arith.mulf %0, %0 : vector<3x128xf32>
    %cst = arith.constant dense<0.000000e+00> : vector<128xf32>
    %2 = vector.multi_reduction <add>, %1, %cst [0] : vector<3x128xf32> to vector<128xf32>
    %3 = vector.shape_cast %2 : vector<128xf32> to vector<1x128xf32>
    %4 = math.rsqrt %3 : vector<1x128xf32>
    %5 = vector.broadcast %4 : vector<1x128xf32> to vector<3x128xf32>
    %6 = arith.mulf %0, %5 : vector<3x128xf32>
    %cst_1 = arith.constant 1.000000e+00 : f32
    %7 = vector.broadcast %cst_1 : f32 to vector<3x128xf32>
    %8 = arith.addf %6, %7 : vector<3x128xf32>
    %cst_2 = arith.constant 5.000000e-01 : f32
    %9 = vector.broadcast %cst_2 : f32 to vector<3x128xf32>
    %10 = arith.mulf %8, %9 : vector<3x128xf32>
    %11 = vector.extract_strided_slice %10 {offsets = [0, 0], sizes = [1, 128], strides = [1, 1]} : vector<3x128xf32> to vector<1x128xf32>
    %12 = vector.shape_cast %11 : vector<1x128xf32> to vector<1x128xf32>
    %13 = vector.broadcast %12 : vector<1x128xf32> to vector<64x128xf32>
    %14 = vector.extract_strided_slice %10 {offsets = [1, 0], sizes = [1, 128], strides = [1, 1]} : vector<3x128xf32> to vector<1x128xf32>
    %15 = vector.shape_cast %14 : vector<1x128xf32> to vector<1x128xf32>
    %16 = vector.broadcast %15 : vector<1x128xf32> to vector<64x128xf32>
    %17 = vector.extract_strided_slice %10 {offsets = [2, 0], sizes = [1, 128], strides = [1, 1]} : vector<3x128xf32> to vector<1x128xf32>
    %18 = vector.shape_cast %17 : vector<1x128xf32> to vector<1x128xf32>
    %19 = vector.broadcast %18 : vector<1x128xf32> to vector<64x128xf32>
    %20 = tpu.concatenate %13, %16, %19 in 0 : vector<64x128xf32>, vector<64x128xf32>, vector<64x128xf32> -> vector<192x128xf32>
    %c0_3 = arith.constant 0 : index
    %c0_4 = arith.constant 0 : index
    %21 = vector.load %arg2[%c0_3, %c0_4] : memref<192x1xf32, #tpu.memory_space<vmem>>, vector<192x1xf32>
    %22 = vector.broadcast %21 : vector<192x1xf32> to vector<192x128xf32>
    %23 = arith.mulf %20, %22 : vector<192x128xf32>
    %c0_5 = arith.constant 0 : index
    %c0_6 = arith.constant 0 : index
    %24 = vector.load %arg3[%c0_5, %c0_6] : memref<192x1xf32, #tpu.memory_space<vmem>>, vector<192x1xf32>
    %25 = vector.broadcast %24 : vector<192x1xf32> to vector<192x128xf32>
    %26 = arith.addf %23, %25 : vector<192x128xf32>
    %27 = math.sin %26 : vector<192x128xf32>
    %28 = arith.truncf %27 : vector<192x128xf32> to vector<192x128xbf16>
    %c0_7 = arith.constant 0 : index
    %c0_8 = arith.constant 0 : index
    %29 = vector.load %arg4[%c0_7, %c0_8] : memref<128x192xbf16, #tpu.memory_space<vmem>>, vector<128x192xbf16>
    %cst_9 = arith.constant dense<0.000000e+00> : vector<128x128xf32>
    %30 = tpu.matmul %29, %28, %cst_9 {dimension_numbers = #tpu.dot_dimension_numbers<[1], [0], [0], [1], [0, 0, 1, 1], [], []>} : vector<128x192xbf16>, vector<192x128xbf16>, vector<128x128xf32> -> vector<128x128xf32>
    %cst_10 = arith.constant 0.000000e+00 : f32
    %31 = vector.broadcast %cst_10 : f32 to vector<128x128xf32>
    %32 = arith.maximumf %30, %31 : vector<128x128xf32>
    %c0_11 = arith.constant 0 : index
    %c0_12 = arith.constant 0 : index
    %33 = vector.load %arg5[%c0_11, %c0_12] : memref<8x128xf32, #tpu.memory_space<vmem>>, vector<8x128xf32>
    %cst_13 = arith.constant dense<0.000000e+00> : vector<8x128xf32>
    %34 = tpu.matmul %33, %32, %cst_13 {dimension_numbers = #tpu.dot_dimension_numbers<[1], [0], [0], [1], [0, 0, 1, 1], [], []>} : vector<8x128xf32>, vector<128x128xf32>, vector<8x128xf32> -> vector<8x128xf32>
    %cst_14 = arith.constant 5.000000e-01 : f32
    %35 = vector.broadcast %cst_14 : f32 to vector<8x128xf32>
    %36 = arith.mulf %35, %34 : vector<8x128xf32>
    %37 = math.tanh %36 : vector<8x128xf32>
    %cst_15 = arith.constant 1.000000e+00 : f32
    %38 = vector.broadcast %cst_15 : f32 to vector<8x128xf32>
    %39 = arith.addf %37, %38 : vector<8x128xf32>
    %cst_16 = arith.constant 5.000000e-01 : f32
    %40 = vector.broadcast %cst_16 : f32 to vector<8x128xf32>
    %41 = arith.mulf %40, %39 : vector<8x128xf32>
    %c0_17 = arith.constant 0 : index
    %c0_18 = arith.constant 0 : index
    %42 = vector.load %arg6[%c0_17, %c0_18] : memref<8x128xf32, #tpu.memory_space<vmem>>, vector<8x128xf32>
    tpu.vector_store %arg6[%c0_17, %c0_18], %41 {strides = array<i32>} : memref<8x128xf32, #tpu.memory_space<vmem>>, vector<8x128xf32>,
    return
  }
  func.func @transform_0(%arg0: i32) -> (i32, i32) {
    %c0_i32 = arith.constant 0 : i32
    %c0_i32_0 = arith.constant 0 : i32
    return %c0_i32, %arg0 : i32, i32
  }
  func.func @transform_1(%arg0: i32) -> (i32, i32) {
    %c0_i32 = arith.constant 0 : i32
    %c0_i32_0 = arith.constant 0 : i32
    %c0_i32_1 = arith.constant 0 : i32
    return %c0_i32, %c0_i32_0 : i32, i32
  }
  func.func @transform_2(%arg0: i32) -> (i32, i32) {
    %c0_i32 = arith.constant 0 : i32
    %c0_i32_0 = arith.constant 0 : i32
    %c0_i32_1 = arith.constant 0 : i32
    return %c0_i32, %c0_i32_0 : i32, i32
  }
  func.func @transform_3(%arg0: i32) -> (i32, i32) {
    %c0_i32 = arith.constant 0 : i32
    %c0_i32_0 = arith.constant 0 : i32
    %c0_i32_1 = arith.constant 0 : i32
    return %c0_i32, %c0_i32_0 : i32, i32
  }
  func.func @transform_4(%arg0: i32) -> (i32, i32) {
    %c0_i32 = arith.constant 0 : i32
    %c0_i32_0 = arith.constant 0 : i32
    %c0_i32_1 = arith.constant 0 : i32
    return %c0_i32, %c0_i32_0 : i32, i32
  }
  func.func @transform_5(%arg0: i32) -> (i32, i32) {
    %c0_i32 = arith.constant 0 : i32
    %c0_i32_0 = arith.constant 0 : i32
    return %c0_i32, %arg0 : i32, i32
  }
}

</mosaic_0001>

<llo_original>
// kernel: tpu_custom_call.1
$region0: #{tpu_custom_call.1}
  #allocation0 [shape = 'u32[]', space=smem, size = 0x4, offset = 0x4, fixed_abs, tag = 'smem constant byte address 0x4 - core index']
  #allocation1 [shape = 'u32[144,128]{1,0:T(1,128)}', space=vmem, size = 0x12000, scoped, tag = 'internal scratch']
  %s0 = inlined_call_operand.vmem [shape: f32[3,256], index: 0, kind: input, shape index: {}]
  %s1 = inlined_call_operand.vmem [shape: f32[192,1], index: 1, kind: input, shape index: {}]
  %s2 = inlined_call_operand.vmem [shape: f32[192,1], index: 2, kind: input, shape index: {}]
  %s3 = inlined_call_operand.vmem [shape: bf16[128,192], index: 3, kind: input, shape index: {}]
  %s4 = inlined_call_operand.vmem [shape: f32[8,128], index: 4, kind: input, shape index: {}]
  %s5 = inlined_call_operand.hbm [shape: f32[8,256], index: 5, kind: output, shape index: {}]
  %s6 = sld [smem:[#allocation0]]
  $region53: #{tpu_custom_call.1} parent=0
    _
  %s8 = ssub.s32 1, %s6
  %s9 = scalar_select 0, %s8, %s6
  $region1: #{tpu_custom_call.1} parent=0
    #allocation2 [shape = 'u8[8192]{0}', space=vmem, size = 0x2000, scoped, tag = 'output window, operand 0']
    #allocation3 [shape = 's32[2]{0}', space=sflag, size = 0x8, scoped, tag = 'scoped memory for tpu_custom_call.1']
    %10 = vsyncpa [#allocation3], 0
    %s11 = scalar_lea.sflag [#allocation3], 1
    %12 = vsyncpa %s11, 0
    loop: start=0, step=1, limit=4
    $region2: #{tpu_custom_call.1} parent=1 // loop_pre_header
      _
    $region3: #{tpu_custom_call.1} parent=1 // loop_header
      %s14 = sphi 0, %s18
      %p15 = scmp.ge.s32.totalorder %s14, 4
      %s24 = sphi 0, %s26
      %s27 = sphi 0, %s24
      %s28 = sphi 0, %s27
      %s44 = sphi 0, %s28
      %s48 = sphi 0, %s48
      %s50 = sphi 0, %s48
      %s51 = sphi 0, %s50
      %s65 = sphi 0, %s51
      %s69 = sphi 0, %s69
      %s71 = sphi 0, %s69
      %s72 = sphi 0, %s71
      %s86 = sphi 0, %s72
      %s90 = sphi 0, %s90
      %s92 = sphi 0, %s90
      %s93 = sphi 0, %s92
      %s107 = sphi 0, %s93
      %s111 = sphi 0, %s111
      %s113 = sphi 0, %s111
      %s114 = sphi 0, %s113
      %s128 = sphi 0, %s114
      %s134 = sphi 0, %s136
      %s137 = sphi 0, %s134
      %s138 = sphi 0, %s137
      %s154 = sphi 0, %s138
    $region4: #{tpu_custom_call.1} parent=1 // loop_header_branch
      %17 = sbr.rel (%p15) target = $region8
    $region5: #{tpu_custom_call.1} parent=1 // loop_body
      %s19 = ssub.s32 %s14, 1
      %s20 = ssub.s32 %s14, 2
      %s21 = sadd.s32 %s14, 1
      %s22 = ssub.s32 %s14, %s21
      %p23 = scmp.eq.s32.totalorder %s22, 0
      %s25 = sadd.s32 %s24, 1
      %s26 = scalar_select %p23, %s24, %s25
      %p29 = pneg %p23
      %p30 = scmp.eq.s32.totalorder %s14, 1
      %p31 = por %p29, %p30
      %p32 = scmp.ne.s32.totalorder %s24, %s27
      %p33 = scmp.eq.s32.totalorder %s14, 0
      %p34 = por %p32, %p33
      %p35 = scmp.ne.s32.totalorder %s24, %s27
      %p36 = scmp.eq.s32.totalorder %s19, 1
      %p37 = por %p35, %p36
      %p38 = scmp.ne.s32.totalorder %s27, %s28
      %p39 = scmp.eq.s32.totalorder %s19, 0
      %p40 = por %p38, %p39
      %p41 = scmp.ne.s32.totalorder %s27, %s28
      %p42 = scmp.eq.s32.totalorder %s20, 1
      %p43 = por %p41, %p42
      %p45 = scmp.ne.s32.totalorder %s28, %s44
      %p46 = scmp.eq.s32.totalorder %s20, 0
      %p47 = por %p45, %p46
      %s49 = sadd.s32 %s48, 1
      %p52 = scmp.eq.s32.totalorder %s14, 1
      %p53 = scmp.ne.s32.totalorder %s48, %s50
      %p54 = scmp.eq.s32.totalorder %s14, 0
      %p55 = por %p53, %p54
      %p56 = scmp.ne.s32.totalorder %s48, %s50
      %p57 = scmp.eq.s32.totalorder %s19, 1
      %p58 = por %p56, %p57
      %p59 = scmp.ne.s32.totalorder %s50, %s51
      %p60 = scmp.eq.s32.totalorder %s19, 0
      %p61 = por %p59, %p60
      %p62 = scmp.ne.s32.totalorder %s50, %s51
      %p63 = scmp.eq.s32.totalorder %s20, 1
      %p64 = por %p62, %p63
      %p66 = scmp.ne.s32.totalorder %s51, %s65
      %p67 = scmp.eq.s32.totalorder %s20, 0
      %p68 = por %p66, %p67
      %s70 = sadd.s32 %s69, 1
      %p73 = scmp.eq.s32.totalorder %s14, 1
      %p74 = scmp.ne.s32.totalorder %s69, %s71
      %p75 = scmp.eq.s32.totalorder %s14, 0
      %p76 = por %p74, %p75
      %p77 = scmp.ne.s32.totalorder %s69, %s71
      %p78 = scmp.eq.s32.totalorder %s19, 1
      %p79 = por %p77, %p78
      %p80 = scmp.ne.s32.totalorder %s71, %s72
      %p81 = scmp.eq.s32.totalorder %s19, 0
      %p82 = por %p80, %p81
      %p83 = scmp.ne.s32.totalorder %s71, %s72
      %p84 = scmp.eq.s32.totalorder %s20, 1
      %p85 = por %p83, %p84
      %p87 = scmp.ne.s32.totalorder %s72, %s86
      %p88 = scmp.eq.s32.totalorder %s20, 0
      %p89 = por %p87, %p88
      %s91 = sadd.s32 %s90, 1
      %p94 = scmp.eq.s32.totalorder %s14, 1
      %p95 = scmp.ne.s32.totalorder %s90, %s92
      %p96 = scmp.eq.s32.totalorder %s14, 0
      %p97 = por %p95, %p96
      %p98 = scmp.ne.s32.totalorder %s90, %s92
      %p99 = scmp.eq.s32.totalorder %s19, 1
      %p100 = por %p98, %p99
      %p101 = scmp.ne.s32.totalorder %s92, %s93
      %p102 = scmp.eq.s32.totalorder %s19, 0
      %p103 = por %p101, %p102
      %p104 = scmp.ne.s32.totalorder %s92, %s93
      %p105 = scmp.eq.s32.totalorder %s20, 1
      %p106 = por %p104, %p105
      %p108 = scmp.ne.s32.totalorder %s93, %s107
      %p109 = scmp.eq.s32.totalorder %s20, 0
      %p110 = por %p108, %p109
      %s112 = sadd.s32 %s111, 1
      %p115 = scmp.eq.s32.totalorder %s14, 1
      %p116 = scmp.ne.s32.totalorder %s111, %s113
      %p117 = scmp.eq.s32.totalorder %s14, 0
      %p118 = por %p116, %p117
      %p119 = scmp.ne.s32.totalorder %s111, %s113
      %p120 = scmp.eq.s32.totalorder %s19, 1
      %p121 = por %p119, %p120
      %p122 = scmp.ne.s32.totalorder %s113, %s114
      %p123 = scmp.eq.s32.totalorder %s19, 0
      %p124 = por %p122, %p123
      %p125 = scmp.ne.s32.totalorder %s113, %s114
      %p126 = scmp.eq.s32.totalorder %s20, 1
      %p127 = por %p125, %p126
      %p129 = scmp.ne.s32.totalorder %s114, %s128
      %p130 = scmp.eq.s32.totalorder %s20, 0
      %p131 = por %p129, %p130
      %s132 = ssub.s32 %s14, %s21
      %p133 = scmp.eq.s32.totalorder %s132, 0
      %s135 = sadd.s32 %s134, 1
      %s136 = scalar_select %p133, %s134, %s135
      %p139 = pneg %p133
      %p140 = scmp.eq.s32.totalorder %s14, 1
      %p141 = por %p139, %p140
      %p142 = scmp.ne.s32.totalorder %s134, %s137
      %p143 = scmp.eq.s32.totalorder %s14, 0
      %p144 = por %p142, %p143
      %p145 = scmp.ne.s32.totalorder %s134, %s137
      %p146 = scmp.eq.s32.totalorder %s19, 1
      %p147 = por %p145, %p146
      %p148 = scmp.ne.s32.totalorder %s137, %s138
      %p149 = scmp.eq.s32.totalorder %s19, 0
      %p150 = por %p148, %p149
      %p151 = scmp.ne.s32.totalorder %s137, %s138
      %p152 = scmp.eq.s32.totalorder %s20, 1
      %p153 = por %p151, %p152
      %p155 = scmp.ne.s32.totalorder %s138, %s154
      %p156 = scmp.eq.s32.totalorder %s20, 0
      %p157 = por %p155, %p156
      %p158 = scmp.le.s32.totalorder 1, %s14
      %p159 = scmp.lt.s32.totalorder %s14, 3
      %p160 = pnand %p158, %p159
      %p161 = pneg %p160
      // Predicated region
      $region9: #{tpu_custom_call.1} parent=5 // pred_check
        _
      $region10: #{tpu_custom_call.1} parent=5 // pred_check_branch
        %163 = sbr.rel (%p160) target = $region12
      $region11: #{tpu_custom_call.1} parent=5 // pred_region
        %s164 = ssub.s32 %s14, 1
        // Predicated region
        $region13: #{tpu_custom_call.1} parent=11 // pred_check
          %p165 = pneg %p61
        $region14: #{tpu_custom_call.1} parent=11 // pred_check_branch
          %167 = sbr.rel (%p165) target = $region16
        $region15: #{tpu_custom_call.1} parent=11 // pred_region
          _
        $region16: #{tpu_custom_call.1} parent=11 // pred_fallthru
          _
        // Predicated region
        $region17: #{tpu_custom_call.1} parent=11 // pred_check
          %p168 = pneg %p82
        $region18: #{tpu_custom_call.1} parent=11 // pred_check_branch
          %170 = sbr.rel (%p168) target = $region20
        $region19: #{tpu_custom_call.1} parent=11 // pred_region
          _
        $region20: #{tpu_custom_call.1} parent=11 // pred_fallthru
          _
        // Predicated region
        $region21: #{tpu_custom_call.1} parent=11 // pred_check
          %p171 = pneg %p103
        $region22: #{tpu_custom_call.1} parent=11 // pred_check_branch
          %173 = sbr.rel (%p171) target = $region24
        $region23: #{tpu_custom_call.1} parent=11 // pred_region
          _
        $region24: #{tpu_custom_call.1} parent=11 // pred_fallthru
          _
        // Predicated region
        $region25: #{tpu_custom_call.1} parent=11 // pred_check
          %p174 = pneg %p124
        $region26: #{tpu_custom_call.1} parent=11 // pred_check_branch
          %176 = sbr.rel (%p174) target = $region28
        $region27: #{tpu_custom_call.1} parent=11 // pred_region
          _
        $region28: #{tpu_custom_call.1} parent=11 // pred_fallthru
          _
      $region12: #{tpu_custom_call.1} parent=5 // pred_fallthru
        _
      %p177 = scmp.lt.s32.totalorder %s14, 2
      // Predicated region
      $region29: #{tpu_custom_call.1} parent=5 // pred_check
        %p178 = pneg %p177
      $region30: #{tpu_custom_call.1} parent=5 // pred_check_branch
        %180 = sbr.rel (%p178) target = $region32
      $region31: #{tpu_custom_call.1} parent=5 // pred_region
        // Predicated region
        $region33: #{tpu_custom_call.1} parent=31 // pred_check
          %p181 = pneg %p34
        $region34: #{tpu_custom_call.1} parent=31 // pred_check_branch
          %183 = sbr.rel (%p181) target = $region36
        $region35: #{tpu_custom_call.1} parent=31 // pred_region
          %p184 = scmp.lt.s32.totalorder %s14, 1
          %s185 = scalar_select %p184, %s14, 1
          %s186 = smul.addr %s185, 4
          %s187 = scalar_lea.vmem %s0, %s186
        $region36: #{tpu_custom_call.1} parent=31 // pred_fallthru
          _
      $region32: #{tpu_custom_call.1} parent=5 // pred_fallthru
        _
      %p188 = scmp.le.s32.totalorder 1, %s14
      %p189 = scmp.lt.s32.totalorder %s14, 3
      %p190 = pnand %p188, %p189
      %p191 = pneg %p190
      // Predicated region
      $region37: #{tpu_custom_call.1} parent=5 // pred_check
        _
      $region38: #{tpu_custom_call.1} parent=5 // pred_check_branch
        %193 = sbr.rel (%p190) target = $region40
      $region39: #{tpu_custom_call.1} parent=5 // pred_region
        %s194 = ssub.s32 %s14, 1
        %p195 = scmp.lt.s32.totalorder %s19, 1
        %s196 = scalar_select %p195, %s19, 1
        %s197 = smul.addr %s196, 4
        %s198 = scalar_lea.vmem %s0, %s197
        %p199 = pneg %p40
        %p200 = pneg %p37
        %p201 = pneg %p61
        %p202 = pneg %p58
        %p203 = pneg %p82
        %p204 = pneg %p79
        %p205 = pneg %p103
        %p206 = pneg %p100
        %p207 = pneg %p124
        %p208 = pneg %p121
        %p209 = pneg %p150
        %p210 = pneg %p147
        %s211 = sand.u32 %s137, 1
        %s212 = scalar_lea.sflag [#allocation3], %s211
        %s213 = sand.u32 %s137, 1
        %s214 = smul.addr %s213, 8
        %s215 = scalar_lea.vmem [#allocation2], %s214
        %p216 = scmp.lt.s32.totalorder %s19, 1
        %s217 = scalar_select %p216, %s19, 1
        %s218 = smul.addr %s217, 4
        %s219 = scalar_lea.vmem %s0, %s218
        %v221 = vld [vmem:[%s219] sm:$0x7]
        %v222 = vmul.f32 %v221, %v221
        %vm223 = vcmask 1042432
        %v224 = vsel %vm223, %v222, 0.0
        %v225 = vrot.slane %v224, 4
        %v226 = vadd.f32 %v224, %v225
        %v227 = vrot.slane %v226, 2
        %v228 = vadd.f32 %v226, %v227
        %v229 = vrot.slane %v228, 1
        %v230 = vadd.f32 %v228, %v229
        %v231 = vrsqrt.pop %v230
        %v232 = vmul.f32 %v221, %v231
        %v233 = vadd.f32 %v232, 1.0
        %v234 = vmul.f32 %v233, 0.5
        %v235 = vlaneseq
        %v236 = vshrl.u32 %v235, 7
        %v237 = vsub.s32 0, %v236
        %v238 = vrot.slane %v234, %v237
        %v239 = vlaneseq
        %v240 = vshrl.u32 %v239, 7
        %v241 = vsub.s32 1, %v240
        %v242 = vrot.slane %v234, %v241
        %v243 = vlaneseq
        %v244 = vshrl.u32 %v243, 7
        %v245 = vsub.s32 2, %v244
        %v246 = vrot.slane %v234, %v245
        %v247 = vld [vmem:[%s1] sm:$0xff]
        %v248 = vld [vmem:[%s1 + $0x8] sm:$0xff]
        %v249 = vld [vmem:[%s1 + $0x10] sm:$0xff]
        %v250 = vld [vmem:[%s1 + $0x18] sm:$0xff]
        %v251 = vld [vmem:[%s1 + $0x20] sm:$0xff]
        %v252 = vld [vmem:[%s1 + $0x28] sm:$0xff]
        %v253 = vld [vmem:[%s1 + $0x30] sm:$0xff]
        %v254 = vld [vmem:[%s1 + $0x38] sm:$0xff]
        %v255 = vld [vmem:[%s1 + $0x40] sm:$0xff]
        %v256 = vld [vmem:[%s1 + $0x48] sm:$0xff]
        %v257 = vld [vmem:[%s1 + $0x50] sm:$0xff]
        %v258 = vld [vmem:[%s1 + $0x58] sm:$0xff]
        %v259 = vld [vmem:[%s1 + $0x60] sm:$0xff]
        %v260 = vld [vmem:[%s1 + $0x68] sm:$0xff]
        %v261 = vld [vmem:[%s1 + $0x70] sm:$0xff]
        %v262 = vld [vmem:[%s1 + $0x78] sm:$0xff]
        %v263 = vld [vmem:[%s1 + $0x80] sm:$0xff]
        %v264 = vld [vmem:[%s1 + $0x88] sm:$0xff]
        %v265 = vld [vmem:[%s1 + $0x90] sm:$0xff]
        %v266 = vld [vmem:[%s1 + $0x98] sm:$0xff]
        %v267 = vld [vmem:[%s1 + $0xa0] sm:$0xff]
        %v268 = vld [vmem:[%s1 + $0xa8] sm:$0xff]
        %v269 = vld [vmem:[%s1 + $0xb0] sm:$0xff]
        %v270 = vld [vmem:[%s1 + $0xb8] sm:$0xff]
        %272 = vset.pattern.permute.xlu0 0
        %273 = vperm.xlu0 %272, %v247
        %v274 = vpop.permute.xlu0 %273
        %277 = vset.pattern.permute.xlu0 0
        %278 = vperm.xlu0 %277, %v248
        %v279 = vpop.permute.xlu0 %278
        %282 = vset.pattern.permute.xlu0 0
        %283 = vperm.xlu0 %282, %v249
        %v284 = vpop.permute.xlu0 %283
        %287 = vset.pattern.permute.xlu0 0
        %288 = vperm.xlu0 %287, %v250
        %v289 = vpop.permute.xlu0 %288
        %292 = vset.pattern.permute.xlu0 0
        %293 = vperm.xlu0 %292, %v251
        %v294 = vpop.permute.xlu0 %293
        %297 = vset.pattern.permute.xlu0 0
        %298 = vperm.xlu0 %297, %v252
        %v299 = vpop.permute.xlu0 %298
        %302 = vset.pattern.permute.xlu0 0
        %303 = vperm.xlu0 %302, %v253
        %v304 = vpop.permute.xlu0 %303
        %307 = vset.pattern.permute.xlu0 0
        %308 = vperm.xlu0 %307, %v254
        %v309 = vpop.permute.xlu0 %308
        %312 = vset.pattern.permute.xlu0 0
        %313 = vperm.xlu0 %312, %v255
        %v314 = vpop.permute.xlu0 %313
        %317 = vset.pattern.permute.xlu0 0
        %318 = vperm.xlu0 %317, %v256
        %v319 = vpop.permute.xlu0 %318
        %322 = vset.pattern.permute.xlu0 0
        %323 = vperm.xlu0 %322, %v257
        %v324 = vpop.permute.xlu0 %323
        %327 = vset.pattern.permute.xlu0 0
        %328 = vperm.xlu0 %327, %v258
        %v329 = vpop.permute.xlu0 %328
        %332 = vset.pattern.permute.xlu0 0
        %333 = vperm.xlu0 %332, %v259
        %v334 = vpop.permute.xlu0 %333
        %337 = vset.pattern.permute.xlu0 0
        %338 = vperm.xlu0 %337, %v260
        %v339 = vpop.permute.xlu0 %338
        %342 = vset.pattern.permute.xlu0 0
        %343 = vperm.xlu0 %342, %v261
        %v344 = vpop.permute.xlu0 %343
        %347 = vset.pattern.permute.xlu0 0
        %348 = vperm.xlu0 %347, %v262
        %v349 = vpop.permute.xlu0 %348
        %352 = vset.pattern.permute.xlu0 0
        %353 = vperm.xlu0 %352, %v263
        %v354 = vpop.permute.xlu0 %353
        %357 = vset.pattern.permute.xlu0 0
        %358 = vperm.xlu0 %357, %v264
        %v359 = vpop.permute.xlu0 %358
        %362 = vset.pattern.permute.xlu0 0
        %363 = vperm.xlu0 %362, %v265
        %v364 = vpop.permute.xlu0 %363
        %367 = vset.pattern.permute.xlu0 0
        %368 = vperm.xlu0 %367, %v266
        %v369 = vpop.permute.xlu0 %368
        %372 = vset.pattern.permute.xlu0 0
        %373 = vperm.xlu0 %372, %v267
        %v374 = vpop.permute.xlu0 %373
        %377 = vset.pattern.permute.xlu0 0
        %378 = vperm.xlu0 %377, %v268
        %v379 = vpop.permute.xlu0 %378
        %382 = vset.pattern.permute.xlu0 0
        %383 = vperm.xlu0 %382, %v269
        %v384 = vpop.permute.xlu0 %383
        %387 = vset.pattern.permute.xlu0 0
        %388 = vperm.xlu0 %387, %v270
        %v389 = vpop.permute.xlu0 %388
        %v391 = vmul.f32 %v238, %v274
        %v392 = vmul.f32 %v238, %v279
        %v393 = vmul.f32 %v238, %v284
        %v394 = vmul.f32 %v238, %v289
        %v395 = vmul.f32 %v238, %v294
        %v396 = vmul.f32 %v238, %v299
        %v397 = vmul.f32 %v238, %v304
        %v398 = vmul.f32 %v238, %v309
        %v399 = vmul.f32 %v242, %v314
        %v400 = vmul.f32 %v242, %v319
        %v401 = vmul.f32 %v242, %v324
        %v402 = vmul.f32 %v242, %v329
        %v403 = vmul.f32 %v242, %v334
        %v404 = vmul.f32 %v242, %v339
        %v405 = vmul.f32 %v242, %v344
        %v406 = vmul.f32 %v242, %v349
        %v407 = vmul.f32 %v246, %v354
        %v408 = vmul.f32 %v246, %v359
        %v409 = vmul.f32 %v246, %v364
        %v410 = vmul.f32 %v246, %v369
        %v411 = vmul.f32 %v246, %v374
        %v412 = vmul.f32 %v246, %v379
        %v413 = vmul.f32 %v246, %v384
        %v414 = vmul.f32 %v246, %v389
        %v415 = vld [vmem:[%s2] sm:$0xff]
        %v416 = vld [vmem:[%s2 + $0x8] sm:$0xff]
        %v417 = vld [vmem:[%s2 + $0x10] sm:$0xff]
        %v418 = vld [vmem:[%s2 + $0x18] sm:$0xff]
        %v419 = vld [vmem:[%s2 + $0x20] sm:$0xff]
        %v420 = vld [vmem:[%s2 + $0x28] sm:$0xff]
        %v421 = vld [vmem:[%s2 + $0x30] sm:$0xff]
        %v422 = vld [vmem:[%s2 + $0x38] sm:$0xff]
        %v423 = vld [vmem:[%s2 + $0x40] sm:$0xff]
        %v424 = vld [vmem:[%s2 + $0x48] sm:$0xff]
        %v425 = vld [vmem:[%s2 + $0x50] sm:$0xff]
        %v426 = vld [vmem:[%s2 + $0x58] sm:$0xff]
        %v427 = vld [vmem:[%s2 + $0x60] sm:$0xff]
        %v428 = vld [vmem:[%s2 + $0x68] sm:$0xff]
        %v429 = vld [vmem:[%s2 + $0x70] sm:$0xff]
        %v430 = vld [vmem:[%s2 + $0x78] sm:$0xff]
        %v431 = vld [vmem:[%s2 + $0x80] sm:$0xff]
        %v432 = vld [vmem:[%s2 + $0x88] sm:$0xff]
        %v433 = vld [vmem:[%s2 + $0x90] sm:$0xff]
        %v434 = vld [vmem:[%s2 + $0x98] sm:$0xff]
        %v435 = vld [vmem:[%s2 + $0xa0] sm:$0xff]
        %v436 = vld [vmem:[%s2 + $0xa8] sm:$0xff]
        %v437 = vld [vmem:[%s2 + $0xb0] sm:$0xff]
        %v438 = vld [vmem:[%s2 + $0xb8] sm:$0xff]
        %440 = vset.pattern.permute.xlu0 0
        %441 = vperm.xlu0 %440, %v415
        %v442 = vpop.permute.xlu0 %441
        %445 = vset.pattern.permute.xlu0 0
        %446 = vperm.xlu0 %445, %v416
        %v447 = vpop.permute.xlu0 %446
        %450 = vset.pattern.permute.xlu0 0
        %451 = vperm.xlu0 %450, %v417
        %v452 = vpop.permute.xlu0 %451
        %455 = vset.pattern.permute.xlu0 0
        %456 = vperm.xlu0 %455, %v418
        %v457 = vpop.permute.xlu0 %456
        %460 = vset.pattern.permute.xlu0 0
        %461 = vperm.xlu0 %460, %v419
        %v462 = vpop.permute.xlu0 %461
        %465 = vset.pattern.permute.xlu0 0
        %466 = vperm.xlu0 %465, %v420
        %v467 = vpop.permute.xlu0 %466
        %470 = vset.pattern.permute.xlu0 0
        %471 = vperm.xlu0 %470, %v421
        %v472 = vpop.permute.xlu0 %471
        %475 = vset.pattern.permute.xlu0 0
        %476 = vperm.xlu0 %475, %v422
        %v477 = vpop.permute.xlu0 %476
        %480 = vset.pattern.permute.xlu0 0
        %481 = vperm.xlu0 %480, %v423
        %v482 = vpop.permute.xlu0 %481
        %485 = vset.pattern.permute.xlu0 0
        %486 = vperm.xlu0 %485, %v424
        %v487 = vpop.permute.xlu0 %486
        %490 = vset.pattern.permute.xlu0 0
        %491 = vperm.xlu0 %490, %v425
        %v492 = vpop.permute.xlu0 %491
        %495 = vset.pattern.permute.xlu0 0
        %496 = vperm.xlu0 %495, %v426
        %v497 = vpop.permute.xlu0 %496
        %500 = vset.pattern.permute.xlu0 0
        %501 = vperm.xlu0 %500, %v427
        %v502 = vpop.permute.xlu0 %501
        %505 = vset.pattern.permute.xlu0 0
        %506 = vperm.xlu0 %505, %v428
        %v507 = vpop.permute.xlu0 %506
        %510 = vset.pattern.permute.xlu0 0
        %511 = vperm.xlu0 %510, %v429
        %v512 = vpop.permute.xlu0 %511
        %515 = vset.pattern.permute.xlu0 0
        %516 = vperm.xlu0 %515, %v430
        %v517 = vpop.permute.xlu0 %516
        %520 = vset.pattern.permute.xlu0 0
        %521 = vperm.xlu0 %520, %v431
        %v522 = vpop.permute.xlu0 %521
        %525 = vset.pattern.permute.xlu0 0
        %526 = vperm.xlu0 %525, %v432
        %v527 = vpop.permute.xlu0 %526
        %530 = vset.pattern.permute.xlu0 0
        %531 = vperm.xlu0 %530, %v433
        %v532 = vpop.permute.xlu0 %531
        %535 = vset.pattern.permute.xlu0 0
        %536 = vperm.xlu0 %535, %v434
        %v537 = vpop.permute.xlu0 %536
        %540 = vset.pattern.permute.xlu0 0
        %541 = vperm.xlu0 %540, %v435
        %v542 = vpop.permute.xlu0 %541
        %545 = vset.pattern.permute.xlu0 0
        %546 = vperm.xlu0 %545, %v436
        %v547 = vpop.permute.xlu0 %546
        %550 = vset.pattern.permute.xlu0 0
        %551 = vperm.xlu0 %550, %v437
        %v552 = vpop.permute.xlu0 %551
        %555 = vset.pattern.permute.xlu0 0
        %556 = vperm.xlu0 %555, %v438
        %v557 = vpop.permute.xlu0 %556
        %v559 = vadd.f32 %v391, %v442
        %v560 = vadd.f32 %v392, %v447
        %v561 = vadd.f32 %v393, %v452
        %v562 = vadd.f32 %v394, %v457
        %v563 = vadd.f32 %v395, %v462
        %v564 = vadd.f32 %v396, %v467
        %v565 = vadd.f32 %v397, %v472
        %v566 = vadd.f32 %v398, %v477
        %v567 = vadd.f32 %v399, %v482
        %v568 = vadd.f32 %v400, %v487
        %v569 = vadd.f32 %v401, %v492
        %v570 = vadd.f32 %v402, %v497
        %v571 = vadd.f32 %v403, %v502
        %v572 = vadd.f32 %v404, %v507
        %v573 = vadd.f32 %v405, %v512
        %v574 = vadd.f32 %v406, %v517
        %v575 = vadd.f32 %v407, %v522
        %v576 = vadd.f32 %v408, %v527
        %v577 = vadd.f32 %v409, %v532
        %v578 = vadd.f32 %v410, %v537
        %v579 = vadd.f32 %v411, %v542
        %v580 = vadd.f32 %v412, %v547
        %v581 = vadd.f32 %v413, %v552
        %v582 = vadd.f32 %v414, %v557
        %v583 = vand.u32 2147483647, %v559
        %vm584 = vcmp.le.f32.partialorder %v583, 0.7853982
        %vm585 = vcmp.lt.s32.totalorder %v559, 0
        %v586 = vand.u32 %v559, 2139095040
        %v587 = vshrl.u32 %v586, 23
        %v588 = vsub.s32 %v587, 127
        %v589 = vand.u32 2147483647, %v559
        %v590 = vand.u32 %v589, 8388607
        %v591 = vor.u32 %v590, 8388608
        %v592 = vsub.s32 0, %v591
        %v593 = vadd.s32 %v588, 1
        %vm594 = vcmp.gt.s32.totalorder %v593, 0
        %v595 = vsel %vm594, %v593, 0
        %v596 = vshrl.u32 %v595, 5
        %v597 = vand.u32 %v595, 31
        %v598 = vsub.s32 32, %v597
        %v599 = vshrl.u32 683565275, %v598
        %v600 = vshll.u32 683565275, %v597
        %v601 = vshrl.u32 2475754826, %v598
        %v602 = vor.u32 %v600, %v601
        %v603 = vshll.u32 2475754826, %v597
        %v604 = vshrl.u32 2131351028, %v598
        %v605 = vor.u32 %v603, %v604
        %v606 = vshll.u32 2131351028, %v597
        %v607 = vshrl.u32 2102212464, %v598
        %v608 = vor.u32 %v606, %v607
        %v609 = vshll.u32 2102212464, %v597
        %v610 = vshrl.u32 920167782, %v598
        %v611 = vor.u32 %v609, %v610
        %v612 = vshll.u32 920167782, %v597
        %v613 = vshrl.u32 1326507024, %v598
        %v614 = vor.u32 %v612, %v613
        %vm615 = vcmp.lt.s32.totalorder %v596, 1
        %vm616 = vcmp.lt.s32.totalorder %v596, 2
        %vm617 = vcmp.lt.s32.totalorder %v596, 3
        %vm618 = vcmp.lt.s32.totalorder %v596, 4
        %v619 = vsel %vm615, %v599, %v602
        %v620 = vsel %vm618, %v608, 2102212464
        %v621 = vsel %vm617, %v605, %v620
        %v622 = vsel %vm616, %v619, %v621
        %v623 = vsel %vm615, %v602, %v605
        %v624 = vsel %vm618, %v611, 920167782
        %v625 = vsel %vm617, %v608, %v624
        %v626 = vsel %vm616, %v623, %v625
        %v627 = vsel %vm615, %v605, %v608
        %v628 = vsel %vm618, %v614, 1326507024
        %v629 = vsel %vm617, %v611, %v628
        %v630 = vsel %vm616, %v627, %v629
        %v631 = vshll.u32 %v591, 8
        %v632 = vmul.u32.u64.compose %v631, %v630
        %v633 = vextract.low.u32 %v632
        %v634 = vextract.high.u32 %v632
        %v635 = vmul.u32.u64.compose %v631, %v626
        %v636 = vextract.low.u32 %v635
        %v637 = vextract.high.u32 %v635
        %v638 = vmul.u32 %v631, %v622
        %v639 = vadd.s32 %v634, %v636
        %vm640 = vc.u32 %v634, %v636
        %v641 = vadd.s32 %v637, 1
        %v642 = vsel %vm640, %v641, %v637
        %v643 = vadd.s32 %v638, %v642
        %v644 = vadd.s32 %v643, 536870912
        %v645 = vshrl.u32 %v644, 30
        %v646 = vshll.u32 %v645, 30
        %v647 = vsub.s32 %v643, %v646
        %vm648 = vcmp.lt.s32.totalorder %v647, 0
        %v649 = vsub.s32 0, %v647
        %v650 = vsel %vm648, %v649, %v647
        %v651 = vclz %v650
        %v652 = vsub.s32 %v651, 2
        %vm653 = vcmp.gt.s32.totalorder 0, %v652
        %v654 = vsel %vm653, 0, %v652
        %v655 = vsub.s32 32, %v654
        %v656 = vshll.u32 %v647, %v654
        %v657 = vshrl.u32 %v639, %v655
        %v658 = vor.u32 %v656, %v657
        %v659 = vsub.s32 4294967266, %v654
        %v660 = vadd.s32 %v659, 127
        %v661 = vshll.u32 %v660, 23
        %v662 = vor.u32 4788187, %v661
        %v663 = vand.u32 2147483647, %v662
        %v665 = vcvt.s32.f32 %v658
        %v666 = vmul.f32 %v665, %v663
        %v667 = vxor.u32 %v666, 2147483648
        %v668 = vsel %vm585, %v667, %v666
        %v669 = vsub.s32 4, %v645
        %v670 = vsel %vm585, %v669, %v645
        %v671 = vsel %vm584, %v559, %v668
        %v672 = vsel %vm584, 0, %v670
        %v673 = vcosq.f32.pop %v671
        %v674 = vsinq.f32.pop %v671
        %vm675 = vweird.f32 %v559
        %v676 = vadd.s32 %v672, 3
        %v677 = vand.u32 %v676, 3
        %vm678 = vcmp.lt.s32.totalorder %v677, 2
        %vm679 = vcmp.eq.s32.totalorder %v677, 0
        %v680 = vxor.u32 %v674, 2147483648
        %v681 = vsel %vm679, %v673, %v680
        %vm682 = vcmp.eq.s32.totalorder %v677, 2
        %v683 = vxor.u32 %v673, 2147483648
        %v684 = vsel %vm682, %v683, %v674
        %v685 = vsel %vm678, %v681, %v684
        %v686 = vsel %vm675, nan, %v685
        %v687 = vand.u32 2147483647, %v560
        %vm688 = vcmp.le.f32.partialorder %v687, 0.7853982
        %vm689 = vcmp.lt.s32.totalorder %v560, 0
        %v690 = vand.u32 %v560, 2139095040
        %v691 = vshrl.u32 %v690, 23
        %v692 = vsub.s32 %v691, 127
        %v693 = vand.u32 2147483647, %v560
        %v694 = vand.u32 %v693, 8388607
        %v695 = vor.u32 %v694, 8388608
        %v696 = vsub.s32 0, %v695
        %v697 = vadd.s32 %v692, 1
        %vm698 = vcmp.gt.s32.totalorder %v697, 0
        %v699 = vsel %vm698, %v697, 0
        %v700 = vshrl.u32 %v699, 5
        %v701 = vand.u32 %v699, 31
        %v702 = vsub.s32 32, %v701
        %v703 = vshrl.u32 683565275, %v702
        %v704 = vshll.u32 683565275, %v701
        %v705 = vshrl.u32 2475754826, %v702
        %v706 = vor.u32 %v704, %v705
        %v707 = vshll.u32 2475754826, %v701
        %v708 = vshrl.u32 2131351028, %v702
        %v709 = vor.u32 %v707, %v708
        %v710 = vshll.u32 2131351028, %v701
        %v711 = vshrl.u32 2102212464, %v702
        %v712 = vor.u32 %v710, %v711
        %v713 = vshll.u32 2102212464, %v701
        %v714 = vshrl.u32 920167782, %v702
        %v715 = vor.u32 %v713, %v714
        %v716 = vshll.u32 920167782, %v701
        %v717 = vshrl.u32 1326507024, %v702
        %v718 = vor.u32 %v716, %v717
        %vm719 = vcmp.lt.s32.totalorder %v700, 1
        %vm720 = vcmp.lt.s32.totalorder %v700, 2
        %vm721 = vcmp.lt.s32.totalorder %v700, 3
        %vm722 = vcmp.lt.s32.totalorder %v700, 4
        %v723 = vsel %vm719, %v703, %v706
        %v724 = vsel %vm722, %v712, 2102212464
        %v725 = vsel %vm721, %v709, %v724
        %v726 = vsel %vm720, %v723, %v725
        %v727 = vsel %vm719, %v706, %v709
        %v728 = vsel %vm722, %v715, 920167782
        %v729 = vsel %vm721, %v712, %v728
        %v730 = vsel %vm720, %v727, %v729
        %v731 = vsel %vm719, %v709, %v712
        %v732 = vsel %vm722, %v718, 1326507024
        %v733 = vsel %vm721, %v715, %v732
        %v734 = vsel %vm720, %v731, %v733
        %v735 = vshll.u32 %v695, 8
        %v736 = vmul.u32.u64.compose %v735, %v734
        %v737 = vextract.low.u32 %v736
        %v738 = vextract.high.u32 %v736
        %v739 = vmul.u32.u64.compose %v735, %v730
        %v740 = vextract.low.u32 %v739
        %v741 = vextract.high.u32 %v739
        %v742 = vmul.u32 %v735, %v726
        %v743 = vadd.s32 %v738, %v740
        %vm744 = vc.u32 %v738, %v740
        %v745 = vadd.s32 %v741, 1
        %v746 = vsel %vm744, %v745, %v741
        %v747 = vadd.s32 %v742, %v746
        %v748 = vadd.s32 %v747, 536870912
        %v749 = vshrl.u32 %v748, 30
        %v750 = vshll.u32 %v749, 30
        %v751 = vsub.s32 %v747, %v750
        %vm752 = vcmp.lt.s32.totalorder %v751, 0
        %v753 = vsub.s32 0, %v751
        %v754 = vsel %vm752, %v753, %v751
        %v755 = vclz %v754
        %v756 = vsub.s32 %v755, 2
        %vm757 = vcmp.gt.s32.totalorder 0, %v756
        %v758 = vsel %vm757, 0, %v756
        %v759 = vsub.s32 32, %v758
        %v760 = vshll.u32 %v751, %v758
        %v761 = vshrl.u32 %v743, %v759
        %v762 = vor.u32 %v760, %v761
        %v763 = vsub.s32 4294967266, %v758
        %v764 = vadd.s32 %v763, 127
        %v765 = vshll.u32 %v764, 23
        %v766 = vor.u32 4788187, %v765
        %v767 = vand.u32 2147483647, %v766
        %v769 = vcvt.s32.f32 %v762
        %v770 = vmul.f32 %v769, %v767
        %v771 = vxor.u32 %v770, 2147483648
        %v772 = vsel %vm689, %v771, %v770
        %v773 = vsub.s32 4, %v749
        %v774 = vsel %vm689, %v773, %v749
        %v775 = vsel %vm688, %v560, %v772
        %v776 = vsel %vm688, 0, %v774
        %v777 = vcosq.f32.pop %v775
        %v778 = vsinq.f32.pop %v775
        %vm779 = vweird.f32 %v560
        %v780 = vadd.s32 %v776, 3
        %v781 = vand.u32 %v780, 3
        %vm782 = vcmp.lt.s32.totalorder %v781, 2
        %vm783 = vcmp.eq.s32.totalorder %v781, 0
        %v784 = vxor.u32 %v778, 2147483648
        %v785 = vsel %vm783, %v777, %v784
        %vm786 = vcmp.eq.s32.totalorder %v781, 2
        %v787 = vxor.u32 %v777, 2147483648
        %v788 = vsel %vm786, %v787, %v778
        %v789 = vsel %vm782, %v785, %v788
        %v790 = vsel %vm779, nan, %v789
        %v791 = vand.u32 2147483647, %v561
        %vm792 = vcmp.le.f32.partialorder %v791, 0.7853982
        %vm793 = vcmp.lt.s32.totalorder %v561, 0
        %v794 = vand.u32 %v561, 2139095040
        %v795 = vshrl.u32 %v794, 23
        %v796 = vsub.s32 %v795, 127
        %v797 = vand.u32 2147483647, %v561
        %v798 = vand.u32 %v797, 8388607
        %v799 = vor.u32 %v798, 8388608
        %v800 = vsub.s32 0, %v799
        %v801 = vadd.s32 %v796, 1
        %vm802 = vcmp.gt.s32.totalorder %v801, 0
        %v803 = vsel %vm802, %v801, 0
        %v804 = vshrl.u32 %v803, 5
        %v805 = vand.u32 %v803, 31
        %v806 = vsub.s32 32, %v805
        %v807 = vshrl.u32 683565275, %v806
        %v808 = vshll.u32 683565275, %v805
        %v809 = vshrl.u32 2475754826, %v806
        %v810 = vor.u32 %v808, %v809
        %v811 = vshll.u32 2475754826, %v805
        %v812 = vshrl.u32 2131351028, %v806
        %v813 = vor.u32 %v811, %v812
        %v814 = vshll.u32 2131351028, %v805
        %v815 = vshrl.u32 2102212464, %v806
        %v816 = vor.u32 %v814, %v815
        %v817 = vshll.u32 2102212464, %v805
        %v818 = vshrl.u32 920167782, %v806
        %v819 = vor.u32 %v817, %v818
        %v820 = vshll.u32 920167782, %v805
        %v821 = vshrl.u32 1326507024, %v806
        %v822 = vor.u32 %v820, %v821
        %vm823 = vcmp.lt.s32.totalorder %v804, 1
        %vm824 = vcmp.lt.s32.totalorder %v804, 2
        %vm825 = vcmp.lt.s32.totalorder %v804, 3
        %vm826 = vcmp.lt.s32.totalorder %v804, 4
        %v827 = vsel %vm823, %v807, %v810
        %v828 = vsel %vm826, %v816, 2102212464
        %v829 = vsel %vm825, %v813, %v828
        %v830 = vsel %vm824, %v827, %v829
        %v831 = vsel %vm823, %v810, %v813
        %v832 = vsel %vm826, %v819, 920167782
        %v833 = vsel %vm825, %v816, %v832
        %v834 = vsel %vm824, %v831, %v833
        %v835 = vsel %vm823, %v813, %v816
        %v836 = vsel %vm826, %v822, 1326507024
        %v837 = vsel %vm825, %v819, %v836
        %v838 = vsel %vm824, %v835, %v837
        %v839 = vshll.u32 %v799, 8
        %v840 = vmul.u32.u64.compose %v839, %v838
        %v841 = vextract.low.u32 %v840
        %v842 = vextract.high.u32 %v840
        %v843 = vmul.u32.u64.compose %v839, %v834
        %v844 = vextract.low.u32 %v843
        %v845 = vextract.high.u32 %v843
        %v846 = vmul.u32 %v839, %v830
        %v847 = vadd.s32 %v842, %v844
        %vm848 = vc.u32 %v842, %v844
        %v849 = vadd.s32 %v845, 1
        %v850 = vsel %vm848, %v849, %v845
        %v851 = vadd.s32 %v846, %v850
        %v852 = vadd.s32 %v851, 536870912
        %v853 = vshrl.u32 %v852, 30
        %v854 = vshll.u32 %v853, 30
        %v855 = vsub.s32 %v851, %v854
        %vm856 = vcmp.lt.s32.totalorder %v855, 0
        %v857 = vsub.s32 0, %v855
        %v858 = vsel %vm856, %v857, %v855
        %v859 = vclz %v858
        %v860 = vsub.s32 %v859, 2
        %vm861 = vcmp.gt.s32.totalorder 0, %v860
        %v862 = vsel %vm861, 0, %v860
        %v863 = vsub.s32 32, %v862
        %v864 = vshll.u32 %v855, %v862
        %v865 = vshrl.u32 %v847, %v863
        %v866 = vor.u32 %v864, %v865
        %v867 = vsub.s32 4294967266, %v862
        %v868 = vadd.s32 %v867, 127
        %v869 = vshll.u32 %v868, 23
        %v870 = vor.u32 4788187, %v869
        %v871 = vand.u32 2147483647, %v870
        %v873 = vcvt.s32.f32 %v866
        %v874 = vmul.f32 %v873, %v871
        %v875 = vxor.u32 %v874, 2147483648
        %v876 = vsel %vm793, %v875, %v874
        %v877 = vsub.s32 4, %v853
        %v878 = vsel %vm793, %v877, %v853
        %v879 = vsel %vm792, %v561, %v876
        %v880 = vsel %vm792, 0, %v878
        %v881 = vcosq.f32.pop %v879
        %v882 = vsinq.f32.pop %v879
        %vm883 = vweird.f32 %v561
        %v884 = vadd.s32 %v880, 3
        %v885 = vand.u32 %v884, 3
        %vm886 = vcmp.lt.s32.totalorder %v885, 2
        %vm887 = vcmp.eq.s32.totalorder %v885, 0
        %v888 = vxor.u32 %v882, 2147483648
        %v889 = vsel %vm887, %v881, %v888
        %vm890 = vcmp.eq.s32.totalorder %v885, 2
        %v891 = vxor.u32 %v881, 2147483648
        %v892 = vsel %vm890, %v891, %v882
        %v893 = vsel %vm886, %v889, %v892
        %v894 = vsel %vm883, nan, %v893
        %v895 = vand.u32 2147483647, %v562
        %vm896 = vcmp.le.f32.partialorder %v895, 0.7853982
        %vm897 = vcmp.lt.s32.totalorder %v562, 0
        %v898 = vand.u32 %v562, 2139095040
        %v899 = vshrl.u32 %v898, 23
        %v900 = vsub.s32 %v899, 127
        %v901 = vand.u32 2147483647, %v562
        %v902 = vand.u32 %v901, 8388607
        %v903 = vor.u32 %v902, 8388608
        %v904 = vsub.s32 0, %v903
        %v905 = vadd.s32 %v900, 1
        %vm906 = vcmp.gt.s32.totalorder %v905, 0
        %v907 = vsel %vm906, %v905, 0
        %v908 = vshrl.u32 %v907, 5
        %v909 = vand.u32 %v907, 31
        %v910 = vsub.s32 32, %v909
        %v911 = vshrl.u32 683565275, %v910
        %v912 = vshll.u32 683565275, %v909
        %v913 = vshrl.u32 2475754826, %v910
        %v914 = vor.u32 %v912, %v913
        %v915 = vshll.u32 2475754826, %v909
        %v916 = vshrl.u32 2131351028, %v910
        %v917 = vor.u32 %v915, %v916
        %v918 = vshll.u32 2131351028, %v909
        %v919 = vshrl.u32 2102212464, %v910
        %v920 = vor.u32 %v918, %v919
        %v921 = vshll.u32 2102212464, %v909
        %v922 = vshrl.u32 920167782, %v910
        %v923 = vor.u32 %v921, %v922
        %v924 = vshll.u32 920167782, %v909
        %v925 = vshrl.u32 1326507024, %v910
        %v926 = vor.u32 %v924, %v925
        %vm927 = vcmp.lt.s32.totalorder %v908, 1
        %vm928 = vcmp.lt.s32.totalorder %v908, 2
        %vm929 = vcmp.lt.s32.totalorder %v908, 3
        %vm930 = vcmp.lt.s32.totalorder %v908, 4
        %v931 = vsel %vm927, %v911, %v914
        %v932 = vsel %vm930, %v920, 2102212464
        %v933 = vsel %vm929, %v917, %v932
        %v934 = vsel %vm928, %v931, %v933
        %v935 = vsel %vm927, %v914, %v917
        %v936 = vsel %vm930, %v923, 920167782
        %v937 = vsel %vm929, %v920, %v936
        %v938 = vsel %vm928, %v935, %v937
        %v939 = vsel %vm927, %v917, %v920
        %v940 = vsel %vm930, %v926, 1326507024
        %v941 = vsel %vm929, %v923, %v940
        %v942 = vsel %vm928, %v939, %v941
        %v943 = vshll.u32 %v903, 8
        %v944 = vmul.u32.u64.compose %v943, %v942
        %v945 = vextract.low.u32 %v944
        %v946 = vextract.high.u32 %v944
        %v947 = vmul.u32.u64.compose %v943, %v938
        %v948 = vextract.low.u32 %v947
        %v949 = vextract.high.u32 %v947
        %v950 = vmul.u32 %v943, %v934
        %v951 = vadd.s32 %v946, %v948
        %vm952 = vc.u32 %v946, %v948
        %v953 = vadd.s32 %v949, 1
        %v954 = vsel %vm952, %v953, %v949
        %v955 = vadd.s32 %v950, %v954
        %v956 = vadd.s32 %v955, 536870912
        %v957 = vshrl.u32 %v956, 30
        %v958 = vshll.u32 %v957, 30
        %v959 = vsub.s32 %v955, %v958
        %vm960 = vcmp.lt.s32.totalorder %v959, 0
        %v961 = vsub.s32 0, %v959
        %v962 = vsel %vm960, %v961, %v959
        %v963 = vclz %v962
        %v964 = vsub.s32 %v963, 2
        %vm965 = vcmp.gt.s32.totalorder 0, %v964
        %v966 = vsel %vm965, 0, %v964
        %v967 = vsub.s32 32, %v966
        %v968 = vshll.u32 %v959, %v966
        %v969 = vshrl.u32 %v951, %v967
        %v970 = vor.u32 %v968, %v969
        %v971 = vsub.s32 4294967266, %v966
        %v972 = vadd.s32 %v971, 127
        %v973 = vshll.u32 %v972, 23
        %v974 = vor.u32 4788187, %v973
        %v975 = vand.u32 2147483647, %v974
        %v977 = vcvt.s32.f32 %v970
        %v978 = vmul.f32 %v977, %v975
        %v979 = vxor.u32 %v978, 2147483648
        %v980 = vsel %vm897, %v979, %v978
        %v981 = vsub.s32 4, %v957
        %v982 = vsel %vm897, %v981, %v957
        %v983 = vsel %vm896, %v562, %v980
        %v984 = vsel %vm896, 0, %v982
        %v985 = vcosq.f32.pop %v983
        %v986 = vsinq.f32.pop %v983
        %vm987 = vweird.f32 %v562
        %v988 = vadd.s32 %v984, 3
        %v989 = vand.u32 %v988, 3
        %vm990 = vcmp.lt.s32.totalorder %v989, 2
        %vm991 = vcmp.eq.s32.totalorder %v989, 0
        %v992 = vxor.u32 %v986, 2147483648
        %v993 = vsel %vm991, %v985, %v992
        %vm994 = vcmp.eq.s32.totalorder %v989, 2
        %v995 = vxor.u32 %v985, 2147483648
        %v996 = vsel %vm994, %v995, %v986
        %v997 = vsel %vm990, %v993, %v996
        %v998 = vsel %vm987, nan, %v997
        %v999 = vand.u32 2147483647, %v563
        %vm1000 = vcmp.le.f32.partialorder %v999, 0.7853982
        %vm1001 = vcmp.lt.s32.totalorder %v563, 0
        %v1002 = vand.u32 %v563, 2139095040
        %v1003 = vshrl.u32 %v1002, 23
        %v1004 = vsub.s32 %v1003, 127
        %v1005 = vand.u32 2147483647, %v563
        %v1006 = vand.u32 %v1005, 8388607
        %v1007 = vor.u32 %v1006, 8388608
        %v1008 = vsub.s32 0, %v1007
        %v1009 = vadd.s32 %v1004, 1
        %vm1010 = vcmp.gt.s32.totalorder %v1009, 0
        %v1011 = vsel %vm1010, %v1009, 0
        %v1012 = vshrl.u32 %v1011, 5
        %v1013 = vand.u32 %v1011, 31
        %v1014 = vsub.s32 32, %v1013
        %v1015 = vshrl.u32 683565275, %v1014
        %v1016 = vshll.u32 683565275, %v1013
        %v1017 = vshrl.u32 2475754826, %v1014
        %v1018 = vor.u32 %v1016, %v1017
        %v1019 = vshll.u32 2475754826, %v1013
        %v1020 = vshrl.u32 2131351028, %v1014
        %v1021 = vor.u32 %v1019, %v1020
        %v1022 = vshll.u32 2131351028, %v1013
        %v1023 = vshrl.u32 2102212464, %v1014
        %v1024 = vor.u32 %v1022, %v1023
        %v1025 = vshll.u32 2102212464, %v1013
        %v1026 = vshrl.u32 920167782, %v1014
        %v1027 = vor.u32 %v1025, %v1026
        %v1028 = vshll.u32 920167782, %v1013
        %v1029 = vshrl.u32 1326507024, %v1014
        %v1030 = vor.u32 %v1028, %v1029
        %vm1031 = vcmp.lt.s32.totalorder %v1012, 1
        %vm1032 = vcmp.lt.s32.totalorder %v1012, 2
        %vm1033 = vcmp.lt.s32.totalorder %v1012, 3
        %vm1034 = vcmp.lt.s32.totalorder %v1012, 4
        %v1035 = vsel %vm1031, %v1015, %v1018
        %v1036 = vsel %vm1034, %v1024, 2102212464
        %v1037 = vsel %vm1033, %v1021, %v1036
        %v1038 = vsel %vm1032, %v1035, %v1037
        %v1039 = vsel %vm1031, %v1018, %v1021
        %v1040 = vsel %vm1034, %v1027, 920167782
        %v1041 = vsel %vm1033, %v1024, %v1040
        %v1042 = vsel %vm1032, %v1039, %v1041
        %v1043 = vsel %vm1031, %v1021, %v1024
        %v1044 = vsel %vm1034, %v1030, 1326507024
        %v1045 = vsel %vm1033, %v1027, %v1044
        %v1046 = vsel %vm1032, %v1043, %v1045
        %v1047 = vshll.u32 %v1007, 8
        %v1048 = vmul.u32.u64.compose %v1047, %v1046
        %v1049 = vextract.low.u32 %v1048
        %v1050 = vextract.high.u32 %v1048
        %v1051 = vmul.u32.u64.compose %v1047, %v1042
        %v1052 = vextract.low.u32 %v1051
        %v1053 = vextract.high.u32 %v1051
        %v1054 = vmul.u32 %v1047, %v1038
        %v1055 = vadd.s32 %v1050, %v1052
        %vm1056 = vc.u32 %v1050, %v1052
        %v1057 = vadd.s32 %v1053, 1
        %v1058 = vsel %vm1056, %v1057, %v1053
        %v1059 = vadd.s32 %v1054, %v1058
        %v1060 = vadd.s32 %v1059, 536870912
        %v1061 = vshrl.u32 %v1060, 30
        %v1062 = vshll.u32 %v1061, 30
        %v1063 = vsub.s32 %v1059, %v1062
        %vm1064 = vcmp.lt.s32.totalorder %v1063, 0
        %v1065 = vsub.s32 0, %v1063
        %v1066 = vsel %vm1064, %v1065, %v1063
        %v1067 = vclz %v1066
        %v1068 = vsub.s32 %v1067, 2
        %vm1069 = vcmp.gt.s32.totalorder 0, %v1068
        %v1070 = vsel %vm1069, 0, %v1068
        %v1071 = vsub.s32 32, %v1070
        %v1072 = vshll.u32 %v1063, %v1070
        %v1073 = vshrl.u32 %v1055, %v1071
        %v1074 = vor.u32 %v1072, %v1073
        %v1075 = vsub.s32 4294967266, %v1070
        %v1076 = vadd.s32 %v1075, 127
        %v1077 = vshll.u32 %v1076, 23
        %v1078 = vor.u32 4788187, %v1077
        %v1079 = vand.u32 2147483647, %v1078
        %v1081 = vcvt.s32.f32 %v1074
        %v1082 = vmul.f32 %v1081, %v1079
        %v1083 = vxor.u32 %v1082, 2147483648
        %v1084 = vsel %vm1001, %v1083, %v1082
        %v1085 = vsub.s32 4, %v1061
        %v1086 = vsel %vm1001, %v1085, %v1061
        %v1087 = vsel %vm1000, %v563, %v1084
        %v1088 = vsel %vm1000, 0, %v1086
        %v1089 = vcosq.f32.pop %v1087
        %v1090 = vsinq.f32.pop %v1087
        %vm1091 = vweird.f32 %v563
        %v1092 = vadd.s32 %v1088, 3
        %v1093 = vand.u32 %v1092, 3
        %vm1094 = vcmp.lt.s32.totalorder %v1093, 2
        %vm1095 = vcmp.eq.s32.totalorder %v1093, 0
        %v1096 = vxor.u32 %v1090, 2147483648
        %v1097 = vsel %vm1095, %v1089, %v1096
        %vm1098 = vcmp.eq.s32.totalorder %v1093, 2
        %v1099 = vxor.u32 %v1089, 2147483648
        %v1100 = vsel %vm1098, %v1099, %v1090
        %v1101 = vsel %vm1094, %v1097, %v1100
        %v1102 = vsel %vm1091, nan, %v1101
        %v1103 = vand.u32 2147483647, %v564
        %vm1104 = vcmp.le.f32.partialorder %v1103, 0.7853982
        %vm1105 = vcmp.lt.s32.totalorder %v564, 0
        %v1106 = vand.u32 %v564, 2139095040
        %v1107 = vshrl.u32 %v1106, 23
        %v1108 = vsub.s32 %v1107, 127
        %v1109 = vand.u32 2147483647, %v564
        %v1110 = vand.u32 %v1109, 8388607
        %v1111 = vor.u32 %v1110, 8388608
        %v1112 = vsub.s32 0, %v1111
        %v1113 = vadd.s32 %v1108, 1
        %vm1114 = vcmp.gt.s32.totalorder %v1113, 0
        %v1115 = vsel %vm1114, %v1113, 0
        %v1116 = vshrl.u32 %v1115, 5
        %v1117 = vand.u32 %v1115, 31
        %v1118 = vsub.s32 32, %v1117
        %v1119 = vshrl.u32 683565275, %v1118
        %v1120 = vshll.u32 683565275, %v1117
        %v1121 = vshrl.u32 2475754826, %v1118
        %v1122 = vor.u32 %v1120, %v1121
        %v1123 = vshll.u32 2475754826, %v1117
        %v1124 = vshrl.u32 2131351028, %v1118
        %v1125 = vor.u32 %v1123, %v1124
        %v1126 = vshll.u32 2131351028, %v1117
        %v1127 = vshrl.u32 2102212464, %v1118
        %v1128 = vor.u32 %v1126, %v1127
        %v1129 = vshll.u32 2102212464, %v1117
        %v1130 = vshrl.u32 920167782, %v1118
        %v1131 = vor.u32 %v1129, %v1130
        %v1132 = vshll.u32 920167782, %v1117
        %v1133 = vshrl.u32 1326507024, %v1118
        %v1134 = vor.u32 %v1132, %v1133
        %vm1135 = vcmp.lt.s32.totalorder %v1116, 1
        %vm1136 = vcmp.lt.s32.totalorder %v1116, 2
        %vm1137 = vcmp.lt.s32.totalorder %v1116, 3
        %vm1138 = vcmp.lt.s32.totalorder %v1116, 4
        %v1139 = vsel %vm1135, %v1119, %v1122
        %v1140 = vsel %vm1138, %v1128, 2102212464
        %v1141 = vsel %vm1137, %v1125, %v1140
        %v1142 = vsel %vm1136, %v1139, %v1141
        %v1143 = vsel %vm1135, %v1122, %v1125
        %v1144 = vsel %vm1138, %v1131, 920167782
        %v1145 = vsel %vm1137, %v1128, %v1144
        %v1146 = vsel %vm1136, %v1143, %v1145
        %v1147 = vsel %vm1135, %v1125, %v1128
        %v1148 = vsel %vm1138, %v1134, 1326507024
        %v1149 = vsel %vm1137, %v1131, %v1148
        %v1150 = vsel %vm1136, %v1147, %v1149
        %v1151 = vshll.u32 %v1111, 8
        %v1152 = vmul.u32.u64.compose %v1151, %v1150
        %v1153 = vextract.low.u32 %v1152
        %v1154 = vextract.high.u32 %v1152
        %v1155 = vmul.u32.u64.compose %v1151, %v1146
        %v1156 = vextract.low.u32 %v1155
        %v1157 = vextract.high.u32 %v1155
        %v1158 = vmul.u32 %v1151, %v1142
        %v1159 = vadd.s32 %v1154, %v1156
        %vm1160 = vc.u32 %v1154, %v1156
        %v1161 = vadd.s32 %v1157, 1
        %v1162 = vsel %vm1160, %v1161, %v1157
        %v1163 = vadd.s32 %v1158, %v1162
        %v1164 = vadd.s32 %v1163, 536870912
        %v1165 = vshrl.u32 %v1164, 30
        %v1166 = vshll.u32 %v1165, 30
        %v1167 = vsub.s32 %v1163, %v1166
        %vm1168 = vcmp.lt.s32.totalorder %v1167, 0
        %v1169 = vsub.s32 0, %v1167
        %v1170 = vsel %vm1168, %v1169, %v1167
        %v1171 = vclz %v1170
        %v1172 = vsub.s32 %v1171, 2
        %vm1173 = vcmp.gt.s32.totalorder 0, %v1172
        %v1174 = vsel %vm1173, 0, %v1172
        %v1175 = vsub.s32 32, %v1174
        %v1176 = vshll.u32 %v1167, %v1174
        %v1177 = vshrl.u32 %v1159, %v1175
        %v1178 = vor.u32 %v1176, %v1177
        %v1179 = vsub.s32 4294967266, %v1174
        %v1180 = vadd.s32 %v1179, 127
        %v1181 = vshll.u32 %v1180, 23
        %v1182 = vor.u32 4788187, %v1181
        %v1183 = vand.u32 2147483647, %v1182
        %v1185 = vcvt.s32.f32 %v1178
        %v1186 = vmul.f32 %v1185, %v1183
        %v1187 = vxor.u32 %v1186, 2147483648
        %v1188 = vsel %vm1105, %v1187, %v1186
        %v1189 = vsub.s32 4, %v1165
        %v1190 = vsel %vm1105, %v1189, %v1165
        %v1191 = vsel %vm1104, %v564, %v1188
        %v1192 = vsel %vm1104, 0, %v1190
        %v1193 = vcosq.f32.pop %v1191
        %v1194 = vsinq.f32.pop %v1191
        %vm1195 = vweird.f32 %v564
        %v1196 = vadd.s32 %v1192, 3
        %v1197 = vand.u32 %v1196, 3
        %vm1198 = vcmp.lt.s32.totalorder %v1197, 2
        %vm1199 = vcmp.eq.s32.totalorder %v1197, 0
        %v1200 = vxor.u32 %v1194, 2147483648
        %v1201 = vsel %vm1199, %v1193, %v1200
        %vm1202 = vcmp.eq.s32.totalorder %v1197, 2
        %v1203 = vxor.u32 %v1193, 2147483648
        %v1204 = vsel %vm1202, %v1203, %v1194
        %v1205 = vsel %vm1198, %v1201, %v1204
        %v1206 = vsel %vm1195, nan, %v1205
        %v1207 = vand.u32 2147483647, %v565
        %vm1208 = vcmp.le.f32.partialorder %v1207, 0.7853982
        %vm1209 = vcmp.lt.s32.totalorder %v565, 0
        %v1210 = vand.u32 %v565, 2139095040
        %v1211 = vshrl.u32 %v1210, 23
        %v1212 = vsub.s32 %v1211, 127
        %v1213 = vand.u32 2147483647, %v565
        %v1214 = vand.u32 %v1213, 8388607
        %v1215 = vor.u32 %v1214, 8388608
        %v1216 = vsub.s32 0, %v1215
        %v1217 = vadd.s32 %v1212, 1
        %vm1218 = vcmp.gt.s32.totalorder %v1217, 0
        %v1219 = vsel %vm1218, %v1217, 0
        %v1220 = vshrl.u32 %v1219, 5
        %v1221 = vand.u32 %v1219, 31
        %v1222 = vsub.s32 32, %v1221
        %v1223 = vshrl.u32 683565275, %v1222
        %v1224 = vshll.u32 683565275, %v1221
        %v1225 = vshrl.u32 2475754826, %v1222
        %v1226 = vor.u32 %v1224, %v1225
        %v1227 = vshll.u32 2475754826, %v1221
        %v1228 = vshrl.u32 2131351028, %v1222
        %v1229 = vor.u32 %v1227, %v1228
        %v1230 = vshll.u32 2131351028, %v1221
        %v1231 = vshrl.u32 2102212464, %v1222
        %v1232 = vor.u32 %v1230, %v1231
        %v1233 = vshll.u32 2102212464, %v1221
        %v1234 = vshrl.u32 920167782, %v1222
        %v1235 = vor.u32 %v1233, %v1234
        %v1236 = vshll.u32 920167782, %v1221
        %v1237 = vshrl.u32 1326507024, %v1222
        %v1238 = vor.u32 %v1236, %v1237
        %vm1239 = vcmp.lt.s32.totalorder %v1220, 1
        %vm1240 = vcmp.lt.s32.totalorder %v1220, 2
        %vm1241 = vcmp.lt.s32.totalorder %v1220, 3
        %vm1242 = vcmp.lt.s32.totalorder %v1220, 4
        %v1243 = vsel %vm1239, %v1223, %v1226
        %v1244 = vsel %vm1242, %v1232, 2102212464
        %v1245 = vsel %vm1241, %v1229, %v1244
        %v1246 = vsel %vm1240, %v1243, %v1245
        %v1247 = vsel %vm1239, %v1226, %v1229
        %v1248 = vsel %vm1242, %v1235, 920167782
        %v1249 = vsel %vm1241, %v1232, %v1248
        %v1250 = vsel %vm1240, %v1247, %v1249
        %v1251 = vsel %vm1239, %v1229, %v1232
        %v1252 = vsel %vm1242, %v1238, 1326507024
        %v1253 = vsel %vm1241, %v1235, %v1252
        %v1254 = vsel %vm1240, %v1251, %v1253
        %v1255 = vshll.u32 %v1215, 8
        %v1256 = vmul.u32.u64.compose %v1255, %v1254
        %v1257 = vextract.low.u32 %v1256
        %v1258 = vextract.high.u32 %v1256
        %v1259 = vmul.u32.u64.compose %v1255, %v1250
        %v1260 = vextract.low.u32 %v1259
        %v1261 = vextract.high.u32 %v1259
        %v1262 = vmul.u32 %v1255, %v1246
        %v1263 = vadd.s32 %v1258, %v1260
        %vm1264 = vc.u32 %v1258, %v1260
        %v1265 = vadd.s32 %v1261, 1
        %v1266 = vsel %vm1264, %v1265, %v1261
        %v1267 = vadd.s32 %v1262, %v1266
        %v1268 = vadd.s32 %v1267, 536870912
        %v1269 = vshrl.u32 %v1268, 30
        %v1270 = vshll.u32 %v1269, 30
        %v1271 = vsub.s32 %v1267, %v1270
        %vm1272 = vcmp.lt.s32.totalorder %v1271, 0
        %v1273 = vsub.s32 0, %v1271
        %v1274 = vsel %vm1272, %v1273, %v1271
        %v1275 = vclz %v1274
        %v1276 = vsub.s32 %v1275, 2
        %vm1277 = vcmp.gt.s32.totalorder 0, %v1276
        %v1278 = vsel %vm1277, 0, %v1276
        %v1279 = vsub.s32 32, %v1278
        %v1280 = vshll.u32 %v1271, %v1278
        %v1281 = vshrl.u32 %v1263, %v1279
        %v1282 = vor.u32 %v1280, %v1281
        %v1283 = vsub.s32 4294967266, %v1278
        %v1284 = vadd.s32 %v1283, 127
        %v1285 = vshll.u32 %v1284, 23
        %v1286 = vor.u32 4788187, %v1285
        %v1287 = vand.u32 2147483647, %v1286
        %v1289 = vcvt.s32.f32 %v1282
        %v1290 = vmul.f32 %v1289, %v1287
        %v1291 = vxor.u32 %v1290, 2147483648
        %v1292 = vsel %vm1209, %v1291, %v1290
        %v1293 = vsub.s32 4, %v1269
        %v1294 = vsel %vm1209, %v1293, %v1269
        %v1295 = vsel %vm1208, %v565, %v1292
        %v1296 = vsel %vm1208, 0, %v1294
        %v1297 = vcosq.f32.pop %v1295
        %v1298 = vsinq.f32.pop %v1295
        %vm1299 = vweird.f32 %v565
        %v1300 = vadd.s32 %v1296, 3
        %v1301 = vand.u32 %v1300, 3
        %vm1302 = vcmp.lt.s32.totalorder %v1301, 2
        %vm1303 = vcmp.eq.s32.totalorder %v1301, 0
        %v1304 = vxor.u32 %v1298, 2147483648
        %v1305 = vsel %vm1303, %v1297, %v1304
        %vm1306 = vcmp.eq.s32.totalorder %v1301, 2
        %v1307 = vxor.u32 %v1297, 2147483648
        %v1308 = vsel %vm1306, %v1307, %v1298
        %v1309 = vsel %vm1302, %v1305, %v1308
        %v1310 = vsel %vm1299, nan, %v1309
        %v1311 = vand.u32 2147483647, %v566
        %vm1312 = vcmp.le.f32.partialorder %v1311, 0.7853982
        %vm1313 = vcmp.lt.s32.totalorder %v566, 0
        %v1314 = vand.u32 %v566, 2139095040
        %v1315 = vshrl.u32 %v1314, 23
        %v1316 = vsub.s32 %v1315, 127
        %v1317 = vand.u32 2147483647, %v566
        %v1318 = vand.u32 %v1317, 8388607
        %v1319 = vor.u32 %v1318, 8388608
        %v1320 = vsub.s32 0, %v1319
        %v1321 = vadd.s32 %v1316, 1
        %vm1322 = vcmp.gt.s32.totalorder %v1321, 0
        %v1323 = vsel %vm1322, %v1321, 0
        %v1324 = vshrl.u32 %v1323, 5
        %v1325 = vand.u32 %v1323, 31
        %v1326 = vsub.s32 32, %v1325
        %v1327 = vshrl.u32 683565275, %v1326
        %v1328 = vshll.u32 683565275, %v1325
        %v1329 = vshrl.u32 2475754826, %v1326
        %v1330 = vor.u32 %v1328, %v1329
        %v1331 = vshll.u32 2475754826, %v1325
        %v1332 = vshrl.u32 2131351028, %v1326
        %v1333 = vor.u32 %v1331, %v1332
        %v1334 = vshll.u32 2131351028, %v1325
        %v1335 = vshrl.u32 2102212464, %v1326
        %v1336 = vor.u32 %v1334, %v1335
        %v1337 = vshll.u32 2102212464, %v1325
        %v1338 = vshrl.u32 920167782, %v1326
        %v1339 = vor.u32 %v1337, %v1338
        %v1340 = vshll.u32 920167782, %v1325
        %v1341 = vshrl.u32 1326507024, %v1326
        %v1342 = vor.u32 %v1340, %v1341
        %vm1343 = vcmp.lt.s32.totalorder %v1324, 1
        %vm1344 = vcmp.lt.s32.totalorder %v1324, 2
        %vm1345 = vcmp.lt.s32.totalorder %v1324, 3
        %vm1346 = vcmp.lt.s32.totalorder %v1324, 4
        %v1347 = vsel %vm1343, %v1327, %v1330
        %v1348 = vsel %vm1346, %v1336, 2102212464
        %v1349 = vsel %vm1345, %v1333, %v1348
        %v1350 = vsel %vm1344, %v1347, %v1349
        %v1351 = vsel %vm1343, %v1330, %v1333
        %v1352 = vsel %vm1346, %v1339, 920167782
        %v1353 = vsel %vm1345, %v1336, %v1352
        %v1354 = vsel %vm1344, %v1351, %v1353
        %v1355 = vsel %vm1343, %v1333, %v1336
        %v1356 = vsel %vm1346, %v1342, 1326507024
        %v1357 = vsel %vm1345, %v1339, %v1356
        %v1358 = vsel %vm1344, %v1355, %v1357
        %v1359 = vshll.u32 %v1319, 8
        %v1360 = vmul.u32.u64.compose %v1359, %v1358
        %v1361 = vextract.low.u32 %v1360
        %v1362 = vextract.high.u32 %v1360
        %v1363 = vmul.u32.u64.compose %v1359, %v1354
        %v1364 = vextract.low.u32 %v1363
        %v1365 = vextract.high.u32 %v1363
        %v1366 = vmul.u32 %v1359, %v1350
        %v1367 = vadd.s32 %v1362, %v1364
        %vm1368 = vc.u32 %v1362, %v1364
        %v1369 = vadd.s32 %v1365, 1
        %v1370 = vsel %vm1368, %v1369, %v1365
        %v1371 = vadd.s32 %v1366, %v1370
        %v1372 = vadd.s32 %v1371, 536870912
        %v1373 = vshrl.u32 %v1372, 30
        %v1374 = vshll.u32 %v1373, 30
        %v1375 = vsub.s32 %v1371, %v1374
        %vm1376 = vcmp.lt.s32.totalorder %v1375, 0
        %v1377 = vsub.s32 0, %v1375
        %v1378 = vsel %vm1376, %v1377, %v1375
        %v1379 = vclz %v1378
        %v1380 = vsub.s32 %v1379, 2
        %vm1381 = vcmp.gt.s32.totalorder 0, %v1380
        %v1382 = vsel %vm1381, 0, %v1380
        %v1383 = vsub.s32 32, %v1382
        %v1384 = vshll.u32 %v1375, %v1382
        %v1385 = vshrl.u32 %v1367, %v1383
        %v1386 = vor.u32 %v1384, %v1385
        %v1387 = vsub.s32 4294967266, %v1382
        %v1388 = vadd.s32 %v1387, 127
        %v1389 = vshll.u32 %v1388, 23
        %v1390 = vor.u32 4788187, %v1389
        %v1391 = vand.u32 2147483647, %v1390
        %v1393 = vcvt.s32.f32 %v1386
        %v1394 = vmul.f32 %v1393, %v1391
        %v1395 = vxor.u32 %v1394, 2147483648
        %v1396 = vsel %vm1313, %v1395, %v1394
        %v1397 = vsub.s32 4, %v1373
        %v1398 = vsel %vm1313, %v1397, %v1373
        %v1399 = vsel %vm1312, %v566, %v1396
        %v1400 = vsel %vm1312, 0, %v1398
        %v1401 = vcosq.f32.pop %v1399
        %v1402 = vsinq.f32.pop %v1399
        %vm1403 = vweird.f32 %v566
        %v1404 = vadd.s32 %v1400, 3
        %v1405 = vand.u32 %v1404, 3
        %vm1406 = vcmp.lt.s32.totalorder %v1405, 2
        %vm1407 = vcmp.eq.s32.totalorder %v1405, 0
        %v1408 = vxor.u32 %v1402, 2147483648
        %v1409 = vsel %vm1407, %v1401, %v1408
        %vm1410 = vcmp.eq.s32.totalorder %v1405, 2
        %v1411 = vxor.u32 %v1401, 2147483648
        %v1412 = vsel %vm1410, %v1411, %v1402
        %v1413 = vsel %vm1406, %v1409, %v1412
        %v1414 = vsel %vm1403, nan, %v1413
        %v1415 = vand.u32 2147483647, %v567
        %vm1416 = vcmp.le.f32.partialorder %v1415, 0.7853982
        %vm1417 = vcmp.lt.s32.totalorder %v567, 0
        %v1418 = vand.u32 %v567, 2139095040
        %v1419 = vshrl.u32 %v1418, 23
        %v1420 = vsub.s32 %v1419, 127
        %v1421 = vand.u32 2147483647, %v567
        %v1422 = vand.u32 %v1421, 8388607
        %v1423 = vor.u32 %v1422, 8388608
        %v1424 = vsub.s32 0, %v1423
        %v1425 = vadd.s32 %v1420, 1
        %vm1426 = vcmp.gt.s32.totalorder %v1425, 0
        %v1427 = vsel %vm1426, %v1425, 0
        %v1428 = vshrl.u32 %v1427, 5
        %v1429 = vand.u32 %v1427, 31
        %v1430 = vsub.s32 32, %v1429
        %v1431 = vshrl.u32 683565275, %v1430
        %v1432 = vshll.u32 683565275, %v1429
        %v1433 = vshrl.u32 2475754826, %v1430
        %v1434 = vor.u32 %v1432, %v1433
        %v1435 = vshll.u32 2475754826, %v1429
        %v1436 = vshrl.u32 2131351028, %v1430
        %v1437 = vor.u32 %v1435, %v1436
        %v1438 = vshll.u32 2131351028, %v1429
        %v1439 = vshrl.u32 2102212464, %v1430
        %v1440 = vor.u32 %v1438, %v1439
        %v1441 = vshll.u32 2102212464, %v1429
        %v1442 = vshrl.u32 920167782, %v1430
        %v1443 = vor.u32 %v1441, %v1442
        %v1444 = vshll.u32 920167782, %v1429
        %v1445 = vshrl.u32 1326507024, %v1430
        %v1446 = vor.u32 %v1444, %v1445
        %vm1447 = vcmp.lt.s32.totalorder %v1428, 1
        %vm1448 = vcmp.lt.s32.totalorder %v1428, 2
        %vm1449 = vcmp.lt.s32.totalorder %v1428, 3
        %vm1450 = vcmp.lt.s32.totalorder %v1428, 4
        %v1451 = vsel %vm1447, %v1431, %v1434
        %v1452 = vsel %vm1450, %v1440, 2102212464
        %v1453 = vsel %vm1449, %v1437, %v1452
        %v1454 = vsel %vm1448, %v1451, %v1453
        %v1455 = vsel %vm1447, %v1434, %v1437
        %v1456 = vsel %vm1450, %v1443, 920167782
        %v1457 = vsel %vm1449, %v1440, %v1456
        %v1458 = vsel %vm1448, %v1455, %v1457
        %v1459 = vsel %vm1447, %v1437, %v1440
        %v1460 = vsel %vm1450, %v1446, 1326507024
        %v1461 = vsel %vm1449, %v1443, %v1460
        %v1462 = vsel %vm1448, %v1459, %v1461
        %v1463 = vshll.u32 %v1423, 8
        %v1464 = vmul.u32.u64.compose %v1463, %v1462
        %v1465 = vextract.low.u32 %v1464
        %v1466 = vextract.high.u32 %v1464
        %v1467 = vmul.u32.u64.compose %v1463, %v1458
        %v1468 = vextract.low.u32 %v1467
        %v1469 = vextract.high.u32 %v1467
        %v1470 = vmul.u32 %v1463, %v1454
        %v1471 = vadd.s32 %v1466, %v1468
        %vm1472 = vc.u32 %v1466, %v1468
        %v1473 = vadd.s32 %v1469, 1
        %v1474 = vsel %vm1472, %v1473, %v1469
        %v1475 = vadd.s32 %v1470, %v1474
        %v1476 = vadd.s32 %v1475, 536870912
        %v1477 = vshrl.u32 %v1476, 30
        %v1478 = vshll.u32 %v1477, 30
        %v1479 = vsub.s32 %v1475, %v1478
        %vm1480 = vcmp.lt.s32.totalorder %v1479, 0
        %v1481 = vsub.s32 0, %v1479
        %v1482 = vsel %vm1480, %v1481, %v1479
        %v1483 = vclz %v1482
        %v1484 = vsub.s32 %v1483, 2
        %vm1485 = vcmp.gt.s32.totalorder 0, %v1484
        %v1486 = vsel %vm1485, 0, %v1484
        %v1487 = vsub.s32 32, %v1486
        %v1488 = vshll.u32 %v1479, %v1486
        %v1489 = vshrl.u32 %v1471, %v1487
        %v1490 = vor.u32 %v1488, %v1489
        %v1491 = vsub.s32 4294967266, %v1486
        %v1492 = vadd.s32 %v1491, 127
        %v1493 = vshll.u32 %v1492, 23
        %v1494 = vor.u32 4788187, %v1493
        %v1495 = vand.u32 2147483647, %v1494
        %v1497 = vcvt.s32.f32 %v1490
        %v1498 = vmul.f32 %v1497, %v1495
        %v1499 = vxor.u32 %v1498, 2147483648
        %v1500 = vsel %vm1417, %v1499, %v1498
        %v1501 = vsub.s32 4, %v1477
        %v1502 = vsel %vm1417, %v1501, %v1477
        %v1503 = vsel %vm1416, %v567, %v1500
        %v1504 = vsel %vm1416, 0, %v1502
        %v1505 = vcosq.f32.pop %v1503
        %v1506 = vsinq.f32.pop %v1503
        %vm1507 = vweird.f32 %v567
        %v1508 = vadd.s32 %v1504, 3
        %v1509 = vand.u32 %v1508, 3
        %vm1510 = vcmp.lt.s32.totalorder %v1509, 2
        %vm1511 = vcmp.eq.s32.totalorder %v1509, 0
        %v1512 = vxor.u32 %v1506, 2147483648
        %v1513 = vsel %vm1511, %v1505, %v1512
        %vm1514 = vcmp.eq.s32.totalorder %v1509, 2
        %v1515 = vxor.u32 %v1505, 2147483648
        %v1516 = vsel %vm1514, %v1515, %v1506
        %v1517 = vsel %vm1510, %v1513, %v1516
        %v1518 = vsel %vm1507, nan, %v1517
        %v1519 = vand.u32 2147483647, %v568
        %vm1520 = vcmp.le.f32.partialorder %v1519, 0.7853982
        %vm1521 = vcmp.lt.s32.totalorder %v568, 0
        %v1522 = vand.u32 %v568, 2139095040
        %v1523 = vshrl.u32 %v1522, 23
        %v1524 = vsub.s32 %v1523, 127
        %v1525 = vand.u32 2147483647, %v568
        %v1526 = vand.u32 %v1525, 8388607
        %v1527 = vor.u32 %v1526, 8388608
        %v1528 = vsub.s32 0, %v1527
        %v1529 = vadd.s32 %v1524, 1
        %vm1530 = vcmp.gt.s32.totalorder %v1529, 0
        %v1531 = vsel %vm1530, %v1529, 0
        %v1532 = vshrl.u32 %v1531, 5
        %v1533 = vand.u32 %v1531, 31
        %v1534 = vsub.s32 32, %v1533
        %v1535 = vshrl.u32 683565275, %v1534
        %v1536 = vshll.u32 683565275, %v1533
        %v1537 = vshrl.u32 2475754826, %v1534
        %v1538 = vor.u32 %v1536, %v1537
        %v1539 = vshll.u32 2475754826, %v1533
        %v1540 = vshrl.u32 2131351028, %v1534
        %v1541 = vor.u32 %v1539, %v1540
        %v1542 = vshll.u32 2131351028, %v1533
        %v1543 = vshrl.u32 2102212464, %v1534
        %v1544 = vor.u32 %v1542, %v1543
        %v1545 = vshll.u32 2102212464, %v1533
        %v1546 = vshrl.u32 920167782, %v1534
        %v1547 = vor.u32 %v1545, %v1546
        %v1548 = vshll.u32 920167782, %v1533
        %v1549 = vshrl.u32 1326507024, %v1534
        %v1550 = vor.u32 %v1548, %v1549
        %vm1551 = vcmp.lt.s32.totalorder %v1532, 1
        %vm1552 = vcmp.lt.s32.totalorder %v1532, 2
        %vm1553 = vcmp.lt.s32.totalorder %v1532, 3
        %vm1554 = vcmp.lt.s32.totalorder %v1532, 4
        %v1555 = vsel %vm1551, %v1535, %v1538
        %v1556 = vsel %vm1554, %v1544, 2102212464
        %v1557 = vsel %vm1553, %v1541, %v1556
        %v1558 = vsel %vm1552, %v1555, %v1557
        %v1559 = vsel %vm1551, %v1538, %v1541
        %v1560 = vsel %vm1554, %v1547, 920167782
        %v1561 = vsel %vm1553, %v1544, %v1560
        %v1562 = vsel %vm1552, %v1559, %v1561
        %v1563 = vsel %vm1551, %v1541, %v1544
        %v1564 = vsel %vm1554, %v1550, 1326507024
        %v1565 = vsel %vm1553, %v1547, %v1564
        %v1566 = vsel %vm1552, %v1563, %v1565
        %v1567 = vshll.u32 %v1527, 8
        %v1568 = vmul.u32.u64.compose %v1567, %v1566
        %v1569 = vextract.low.u32 %v1568
        %v1570 = vextract.high.u32 %v1568
        %v1571 = vmul.u32.u64.compose %v1567, %v1562
        %v1572 = vextract.low.u32 %v1571
        %v1573 = vextract.high.u32 %v1571
        %v1574 = vmul.u32 %v1567, %v1558
        %v1575 = vadd.s32 %v1570, %v1572
        %vm1576 = vc.u32 %v1570, %v1572
        %v1577 = vadd.s32 %v1573, 1
        %v1578 = vsel %vm1576, %v1577, %v1573
        %v1579 = vadd.s32 %v1574, %v1578
        %v1580 = vadd.s32 %v1579, 536870912
        %v1581 = vshrl.u32 %v1580, 30
        %v1582 = vshll.u32 %v1581, 30
        %v1583 = vsub.s32 %v1579, %v1582
        %vm1584 = vcmp.lt.s32.totalorder %v1583, 0
        %v1585 = vsub.s32 0, %v1583
        %v1586 = vsel %vm1584, %v1585, %v1583
        %v1587 = vclz %v1586
        %v1588 = vsub.s32 %v1587, 2
        %vm1589 = vcmp.gt.s32.totalorder 0, %v1588
        %v1590 = vsel %vm1589, 0, %v1588
        %v1591 = vsub.s32 32, %v1590
        %v1592 = vshll.u32 %v1583, %v1590
        %v1593 = vshrl.u32 %v1575, %v1591
        %v1594 = vor.u32 %v1592, %v1593
        %v1595 = vsub.s32 4294967266, %v1590
        %v1596 = vadd.s32 %v1595, 127
        %v1597 = vshll.u32 %v1596, 23
        %v1598 = vor.u32 4788187, %v1597
        %v1599 = vand.u32 2147483647, %v1598
        %v1601 = vcvt.s32.f32 %v1594
        %v1602 = vmul.f32 %v1601, %v1599
        %v1603 = vxor.u32 %v1602, 2147483648
        %v1604 = vsel %vm1521, %v1603, %v1602
        %v1605 = vsub.s32 4, %v1581
        %v1606 = vsel %vm1521, %v1605, %v1581
        %v1607 = vsel %vm1520, %v568, %v1604
        %v1608 = vsel %vm1520, 0, %v1606
        %v1609 = vcosq.f32.pop %v1607
        %v1610 = vsinq.f32.pop %v1607
        %vm1611 = vweird.f32 %v568
        %v1612 = vadd.s32 %v1608, 3
        %v1613 = vand.u32 %v1612, 3
        %vm1614 = vcmp.lt.s32.totalorder %v1613, 2
        %vm1615 = vcmp.eq.s32.totalorder %v1613, 0
        %v1616 = vxor.u32 %v1610, 2147483648
        %v1617 = vsel %vm1615, %v1609, %v1616
        %vm1618 = vcmp.eq.s32.totalorder %v1613, 2
        %v1619 = vxor.u32 %v1609, 2147483648
        %v1620 = vsel %vm1618, %v1619, %v1610
        %v1621 = vsel %vm1614, %v1617, %v1620
        %v1622 = vsel %vm1611, nan, %v1621
        %v1623 = vand.u32 2147483647, %v569
        %vm1624 = vcmp.le.f32.partialorder %v1623, 0.7853982
        %vm1625 = vcmp.lt.s32.totalorder %v569, 0
        %v1626 = vand.u32 %v569, 2139095040
        %v1627 = vshrl.u32 %v1626, 23
        %v1628 = vsub.s32 %v1627, 127
        %v1629 = vand.u32 2147483647, %v569
        %v1630 = vand.u32 %v1629, 8388607
        %v1631 = vor.u32 %v1630, 8388608
        %v1632 = vsub.s32 0, %v1631
        %v1633 = vadd.s32 %v1628, 1
        %vm1634 = vcmp.gt.s32.totalorder %v1633, 0
        %v1635 = vsel %vm1634, %v1633, 0
        %v1636 = vshrl.u32 %v1635, 5
        %v1637 = vand.u32 %v1635, 31
        %v1638 = vsub.s32 32, %v1637
        %v1639 = vshrl.u32 683565275, %v1638
        %v1640 = vshll.u32 683565275, %v1637
        %v1641 = vshrl.u32 2475754826, %v1638
        %v1642 = vor.u32 %v1640, %v1641
        %v1643 = vshll.u32 2475754826, %v1637
        %v1644 = vshrl.u32 2131351028, %v1638
        %v1645 = vor.u32 %v1643, %v1644
        %v1646 = vshll.u32 2131351028, %v1637
        %v1647 = vshrl.u32 2102212464, %v1638
        %v1648 = vor.u32 %v1646, %v1647
        %v1649 = vshll.u32 2102212464, %v1637
        %v1650 = vshrl.u32 920167782, %v1638
        %v1651 = vor.u32 %v1649, %v1650
        %v1652 = vshll.u32 920167782, %v1637
        %v1653 = vshrl.u32 1326507024, %v1638
        %v1654 = vor.u32 %v1652, %v1653
        %vm1655 = vcmp.lt.s32.totalorder %v1636, 1
        %vm1656 = vcmp.lt.s32.totalorder %v1636, 2
        %vm1657 = vcmp.lt.s32.totalorder %v1636, 3
        %vm1658 = vcmp.lt.s32.totalorder %v1636, 4
        %v1659 = vsel %vm1655, %v1639, %v1642
        %v1660 = vsel %vm1658, %v1648, 2102212464
        %v1661 = vsel %vm1657, %v1645, %v1660
        %v1662 = vsel %vm1656, %v1659, %v1661
        %v1663 = vsel %vm1655, %v1642, %v1645
        %v1664 = vsel %vm1658, %v1651, 920167782
        %v1665 = vsel %vm1657, %v1648, %v1664
        %v1666 = vsel %vm1656, %v1663, %v1665
        %v1667 = vsel %vm1655, %v1645, %v1648
        %v1668 = vsel %vm1658, %v1654, 1326507024
        %v1669 = vsel %vm1657, %v1651, %v1668
        %v1670 = vsel %vm1656, %v1667, %v1669
        %v1671 = vshll.u32 %v1631, 8
        %v1672 = vmul.u32.u64.compose %v1671, %v1670
        %v1673 = vextract.low.u32 %v1672
        %v1674 = vextract.high.u32 %v1672
        %v1675 = vmul.u32.u64.compose %v1671, %v1666
        %v1676 = vextract.low.u32 %v1675
        %v1677 = vextract.high.u32 %v1675
        %v1678 = vmul.u32 %v1671, %v1662
        %v1679 = vadd.s32 %v1674, %v1676
        %vm1680 = vc.u32 %v1674, %v1676
        %v1681 = vadd.s32 %v1677, 1
        %v1682 = vsel %vm1680, %v1681, %v1677
        %v1683 = vadd.s32 %v1678, %v1682
        %v1684 = vadd.s32 %v1683, 536870912
        %v1685 = vshrl.u32 %v1684, 30
        %v1686 = vshll.u32 %v1685, 30
        %v1687 = vsub.s32 %v1683, %v1686
        %vm1688 = vcmp.lt.s32.totalorder %v1687, 0
        %v1689 = vsub.s32 0, %v1687
        %v1690 = vsel %vm1688, %v1689, %v1687
        %v1691 = vclz %v1690
        %v1692 = vsub.s32 %v1691, 2
        %vm1693 = vcmp.gt.s32.totalorder 0, %v1692
        %v1694 = vsel %vm1693, 0, %v1692
        %v1695 = vsub.s32 32, %v1694
        %v1696 = vshll.u32 %v1687, %v1694
        %v1697 = vshrl.u32 %v1679, %v1695
        %v1698 = vor.u32 %v1696, %v1697
        %v1699 = vsub.s32 4294967266, %v1694
        %v1700 = vadd.s32 %v1699, 127
        %v1701 = vshll.u32 %v1700, 23
        %v1702 = vor.u32 4788187, %v1701
        %v1703 = vand.u32 2147483647, %v1702
        %v1705 = vcvt.s32.f32 %v1698
        %v1706 = vmul.f32 %v1705, %v1703
        %v1707 = vxor.u32 %v1706, 2147483648
        %v1708 = vsel %vm1625, %v1707, %v1706
        %v1709 = vsub.s32 4, %v1685
        %v1710 = vsel %vm1625, %v1709, %v1685
        %v1711 = vsel %vm1624, %v569, %v1708
        %v1712 = vsel %vm1624, 0, %v1710
        %v1713 = vcosq.f32.pop %v1711
        %v1714 = vsinq.f32.pop %v1711
        %vm1715 = vweird.f32 %v569
        %v1716 = vadd.s32 %v1712, 3
        %v1717 = vand.u32 %v1716, 3
        %vm1718 = vcmp.lt.s32.totalorder %v1717, 2
        %vm1719 = vcmp.eq.s32.totalorder %v1717, 0
        %v1720 = vxor.u32 %v1714, 2147483648
        %v1721 = vsel %vm1719, %v1713, %v1720
        %vm1722 = vcmp.eq.s32.totalorder %v1717, 2
        %v1723 = vxor.u32 %v1713, 2147483648
        %v1724 = vsel %vm1722, %v1723, %v1714
        %v1725 = vsel %vm1718, %v1721, %v1724
        %v1726 = vsel %vm1715, nan, %v1725
        %v1727 = vand.u32 2147483647, %v570
        %vm1728 = vcmp.le.f32.partialorder %v1727, 0.7853982
        %vm1729 = vcmp.lt.s32.totalorder %v570, 0
        %v1730 = vand.u32 %v570, 2139095040
        %v1731 = vshrl.u32 %v1730, 23
        %v1732 = vsub.s32 %v1731, 127
        %v1733 = vand.u32 2147483647, %v570
        %v1734 = vand.u32 %v1733, 8388607
        %v1735 = vor.u32 %v1734, 8388608
        %v1736 = vsub.s32 0, %v1735
        %v1737 = vadd.s32 %v1732, 1
        %vm1738 = vcmp.gt.s32.totalorder %v1737, 0
        %v1739 = vsel %vm1738, %v1737, 0
        %v1740 = vshrl.u32 %v1739, 5
        %v1741 = vand.u32 %v1739, 31
        %v1742 = vsub.s32 32, %v1741
        %v1743 = vshrl.u32 683565275, %v1742
        %v1744 = vshll.u32 683565275, %v1741
        %v1745 = vshrl.u32 2475754826, %v1742
        %v1746 = vor.u32 %v1744, %v1745
        %v1747 = vshll.u32 2475754826, %v1741
        %v1748 = vshrl.u32 2131351028, %v1742
        %v1749 = vor.u32 %v1747, %v1748
        %v1750 = vshll.u32 2131351028, %v1741
        %v1751 = vshrl.u32 2102212464, %v1742
        %v1752 = vor.u32 %v1750, %v1751
        %v1753 = vshll.u32 2102212464, %v1741
        %v1754 = vshrl.u32 920167782, %v1742
        %v1755 = vor.u32 %v1753, %v1754
        %v1756 = vshll.u32 920167782, %v1741
        %v1757 = vshrl.u32 1326507024, %v1742
        %v1758 = vor.u32 %v1756, %v1757
        %vm1759 = vcmp.lt.s32.totalorder %v1740, 1
        %vm1760 = vcmp.lt.s32.totalorder %v1740, 2
        %vm1761 = vcmp.lt.s32.totalorder %v1740, 3
        %vm1762 = vcmp.lt.s32.totalorder %v1740, 4
        %v1763 = vsel %vm1759, %v1743, %v1746
        %v1764 = vsel %vm1762, %v1752, 2102212464
        %v1765 = vsel %vm1761, %v1749, %v1764
        %v1766 = vsel %vm1760, %v1763, %v1765
        %v1767 = vsel %vm1759, %v1746, %v1749
        %v1768 = vsel %vm1762, %v1755, 920167782
        %v1769 = vsel %vm1761, %v1752, %v1768
        %v1770 = vsel %vm1760, %v1767, %v1769
        %v1771 = vsel %vm1759, %v1749, %v1752
        %v1772 = vsel %vm1762, %v1758, 1326507024
        %v1773 = vsel %vm1761, %v1755, %v1772
        %v1774 = vsel %vm1760, %v1771, %v1773
        %v1775 = vshll.u32 %v1735, 8
        %v1776 = vmul.u32.u64.compose %v1775, %v1774
        %v1777 = vextract.low.u32 %v1776
        %v1778 = vextract.high.u32 %v1776
        %v1779 = vmul.u32.u64.compose %v1775, %v1770
        %v1780 = vextract.low.u32 %v1779
        %v1781 = vextract.high.u32 %v1779
        %v1782 = vmul.u32 %v1775, %v1766
        %v1783 = vadd.s32 %v1778, %v1780
        %vm1784 = vc.u32 %v1778, %v1780
        %v1785 = vadd.s32 %v1781, 1
        %v1786 = vsel %vm1784, %v1785, %v1781
        %v1787 = vadd.s32 %v1782, %v1786
        %v1788 = vadd.s32 %v1787, 536870912
        %v1789 = vshrl.u32 %v1788, 30
        %v1790 = vshll.u32 %v1789, 30
        %v1791 = vsub.s32 %v1787, %v1790
        %vm1792 = vcmp.lt.s32.totalorder %v1791, 0
        %v1793 = vsub.s32 0, %v1791
        %v1794 = vsel %vm1792, %v1793, %v1791
        %v1795 = vclz %v1794
        %v1796 = vsub.s32 %v1795, 2
        %vm1797 = vcmp.gt.s32.totalorder 0, %v1796
        %v1798 = vsel %vm1797, 0, %v1796
        %v1799 = vsub.s32 32, %v1798
        %v1800 = vshll.u32 %v1791, %v1798
        %v1801 = vshrl.u32 %v1783, %v1799
        %v1802 = vor.u32 %v1800, %v1801
        %v1803 = vsub.s32 4294967266, %v1798
        %v1804 = vadd.s32 %v1803, 127
        %v1805 = vshll.u32 %v1804, 23
        %v1806 = vor.u32 4788187, %v1805
        %v1807 = vand.u32 2147483647, %v1806
        %v1809 = vcvt.s32.f32 %v1802
        %v1810 = vmul.f32 %v1809, %v1807
        %v1811 = vxor.u32 %v1810, 2147483648
        %v1812 = vsel %vm1729, %v1811, %v1810
        %v1813 = vsub.s32 4, %v1789
        %v1814 = vsel %vm1729, %v1813, %v1789
        %v1815 = vsel %vm1728, %v570, %v1812
        %v1816 = vsel %vm1728, 0, %v1814
        %v1817 = vcosq.f32.pop %v1815
        %v1818 = vsinq.f32.pop %v1815
        %vm1819 = vweird.f32 %v570
        %v1820 = vadd.s32 %v1816, 3
        %v1821 = vand.u32 %v1820, 3
        %vm1822 = vcmp.lt.s32.totalorder %v1821, 2
        %vm1823 = vcmp.eq.s32.totalorder %v1821, 0
        %v1824 = vxor.u32 %v1818, 2147483648
        %v1825 = vsel %vm1823, %v1817, %v1824
        %vm1826 = vcmp.eq.s32.totalorder %v1821, 2
        %v1827 = vxor.u32 %v1817, 2147483648
        %v1828 = vsel %vm1826, %v1827, %v1818
        %v1829 = vsel %vm1822, %v1825, %v1828
        %v1830 = vsel %vm1819, nan, %v1829
        %v1831 = vand.u32 2147483647, %v571
        %vm1832 = vcmp.le.f32.partialorder %v1831, 0.7853982
        %vm1833 = vcmp.lt.s32.totalorder %v571, 0
        %v1834 = vand.u32 %v571, 2139095040
        %v1835 = vshrl.u32 %v1834, 23
        %v1836 = vsub.s32 %v1835, 127
        %v1837 = vand.u32 2147483647, %v571
        %v1838 = vand.u32 %v1837, 8388607
        %v1839 = vor.u32 %v1838, 8388608
        %v1840 = vsub.s32 0, %v1839
        %v1841 = vadd.s32 %v1836, 1
        %vm1842 = vcmp.gt.s32.totalorder %v1841, 0
        %v1843 = vsel %vm1842, %v1841, 0
        %v1844 = vshrl.u32 %v1843, 5
        %v1845 = vand.u32 %v1843, 31
        %v1846 = vsub.s32 32, %v1845
        %v1847 = vshrl.u32 683565275, %v1846
        %v1848 = vshll.u32 683565275, %v1845
        %v1849 = vshrl.u32 2475754826, %v1846
        %v1850 = vor.u32 %v1848, %v1849
        %v1851 = vshll.u32 2475754826, %v1845
        %v1852 = vshrl.u32 2131351028, %v1846
        %v1853 = vor.u32 %v1851, %v1852
        %v1854 = vshll.u32 2131351028, %v1845
        %v1855 = vshrl.u32 2102212464, %v1846
        %v1856 = vor.u32 %v1854, %v1855
        %v1857 = vshll.u32 2102212464, %v1845
        %v1858 = vshrl.u32 920167782, %v1846
        %v1859 = vor.u32 %v1857, %v1858
        %v1860 = vshll.u32 920167782, %v1845
        %v1861 = vshrl.u32 1326507024, %v1846
        %v1862 = vor.u32 %v1860, %v1861
        %vm1863 = vcmp.lt.s32.totalorder %v1844, 1
        %vm1864 = vcmp.lt.s32.totalorder %v1844, 2
        %vm1865 = vcmp.lt.s32.totalorder %v1844, 3
        %vm1866 = vcmp.lt.s32.totalorder %v1844, 4
        %v1867 = vsel %vm1863, %v1847, %v1850
        %v1868 = vsel %vm1866, %v1856, 2102212464
        %v1869 = vsel %vm1865, %v1853, %v1868
        %v1870 = vsel %vm1864, %v1867, %v1869
        %v1871 = vsel %vm1863, %v1850, %v1853
        %v1872 = vsel %vm1866, %v1859, 920167782
        %v1873 = vsel %vm1865, %v1856, %v1872
        %v1874 = vsel %vm1864, %v1871, %v1873
        %v1875 = vsel %vm1863, %v1853, %v1856
        %v1876 = vsel %vm1866, %v1862, 1326507024
        %v1877 = vsel %vm1865, %v1859, %v1876
        %v1878 = vsel %vm1864, %v1875, %v1877
        %v1879 = vshll.u32 %v1839, 8
        %v1880 = vmul.u32.u64.compose %v1879, %v1878
        %v1881 = vextract.low.u32 %v1880
        %v1882 = vextract.high.u32 %v1880
        %v1883 = vmul.u32.u64.compose %v1879, %v1874
        %v1884 = vextract.low.u32 %v1883
        %v1885 = vextract.high.u32 %v1883
        %v1886 = vmul.u32 %v1879, %v1870
        %v1887 = vadd.s32 %v1882, %v1884
        %vm1888 = vc.u32 %v1882, %v1884
        %v1889 = vadd.s32 %v1885, 1
        %v1890 = vsel %vm1888, %v1889, %v1885
        %v1891 = vadd.s32 %v1886, %v1890
        %v1892 = vadd.s32 %v1891, 536870912
        %v1893 = vshrl.u32 %v1892, 30
        %v1894 = vshll.u32 %v1893, 30
        %v1895 = vsub.s32 %v1891, %v1894
        %vm1896 = vcmp.lt.s32.totalorder %v1895, 0
        %v1897 = vsub.s32 0, %v1895
        %v1898 = vsel %vm1896, %v1897, %v1895
        %v1899 = vclz %v1898
        %v1900 = vsub.s32 %v1899, 2
        %vm1901 = vcmp.gt.s32.totalorder 0, %v1900
        %v1902 = vsel %vm1901, 0, %v1900
        %v1903 = vsub.s32 32, %v1902
        %v1904 = vshll.u32 %v1895, %v1902
        %v1905 = vshrl.u32 %v1887, %v1903
        %v1906 = vor.u32 %v1904, %v1905
        %v1907 = vsub.s32 4294967266, %v1902
        %v1908 = vadd.s32 %v1907, 127
        %v1909 = vshll.u32 %v1908, 23
        %v1910 = vor.u32 4788187, %v1909
        %v1911 = vand.u32 2147483647, %v1910
        %v1913 = vcvt.s32.f32 %v1906
        %v1914 = vmul.f32 %v1913, %v1911
        %v1915 = vxor.u32 %v1914, 2147483648
        %v1916 = vsel %vm1833, %v1915, %v1914
        %v1917 = vsub.s32 4, %v1893
        %v1918 = vsel %vm1833, %v1917, %v1893
        %v1919 = vsel %vm1832, %v571, %v1916
        %v1920 = vsel %vm1832, 0, %v1918
        %v1921 = vcosq.f32.pop %v1919
        %v1922 = vsinq.f32.pop %v1919
        %vm1923 = vweird.f32 %v571
        %v1924 = vadd.s32 %v1920, 3
        %v1925 = vand.u32 %v1924, 3
        %vm1926 = vcmp.lt.s32.totalorder %v1925, 2
        %vm1927 = vcmp.eq.s32.totalorder %v1925, 0
        %v1928 = vxor.u32 %v1922, 2147483648
        %v1929 = vsel %vm1927, %v1921, %v1928
        %vm1930 = vcmp.eq.s32.totalorder %v1925, 2
        %v1931 = vxor.u32 %v1921, 2147483648
        %v1932 = vsel %vm1930, %v1931, %v1922
        %v1933 = vsel %vm1926, %v1929, %v1932
        %v1934 = vsel %vm1923, nan, %v1933
        %v1935 = vand.u32 2147483647, %v572
        %vm1936 = vcmp.le.f32.partialorder %v1935, 0.7853982
        %vm1937 = vcmp.lt.s32.totalorder %v572, 0
        %v1938 = vand.u32 %v572, 2139095040
        %v1939 = vshrl.u32 %v1938, 23
        %v1940 = vsub.s32 %v1939, 127
        %v1941 = vand.u32 2147483647, %v572
        %v1942 = vand.u32 %v1941, 8388607
        %v1943 = vor.u32 %v1942, 8388608
        %v1944 = vsub.s32 0, %v1943
        %v1945 = vadd.s32 %v1940, 1
        %vm1946 = vcmp.gt.s32.totalorder %v1945, 0
        %v1947 = vsel %vm1946, %v1945, 0
        %v1948 = vshrl.u32 %v1947, 5
        %v1949 = vand.u32 %v1947, 31
        %v1950 = vsub.s32 32, %v1949
        %v1951 = vshrl.u32 683565275, %v1950
        %v1952 = vshll.u32 683565275, %v1949
        %v1953 = vshrl.u32 2475754826, %v1950
        %v1954 = vor.u32 %v1952, %v1953
        %v1955 = vshll.u32 2475754826, %v1949
        %v1956 = vshrl.u32 2131351028, %v1950
        %v1957 = vor.u32 %v1955, %v1956
        %v1958 = vshll.u32 2131351028, %v1949
        %v1959 = vshrl.u32 2102212464, %v1950
        %v1960 = vor.u32 %v1958, %v1959
        %v1961 = vshll.u32 2102212464, %v1949
        %v1962 = vshrl.u32 920167782, %v1950
        %v1963 = vor.u32 %v1961, %v1962
        %v1964 = vshll.u32 920167782, %v1949
        %v1965 = vshrl.u32 1326507024, %v1950
        %v1966 = vor.u32 %v1964, %v1965
        %vm1967 = vcmp.lt.s32.totalorder %v1948, 1
        %vm1968 = vcmp.lt.s32.totalorder %v1948, 2
        %vm1969 = vcmp.lt.s32.totalorder %v1948, 3
        %vm1970 = vcmp.lt.s32.totalorder %v1948, 4
        %v1971 = vsel %vm1967, %v1951, %v1954
        %v1972 = vsel %vm1970, %v1960, 2102212464
        %v1973 = vsel %vm1969, %v1957, %v1972
        %v1974 = vsel %vm1968, %v1971, %v1973
        %v1975 = vsel %vm1967, %v1954, %v1957
        %v1976 = vsel %vm1970, %v1963, 920167782
        %v1977 = vsel %vm1969, %v1960, %v1976
        %v1978 = vsel %vm1968, %v1975, %v1977
        %v1979 = vsel %vm1967, %v1957, %v1960
        %v1980 = vsel %vm1970, %v1966, 1326507024
        %v1981 = vsel %vm1969, %v1963, %v1980
        %v1982 = vsel %vm1968, %v1979, %v1981
        %v1983 = vshll.u32 %v1943, 8
        %v1984 = vmul.u32.u64.compose %v1983, %v1982
        %v1985 = vextract.low.u32 %v1984
        %v1986 = vextract.high.u32 %v1984
        %v1987 = vmul.u32.u64.compose %v1983, %v1978
        %v1988 = vextract.low.u32 %v1987
        %v1989 = vextract.high.u32 %v1987
        %v1990 = vmul.u32 %v1983, %v1974
        %v1991 = vadd.s32 %v1986, %v1988
        %vm1992 = vc.u32 %v1986, %v1988
        %v1993 = vadd.s32 %v1989, 1
        %v1994 = vsel %vm1992, %v1993, %v1989
        %v1995 = vadd.s32 %v1990, %v1994
        %v1996 = vadd.s32 %v1995, 536870912
        %v1997 = vshrl.u32 %v1996, 30
        %v1998 = vshll.u32 %v1997, 30
        %v1999 = vsub.s32 %v1995, %v1998
        %vm2000 = vcmp.lt.s32.totalorder %v1999, 0
        %v2001 = vsub.s32 0, %v1999
        %v2002 = vsel %vm2000, %v2001, %v1999
        %v2003 = vclz %v2002
        %v2004 = vsub.s32 %v2003, 2
        %vm2005 = vcmp.gt.s32.totalorder 0, %v2004
        %v2006 = vsel %vm2005, 0, %v2004
        %v2007 = vsub.s32 32, %v2006
        %v2008 = vshll.u32 %v1999, %v2006
        %v2009 = vshrl.u32 %v1991, %v2007
        %v2010 = vor.u32 %v2008, %v2009
        %v2011 = vsub.s32 4294967266, %v2006
        %v2012 = vadd.s32 %v2011, 127
        %v2013 = vshll.u32 %v2012, 23
        %v2014 = vor.u32 4788187, %v2013
        %v2015 = vand.u32 2147483647, %v2014
        %v2017 = vcvt.s32.f32 %v2010
        %v2018 = vmul.f32 %v2017, %v2015
        %v2019 = vxor.u32 %v2018, 2147483648
        %v2020 = vsel %vm1937, %v2019, %v2018
        %v2021 = vsub.s32 4, %v1997
        %v2022 = vsel %vm1937, %v2021, %v1997
        %v2023 = vsel %vm1936, %v572, %v2020
        %v2024 = vsel %vm1936, 0, %v2022
        %v2025 = vcosq.f32.pop %v2023
        %v2026 = vsinq.f32.pop %v2023
        %vm2027 = vweird.f32 %v572
        %v2028 = vadd.s32 %v2024, 3
        %v2029 = vand.u32 %v2028, 3
        %vm2030 = vcmp.lt.s32.totalorder %v2029, 2
        %vm2031 = vcmp.eq.s32.totalorder %v2029, 0
        %v2032 = vxor.u32 %v2026, 2147483648
        %v2033 = vsel %vm2031, %v2025, %v2032
        %vm2034 = vcmp.eq.s32.totalorder %v2029, 2
        %v2035 = vxor.u32 %v2025, 2147483648
        %v2036 = vsel %vm2034, %v2035, %v2026
        %v2037 = vsel %vm2030, %v2033, %v2036
        %v2038 = vsel %vm2027, nan, %v2037
        %v2039 = vand.u32 2147483647, %v573
        %vm2040 = vcmp.le.f32.partialorder %v2039, 0.7853982
        %vm2041 = vcmp.lt.s32.totalorder %v573, 0
        %v2042 = vand.u32 %v573, 2139095040
        %v2043 = vshrl.u32 %v2042, 23
        %v2044 = vsub.s32 %v2043, 127
        %v2045 = vand.u32 2147483647, %v573
        %v2046 = vand.u32 %v2045, 8388607
        %v2047 = vor.u32 %v2046, 8388608
        %v2048 = vsub.s32 0, %v2047
        %v2049 = vadd.s32 %v2044, 1
        %vm2050 = vcmp.gt.s32.totalorder %v2049, 0
        %v2051 = vsel %vm2050, %v2049, 0
        %v2052 = vshrl.u32 %v2051, 5
        %v2053 = vand.u32 %v2051, 31
        %v2054 = vsub.s32 32, %v2053
        %v2055 = vshrl.u32 683565275, %v2054
        %v2056 = vshll.u32 683565275, %v2053
        %v2057 = vshrl.u32 2475754826, %v2054
        %v2058 = vor.u32 %v2056, %v2057
        %v2059 = vshll.u32 2475754826, %v2053
        %v2060 = vshrl.u32 2131351028, %v2054
        %v2061 = vor.u32 %v2059, %v2060
        %v2062 = vshll.u32 2131351028, %v2053
        %v2063 = vshrl.u32 2102212464, %v2054
        %v2064 = vor.u32 %v2062, %v2063
        %v2065 = vshll.u32 2102212464, %v2053
        %v2066 = vshrl.u32 920167782, %v2054
        %v2067 = vor.u32 %v2065, %v2066
        %v2068 = vshll.u32 920167782, %v2053
        %v2069 = vshrl.u32 1326507024, %v2054
        %v2070 = vor.u32 %v2068, %v2069
        %vm2071 = vcmp.lt.s32.totalorder %v2052, 1
        %vm2072 = vcmp.lt.s32.totalorder %v2052, 2
        %vm2073 = vcmp.lt.s32.totalorder %v2052, 3
        %vm2074 = vcmp.lt.s32.totalorder %v2052, 4
        %v2075 = vsel %vm2071, %v2055, %v2058
        %v2076 = vsel %vm2074, %v2064, 2102212464
        %v2077 = vsel %vm2073, %v2061, %v2076
        %v2078 = vsel %vm2072, %v2075, %v2077
        %v2079 = vsel %vm2071, %v2058, %v2061
        %v2080 = vsel %vm2074, %v2067, 920167782
        %v2081 = vsel %vm2073, %v2064, %v2080
        %v2082 = vsel %vm2072, %v2079, %v2081
        %v2083 = vsel %vm2071, %v2061, %v2064
        %v2084 = vsel %vm2074, %v2070, 1326507024
        %v2085 = vsel %vm2073, %v2067, %v2084
        %v2086 = vsel %vm2072, %v2083, %v2085
        %v2087 = vshll.u32 %v2047, 8
        %v2088 = vmul.u32.u64.compose %v2087, %v2086
        %v2089 = vextract.low.u32 %v2088
        %v2090 = vextract.high.u32 %v2088
        %v2091 = vmul.u32.u64.compose %v2087, %v2082
        %v2092 = vextract.low.u32 %v2091
        %v2093 = vextract.high.u32 %v2091
        %v2094 = vmul.u32 %v2087, %v2078
        %v2095 = vadd.s32 %v2090, %v2092
        %vm2096 = vc.u32 %v2090, %v2092
        %v2097 = vadd.s32 %v2093, 1
        %v2098 = vsel %vm2096, %v2097, %v2093
        %v2099 = vadd.s32 %v2094, %v2098
        %v2100 = vadd.s32 %v2099, 536870912
        %v2101 = vshrl.u32 %v2100, 30
        %v2102 = vshll.u32 %v2101, 30
        %v2103 = vsub.s32 %v2099, %v2102
        %vm2104 = vcmp.lt.s32.totalorder %v2103, 0
        %v2105 = vsub.s32 0, %v2103
        %v2106 = vsel %vm2104, %v2105, %v2103
        %v2107 = vclz %v2106
        %v2108 = vsub.s32 %v2107, 2
        %vm2109 = vcmp.gt.s32.totalorder 0, %v2108
        %v2110 = vsel %vm2109, 0, %v2108
        %v2111 = vsub.s32 32, %v2110
        %v2112 = vshll.u32 %v2103, %v2110
        %v2113 = vshrl.u32 %v2095, %v2111
        %v2114 = vor.u32 %v2112, %v2113
        %v2115 = vsub.s32 4294967266, %v2110
        %v2116 = vadd.s32 %v2115, 127
        %v2117 = vshll.u32 %v2116, 23
        %v2118 = vor.u32 4788187, %v2117
        %v2119 = vand.u32 2147483647, %v2118
        %v2121 = vcvt.s32.f32 %v2114
        %v2122 = vmul.f32 %v2121, %v2119
        %v2123 = vxor.u32 %v2122, 2147483648
        %v2124 = vsel %vm2041, %v2123, %v2122
        %v2125 = vsub.s32 4, %v2101
        %v2126 = vsel %vm2041, %v2125, %v2101
        %v2127 = vsel %vm2040, %v573, %v2124
        %v2128 = vsel %vm2040, 0, %v2126
        %v2129 = vcosq.f32.pop %v2127
        %v2130 = vsinq.f32.pop %v2127
        %vm2131 = vweird.f32 %v573
        %v2132 = vadd.s32 %v2128, 3
        %v2133 = vand.u32 %v2132, 3
        %vm2134 = vcmp.lt.s32.totalorder %v2133, 2
        %vm2135 = vcmp.eq.s32.totalorder %v2133, 0
        %v2136 = vxor.u32 %v2130, 2147483648
        %v2137 = vsel %vm2135, %v2129, %v2136
        %vm2138 = vcmp.eq.s32.totalorder %v2133, 2
        %v2139 = vxor.u32 %v2129, 2147483648
        %v2140 = vsel %vm2138, %v2139, %v2130
        %v2141 = vsel %vm2134, %v2137, %v2140
        %v2142 = vsel %vm2131, nan, %v2141
        %v2143 = vand.u32 2147483647, %v574
        %vm2144 = vcmp.le.f32.partialorder %v2143, 0.7853982
        %vm2145 = vcmp.lt.s32.totalorder %v574, 0
        %v2146 = vand.u32 %v574, 2139095040
        %v2147 = vshrl.u32 %v2146, 23
        %v2148 = vsub.s32 %v2147, 127
        %v2149 = vand.u32 2147483647, %v574
        %v2150 = vand.u32 %v2149, 8388607
        %v2151 = vor.u32 %v2150, 8388608
        %v2152 = vsub.s32 0, %v2151
        %v2153 = vadd.s32 %v2148, 1
        %vm2154 = vcmp.gt.s32.totalorder %v2153, 0
        %v2155 = vsel %vm2154, %v2153, 0
        %v2156 = vshrl.u32 %v2155, 5
        %v2157 = vand.u32 %v2155, 31
        %v2158 = vsub.s32 32, %v2157
        %v2159 = vshrl.u32 683565275, %v2158
        %v2160 = vshll.u32 683565275, %v2157
        %v2161 = vshrl.u32 2475754826, %v2158
        %v2162 = vor.u32 %v2160, %v2161
        %v2163 = vshll.u32 2475754826, %v2157
        %v2164 = vshrl.u32 2131351028, %v2158
        %v2165 = vor.u32 %v2163, %v2164
        %v2166 = vshll.u32 2131351028, %v2157
        %v2167 = vshrl.u32 2102212464, %v2158
        %v2168 = vor.u32 %v2166, %v2167
        %v2169 = vshll.u32 2102212464, %v2157
        %v2170 = vshrl.u32 920167782, %v2158
        %v2171 = vor.u32 %v2169, %v2170
        %v2172 = vshll.u32 920167782, %v2157
        %v2173 = vshrl.u32 1326507024, %v2158
        %v2174 = vor.u32 %v2172, %v2173
        %vm2175 = vcmp.lt.s32.totalorder %v2156, 1
        %vm2176 = vcmp.lt.s32.totalorder %v2156, 2
        %vm2177 = vcmp.lt.s32.totalorder %v2156, 3
        %vm2178 = vcmp.lt.s32.totalorder %v2156, 4
        %v2179 = vsel %vm2175, %v2159, %v2162
        %v2180 = vsel %vm2178, %v2168, 2102212464
        %v2181 = vsel %vm2177, %v2165, %v2180
        %v2182 = vsel %vm2176, %v2179, %v2181
        %v2183 = vsel %vm2175, %v2162, %v2165
        %v2184 = vsel %vm2178, %v2171, 920167782
        %v2185 = vsel %vm2177, %v2168, %v2184
        %v2186 = vsel %vm2176, %v2183, %v2185
        %v2187 = vsel %vm2175, %v2165, %v2168
        %v2188 = vsel %vm2178, %v2174, 1326507024
        %v2189 = vsel %vm2177, %v2171, %v2188
        %v2190 = vsel %vm2176, %v2187, %v2189
        %v2191 = vshll.u32 %v2151, 8
        %v2192 = vmul.u32.u64.compose %v2191, %v2190
        %v2193 = vextract.low.u32 %v2192
        %v2194 = vextract.high.u32 %v2192
        %v2195 = vmul.u32.u64.compose %v2191, %v2186
        %v2196 = vextract.low.u32 %v2195
        %v2197 = vextract.high.u32 %v2195
        %v2198 = vmul.u32 %v2191, %v2182
        %v2199 = vadd.s32 %v2194, %v2196
        %vm2200 = vc.u32 %v2194, %v2196
        %v2201 = vadd.s32 %v2197, 1
        %v2202 = vsel %vm2200, %v2201, %v2197
        %v2203 = vadd.s32 %v2198, %v2202
        %v2204 = vadd.s32 %v2203, 536870912
        %v2205 = vshrl.u32 %v2204, 30
        %v2206 = vshll.u32 %v2205, 30
        %v2207 = vsub.s32 %v2203, %v2206
        %vm2208 = vcmp.lt.s32.totalorder %v2207, 0
        %v2209 = vsub.s32 0, %v2207
        %v2210 = vsel %vm2208, %v2209, %v2207
        %v2211 = vclz %v2210
        %v2212 = vsub.s32 %v2211, 2
        %vm2213 = vcmp.gt.s32.totalorder 0, %v2212
        %v2214 = vsel %vm2213, 0, %v2212
        %v2215 = vsub.s32 32, %v2214
        %v2216 = vshll.u32 %v2207, %v2214
        %v2217 = vshrl.u32 %v2199, %v2215
        %v2218 = vor.u32 %v2216, %v2217
        %v2219 = vsub.s32 4294967266, %v2214
        %v2220 = vadd.s32 %v2219, 127
        %v2221 = vshll.u32 %v2220, 23
        %v2222 = vor.u32 4788187, %v2221
        %v2223 = vand.u32 2147483647, %v2222
        %v2225 = vcvt.s32.f32 %v2218
        %v2226 = vmul.f32 %v2225, %v2223
        %v2227 = vxor.u32 %v2226, 2147483648
        %v2228 = vsel %vm2145, %v2227, %v2226
        %v2229 = vsub.s32 4, %v2205
        %v2230 = vsel %vm2145, %v2229, %v2205
        %v2231 = vsel %vm2144, %v574, %v2228
        %v2232 = vsel %vm2144, 0, %v2230
        %v2233 = vcosq.f32.pop %v2231
        %v2234 = vsinq.f32.pop %v2231
        %vm2235 = vweird.f32 %v574
        %v2236 = vadd.s32 %v2232, 3
        %v2237 = vand.u32 %v2236, 3
        %vm2238 = vcmp.lt.s32.totalorder %v2237, 2
        %vm2239 = vcmp.eq.s32.totalorder %v2237, 0
        %v2240 = vxor.u32 %v2234, 2147483648
        %v2241 = vsel %vm2239, %v2233, %v2240
        %vm2242 = vcmp.eq.s32.totalorder %v2237, 2
        %v2243 = vxor.u32 %v2233, 2147483648
        %v2244 = vsel %vm2242, %v2243, %v2234
        %v2245 = vsel %vm2238, %v2241, %v2244
        %v2246 = vsel %vm2235, nan, %v2245
        %v2247 = vand.u32 2147483647, %v575
        %vm2248 = vcmp.le.f32.partialorder %v2247, 0.7853982
        %vm2249 = vcmp.lt.s32.totalorder %v575, 0
        %v2250 = vand.u32 %v575, 2139095040
        %v2251 = vshrl.u32 %v2250, 23
        %v2252 = vsub.s32 %v2251, 127
        %v2253 = vand.u32 2147483647, %v575
        %v2254 = vand.u32 %v2253, 8388607
        %v2255 = vor.u32 %v2254, 8388608
        %v2256 = vsub.s32 0, %v2255
        %v2257 = vadd.s32 %v2252, 1
        %vm2258 = vcmp.gt.s32.totalorder %v2257, 0
        %v2259 = vsel %vm2258, %v2257, 0
        %v2260 = vshrl.u32 %v2259, 5
        %v2261 = vand.u32 %v2259, 31
        %v2262 = vsub.s32 32, %v2261
        %v2263 = vshrl.u32 683565275, %v2262
        %v2264 = vshll.u32 683565275, %v2261
        %v2265 = vshrl.u32 2475754826, %v2262
        %v2266 = vor.u32 %v2264, %v2265
        %v2267 = vshll.u32 2475754826, %v2261
        %v2268 = vshrl.u32 2131351028, %v2262
        %v2269 = vor.u32 %v2267, %v2268
        %v2270 = vshll.u32 2131351028, %v2261
        %v2271 = vshrl.u32 2102212464, %v2262
        %v2272 = vor.u32 %v2270, %v2271
        %v2273 = vshll.u32 2102212464, %v2261
        %v2274 = vshrl.u32 920167782, %v2262
        %v2275 = vor.u32 %v2273, %v2274
        %v2276 = vshll.u32 920167782, %v2261
        %v2277 = vshrl.u32 1326507024, %v2262
        %v2278 = vor.u32 %v2276, %v2277
        %vm2279 = vcmp.lt.s32.totalorder %v2260, 1
        %vm2280 = vcmp.lt.s32.totalorder %v2260, 2
        %vm2281 = vcmp.lt.s32.totalorder %v2260, 3
        %vm2282 = vcmp.lt.s32.totalorder %v2260, 4
        %v2283 = vsel %vm2279, %v2263, %v2266
        %v2284 = vsel %vm2282, %v2272, 2102212464
        %v2285 = vsel %vm2281, %v2269, %v2284
        %v2286 = vsel %vm2280, %v2283, %v2285
        %v2287 = vsel %vm2279, %v2266, %v2269
        %v2288 = vsel %vm2282, %v2275, 920167782
        %v2289 = vsel %vm2281, %v2272, %v2288
        %v2290 = vsel %vm2280, %v2287, %v2289
        %v2291 = vsel %vm2279, %v2269, %v2272
        %v2292 = vsel %vm2282, %v2278, 1326507024
        %v2293 = vsel %vm2281, %v2275, %v2292
        %v2294 = vsel %vm2280, %v2291, %v2293
        %v2295 = vshll.u32 %v2255, 8
        %v2296 = vmul.u32.u64.compose %v2295, %v2294
        %v2297 = vextract.low.u32 %v2296
        %v2298 = vextract.high.u32 %v2296
        %v2299 = vmul.u32.u64.compose %v2295, %v2290
        %v2300 = vextract.low.u32 %v2299
        %v2301 = vextract.high.u32 %v2299
        %v2302 = vmul.u32 %v2295, %v2286
        %v2303 = vadd.s32 %v2298, %v2300
        %vm2304 = vc.u32 %v2298, %v2300
        %v2305 = vadd.s32 %v2301, 1
        %v2306 = vsel %vm2304, %v2305, %v2301
        %v2307 = vadd.s32 %v2302, %v2306
        %v2308 = vadd.s32 %v2307, 536870912
        %v2309 = vshrl.u32 %v2308, 30
        %v2310 = vshll.u32 %v2309, 30
        %v2311 = vsub.s32 %v2307, %v2310
        %vm2312 = vcmp.lt.s32.totalorder %v2311, 0
        %v2313 = vsub.s32 0, %v2311
        %v2314 = vsel %vm2312, %v2313, %v2311
        %v2315 = vclz %v2314
        %v2316 = vsub.s32 %v2315, 2
        %vm2317 = vcmp.gt.s32.totalorder 0, %v2316
        %v2318 = vsel %vm2317, 0, %v2316
        %v2319 = vsub.s32 32, %v2318
        %v2320 = vshll.u32 %v2311, %v2318
        %v2321 = vshrl.u32 %v2303, %v2319
        %v2322 = vor.u32 %v2320, %v2321
        %v2323 = vsub.s32 4294967266, %v2318
        %v2324 = vadd.s32 %v2323, 127
        %v2325 = vshll.u32 %v2324, 23
        %v2326 = vor.u32 4788187, %v2325
        %v2327 = vand.u32 2147483647, %v2326
        %v2329 = vcvt.s32.f32 %v2322
        %v2330 = vmul.f32 %v2329, %v2327
        %v2331 = vxor.u32 %v2330, 2147483648
        %v2332 = vsel %vm2249, %v2331, %v2330
        %v2333 = vsub.s32 4, %v2309
        %v2334 = vsel %vm2249, %v2333, %v2309
        %v2335 = vsel %vm2248, %v575, %v2332
        %v2336 = vsel %vm2248, 0, %v2334
        %v2337 = vcosq.f32.pop %v2335
        %v2338 = vsinq.f32.pop %v2335
        %vm2339 = vweird.f32 %v575
        %v2340 = vadd.s32 %v2336, 3
        %v2341 = vand.u32 %v2340, 3
        %vm2342 = vcmp.lt.s32.totalorder %v2341, 2
        %vm2343 = vcmp.eq.s32.totalorder %v2341, 0
        %v2344 = vxor.u32 %v2338, 2147483648
        %v2345 = vsel %vm2343, %v2337, %v2344
        %vm2346 = vcmp.eq.s32.totalorder %v2341, 2
        %v2347 = vxor.u32 %v2337, 2147483648
        %v2348 = vsel %vm2346, %v2347, %v2338
        %v2349 = vsel %vm2342, %v2345, %v2348
        %v2350 = vsel %vm2339, nan, %v2349
        %v2351 = vand.u32 2147483647, %v576
        %vm2352 = vcmp.le.f32.partialorder %v2351, 0.7853982
        %vm2353 = vcmp.lt.s32.totalorder %v576, 0
        %v2354 = vand.u32 %v576, 2139095040
        %v2355 = vshrl.u32 %v2354, 23
        %v2356 = vsub.s32 %v2355, 127
        %v2357 = vand.u32 2147483647, %v576
        %v2358 = vand.u32 %v2357, 8388607
        %v2359 = vor.u32 %v2358, 8388608
        %v2360 = vsub.s32 0, %v2359
        %v2361 = vadd.s32 %v2356, 1
        %vm2362 = vcmp.gt.s32.totalorder %v2361, 0
        %v2363 = vsel %vm2362, %v2361, 0
        %v2364 = vshrl.u32 %v2363, 5
        %v2365 = vand.u32 %v2363, 31
        %v2366 = vsub.s32 32, %v2365
        %v2367 = vshrl.u32 683565275, %v2366
        %v2368 = vshll.u32 683565275, %v2365
        %v2369 = vshrl.u32 2475754826, %v2366
        %v2370 = vor.u32 %v2368, %v2369
        %v2371 = vshll.u32 2475754826, %v2365
        %v2372 = vshrl.u32 2131351028, %v2366
        %v2373 = vor.u32 %v2371, %v2372
        %v2374 = vshll.u32 2131351028, %v2365
        %v2375 = vshrl.u32 2102212464, %v2366
        %v2376 = vor.u32 %v2374, %v2375
        %v2377 = vshll.u32 2102212464, %v2365
        %v2378 = vshrl.u32 920167782, %v2366
        %v2379 = vor.u32 %v2377, %v2378
        %v2380 = vshll.u32 920167782, %v2365
        %v2381 = vshrl.u32 1326507024, %v2366
        %v2382 = vor.u32 %v2380, %v2381
        %vm2383 = vcmp.lt.s32.totalorder %v2364, 1
        %vm2384 = vcmp.lt.s32.totalorder %v2364, 2
        %vm2385 = vcmp.lt.s32.totalorder %v2364, 3
        %vm2386 = vcmp.lt.s32.totalorder %v2364, 4
        %v2387 = vsel %vm2383, %v2367, %v2370
        %v2388 = vsel %vm2386, %v2376, 2102212464
        %v2389 = vsel %vm2385, %v2373, %v2388
        %v2390 = vsel %vm2384, %v2387, %v2389
        %v2391 = vsel %vm2383, %v2370, %v2373
        %v2392 = vsel %vm2386, %v2379, 920167782
        %v2393 = vsel %vm2385, %v2376, %v2392
        %v2394 = vsel %vm2384, %v2391, %v2393
        %v2395 = vsel %vm2383, %v2373, %v2376
        %v2396 = vsel %vm2386, %v2382, 1326507024
        %v2397 = vsel %vm2385, %v2379, %v2396
        %v2398 = vsel %vm2384, %v2395, %v2397
        %v2399 = vshll.u32 %v2359, 8
        %v2400 = vmul.u32.u64.compose %v2399, %v2398
        %v2401 = vextract.low.u32 %v2400
        %v2402 = vextract.high.u32 %v2400
        %v2403 = vmul.u32.u64.compose %v2399, %v2394
        %v2404 = vextract.low.u32 %v2403
        %v2405 = vextract.high.u32 %v2403
        %v2406 = vmul.u32 %v2399, %v2390
        %v2407 = vadd.s32 %v2402, %v2404
        %vm2408 = vc.u32 %v2402, %v2404
        %v2409 = vadd.s32 %v2405, 1
        %v2410 = vsel %vm2408, %v2409, %v2405
        %v2411 = vadd.s32 %v2406, %v2410
        %v2412 = vadd.s32 %v2411, 536870912
        %v2413 = vshrl.u32 %v2412, 30
        %v2414 = vshll.u32 %v2413, 30
        %v2415 = vsub.s32 %v2411, %v2414
        %vm2416 = vcmp.lt.s32.totalorder %v2415, 0
        %v2417 = vsub.s32 0, %v2415
        %v2418 = vsel %vm2416, %v2417, %v2415
        %v2419 = vclz %v2418
        %v2420 = vsub.s32 %v2419, 2
        %vm2421 = vcmp.gt.s32.totalorder 0, %v2420
        %v2422 = vsel %vm2421, 0, %v2420
        %v2423 = vsub.s32 32, %v2422
        %v2424 = vshll.u32 %v2415, %v2422
        %v2425 = vshrl.u32 %v2407, %v2423
        %v2426 = vor.u32 %v2424, %v2425
        %v2427 = vsub.s32 4294967266, %v2422
        %v2428 = vadd.s32 %v2427, 127
        %v2429 = vshll.u32 %v2428, 23
        %v2430 = vor.u32 4788187, %v2429
        %v2431 = vand.u32 2147483647, %v2430
        %v2433 = vcvt.s32.f32 %v2426
        %v2434 = vmul.f32 %v2433, %v2431
        %v2435 = vxor.u32 %v2434, 2147483648
        %v2436 = vsel %vm2353, %v2435, %v2434
        %v2437 = vsub.s32 4, %v2413
        %v2438 = vsel %vm2353, %v2437, %v2413
        %v2439 = vsel %vm2352, %v576, %v2436
        %v2440 = vsel %vm2352, 0, %v2438
        %v2441 = vcosq.f32.pop %v2439
        %v2442 = vsinq.f32.pop %v2439
        %vm2443 = vweird.f32 %v576
        %v2444 = vadd.s32 %v2440, 3
        %v2445 = vand.u32 %v2444, 3
        %vm2446 = vcmp.lt.s32.totalorder %v2445, 2
        %vm2447 = vcmp.eq.s32.totalorder %v2445, 0
        %v2448 = vxor.u32 %v2442, 2147483648
        %v2449 = vsel %vm2447, %v2441, %v2448
        %vm2450 = vcmp.eq.s32.totalorder %v2445, 2
        %v2451 = vxor.u32 %v2441, 2147483648
        %v2452 = vsel %vm2450, %v2451, %v2442
        %v2453 = vsel %vm2446, %v2449, %v2452
        %v2454 = vsel %vm2443, nan, %v2453
        %v2455 = vand.u32 2147483647, %v577
        %vm2456 = vcmp.le.f32.partialorder %v2455, 0.7853982
        %vm2457 = vcmp.lt.s32.totalorder %v577, 0
        %v2458 = vand.u32 %v577, 2139095040
        %v2459 = vshrl.u32 %v2458, 23
        %v2460 = vsub.s32 %v2459, 127
        %v2461 = vand.u32 2147483647, %v577
        %v2462 = vand.u32 %v2461, 8388607
        %v2463 = vor.u32 %v2462, 8388608
        %v2464 = vsub.s32 0, %v2463
        %v2465 = vadd.s32 %v2460, 1
        %vm2466 = vcmp.gt.s32.totalorder %v2465, 0
        %v2467 = vsel %vm2466, %v2465, 0
        %v2468 = vshrl.u32 %v2467, 5
        %v2469 = vand.u32 %v2467, 31
        %v2470 = vsub.s32 32, %v2469
        %v2471 = vshrl.u32 683565275, %v2470
        %v2472 = vshll.u32 683565275, %v2469
        %v2473 = vshrl.u32 2475754826, %v2470
        %v2474 = vor.u32 %v2472, %v2473
        %v2475 = vshll.u32 2475754826, %v2469
        %v2476 = vshrl.u32 2131351028, %v2470
        %v2477 = vor.u32 %v2475, %v2476
        %v2478 = vshll.u32 2131351028, %v2469
        %v2479 = vshrl.u32 2102212464, %v2470
        %v2480 = vor.u32 %v2478, %v2479
        %v2481 = vshll.u32 2102212464, %v2469
        %v2482 = vshrl.u32 920167782, %v2470
        %v2483 = vor.u32 %v2481, %v2482
        %v2484 = vshll.u32 920167782, %v2469
        %v2485 = vshrl.u32 1326507024, %v2470
        %v2486 = vor.u32 %v2484, %v2485
        %vm2487 = vcmp.lt.s32.totalorder %v2468, 1
        %vm2488 = vcmp.lt.s32.totalorder %v2468, 2
        %vm2489 = vcmp.lt.s32.totalorder %v2468, 3
        %vm2490 = vcmp.lt.s32.totalorder %v2468, 4
        %v2491 = vsel %vm2487, %v2471, %v2474
        %v2492 = vsel %vm2490, %v2480, 2102212464
        %v2493 = vsel %vm2489, %v2477, %v2492
        %v2494 = vsel %vm2488, %v2491, %v2493
        %v2495 = vsel %vm2487, %v2474, %v2477
        %v2496 = vsel %vm2490, %v2483, 920167782
        %v2497 = vsel %vm2489, %v2480, %v2496
        %v2498 = vsel %vm2488, %v2495, %v2497
        %v2499 = vsel %vm2487, %v2477, %v2480
        %v2500 = vsel %vm2490, %v2486, 1326507024
        %v2501 = vsel %vm2489, %v2483, %v2500
        %v2502 = vsel %vm2488, %v2499, %v2501
        %v2503 = vshll.u32 %v2463, 8
        %v2504 = vmul.u32.u64.compose %v2503, %v2502
        %v2505 = vextract.low.u32 %v2504
        %v2506 = vextract.high.u32 %v2504
        %v2507 = vmul.u32.u64.compose %v2503, %v2498
        %v2508 = vextract.low.u32 %v2507
        %v2509 = vextract.high.u32 %v2507
        %v2510 = vmul.u32 %v2503, %v2494
        %v2511 = vadd.s32 %v2506, %v2508
        %vm2512 = vc.u32 %v2506, %v2508
        %v2513 = vadd.s32 %v2509, 1
        %v2514 = vsel %vm2512, %v2513, %v2509
        %v2515 = vadd.s32 %v2510, %v2514
        %v2516 = vadd.s32 %v2515, 536870912
        %v2517 = vshrl.u32 %v2516, 30
        %v2518 = vshll.u32 %v2517, 30
        %v2519 = vsub.s32 %v2515, %v2518
        %vm2520 = vcmp.lt.s32.totalorder %v2519, 0
        %v2521 = vsub.s32 0, %v2519
        %v2522 = vsel %vm2520, %v2521, %v2519
        %v2523 = vclz %v2522
        %v2524 = vsub.s32 %v2523, 2
        %vm2525 = vcmp.gt.s32.totalorder 0, %v2524
        %v2526 = vsel %vm2525, 0, %v2524
        %v2527 = vsub.s32 32, %v2526
        %v2528 = vshll.u32 %v2519, %v2526
        %v2529 = vshrl.u32 %v2511, %v2527
        %v2530 = vor.u32 %v2528, %v2529
        %v2531 = vsub.s32 4294967266, %v2526
        %v2532 = vadd.s32 %v2531, 127
        %v2533 = vshll.u32 %v2532, 23
        %v2534 = vor.u32 4788187, %v2533
        %v2535 = vand.u32 2147483647, %v2534
        %v2537 = vcvt.s32.f32 %v2530
        %v2538 = vmul.f32 %v2537, %v2535
        %v2539 = vxor.u32 %v2538, 2147483648
        %v2540 = vsel %vm2457, %v2539, %v2538
        %v2541 = vsub.s32 4, %v2517
        %v2542 = vsel %vm2457, %v2541, %v2517
        %v2543 = vsel %vm2456, %v577, %v2540
        %v2544 = vsel %vm2456, 0, %v2542
        %v2545 = vcosq.f32.pop %v2543
        %v2546 = vsinq.f32.pop %v2543
        %vm2547 = vweird.f32 %v577
        %v2548 = vadd.s32 %v2544, 3
        %v2549 = vand.u32 %v2548, 3
        %vm2550 = vcmp.lt.s32.totalorder %v2549, 2
        %vm2551 = vcmp.eq.s32.totalorder %v2549, 0
        %v2552 = vxor.u32 %v2546, 2147483648
        %v2553 = vsel %vm2551, %v2545, %v2552
        %vm2554 = vcmp.eq.s32.totalorder %v2549, 2
        %v2555 = vxor.u32 %v2545, 2147483648
        %v2556 = vsel %vm2554, %v2555, %v2546
        %v2557 = vsel %vm2550, %v2553, %v2556
        %v2558 = vsel %vm2547, nan, %v2557
        %v2559 = vand.u32 2147483647, %v578
        %vm2560 = vcmp.le.f32.partialorder %v2559, 0.7853982
        %vm2561 = vcmp.lt.s32.totalorder %v578, 0
        %v2562 = vand.u32 %v578, 2139095040
        %v2563 = vshrl.u32 %v2562, 23
        %v2564 = vsub.s32 %v2563, 127
        %v2565 = vand.u32 2147483647, %v578
        %v2566 = vand.u32 %v2565, 8388607
        %v2567 = vor.u32 %v2566, 8388608
        %v2568 = vsub.s32 0, %v2567
        %v2569 = vadd.s32 %v2564, 1
        %vm2570 = vcmp.gt.s32.totalorder %v2569, 0
        %v2571 = vsel %vm2570, %v2569, 0
        %v2572 = vshrl.u32 %v2571, 5
        %v2573 = vand.u32 %v2571, 31
        %v2574 = vsub.s32 32, %v2573
        %v2575 = vshrl.u32 683565275, %v2574
        %v2576 = vshll.u32 683565275, %v2573
        %v2577 = vshrl.u32 2475754826, %v2574
        %v2578 = vor.u32 %v2576, %v2577
        %v2579 = vshll.u32 2475754826, %v2573
        %v2580 = vshrl.u32 2131351028, %v2574
        %v2581 = vor.u32 %v2579, %v2580
        %v2582 = vshll.u32 2131351028, %v2573
        %v2583 = vshrl.u32 2102212464, %v2574
        %v2584 = vor.u32 %v2582, %v2583
        %v2585 = vshll.u32 2102212464, %v2573
        %v2586 = vshrl.u32 920167782, %v2574
        %v2587 = vor.u32 %v2585, %v2586
        %v2588 = vshll.u32 920167782, %v2573
        %v2589 = vshrl.u32 1326507024, %v2574
        %v2590 = vor.u32 %v2588, %v2589
        %vm2591 = vcmp.lt.s32.totalorder %v2572, 1
        %vm2592 = vcmp.lt.s32.totalorder %v2572, 2
        %vm2593 = vcmp.lt.s32.totalorder %v2572, 3
        %vm2594 = vcmp.lt.s32.totalorder %v2572, 4
        %v2595 = vsel %vm2591, %v2575, %v2578
        %v2596 = vsel %vm2594, %v2584, 2102212464
        %v2597 = vsel %vm2593, %v2581, %v2596
        %v2598 = vsel %vm2592, %v2595, %v2597
        %v2599 = vsel %vm2591, %v2578, %v2581
        %v2600 = vsel %vm2594, %v2587, 920167782
        %v2601 = vsel %vm2593, %v2584, %v2600
        %v2602 = vsel %vm2592, %v2599, %v2601
        %v2603 = vsel %vm2591, %v2581, %v2584
        %v2604 = vsel %vm2594, %v2590, 1326507024
        %v2605 = vsel %vm2593, %v2587, %v2604
        %v2606 = vsel %vm2592, %v2603, %v2605
        %v2607 = vshll.u32 %v2567, 8
        %v2608 = vmul.u32.u64.compose %v2607, %v2606
        %v2609 = vextract.low.u32 %v2608
        %v2610 = vextract.high.u32 %v2608
        %v2611 = vmul.u32.u64.compose %v2607, %v2602
        %v2612 = vextract.low.u32 %v2611
        %v2613 = vextract.high.u32 %v2611
        %v2614 = vmul.u32 %v2607, %v2598
        %v2615 = vadd.s32 %v2610, %v2612
        %vm2616 = vc.u32 %v2610, %v2612
        %v2617 = vadd.s32 %v2613, 1
        %v2618 = vsel %vm2616, %v2617, %v2613
        %v2619 = vadd.s32 %v2614, %v2618
        %v2620 = vadd.s32 %v2619, 536870912
        %v2621 = vshrl.u32 %v2620, 30
        %v2622 = vshll.u32 %v2621, 30
        %v2623 = vsub.s32 %v2619, %v2622
        %vm2624 = vcmp.lt.s32.totalorder %v2623, 0
        %v2625 = vsub.s32 0, %v2623
        %v2626 = vsel %vm2624, %v2625, %v2623
        %v2627 = vclz %v2626
        %v2628 = vsub.s32 %v2627, 2
        %vm2629 = vcmp.gt.s32.totalorder 0, %v2628
        %v2630 = vsel %vm2629, 0, %v2628
        %v2631 = vsub.s32 32, %v2630
        %v2632 = vshll.u32 %v2623, %v2630
        %v2633 = vshrl.u32 %v2615, %v2631
        %v2634 = vor.u32 %v2632, %v2633
        %v2635 = vsub.s32 4294967266, %v2630
        %v2636 = vadd.s32 %v2635, 127
        %v2637 = vshll.u32 %v2636, 23
        %v2638 = vor.u32 4788187, %v2637
        %v2639 = vand.u32 2147483647, %v2638
        %v2641 = vcvt.s32.f32 %v2634
        %v2642 = vmul.f32 %v2641, %v2639
        %v2643 = vxor.u32 %v2642, 2147483648
        %v2644 = vsel %vm2561, %v2643, %v2642
        %v2645 = vsub.s32 4, %v2621
        %v2646 = vsel %vm2561, %v2645, %v2621
        %v2647 = vsel %vm2560, %v578, %v2644
        %v2648 = vsel %vm2560, 0, %v2646
        %v2649 = vcosq.f32.pop %v2647
        %v2650 = vsinq.f32.pop %v2647
        %vm2651 = vweird.f32 %v578
        %v2652 = vadd.s32 %v2648, 3
        %v2653 = vand.u32 %v2652, 3
        %vm2654 = vcmp.lt.s32.totalorder %v2653, 2
        %vm2655 = vcmp.eq.s32.totalorder %v2653, 0
        %v2656 = vxor.u32 %v2650, 2147483648
        %v2657 = vsel %vm2655, %v2649, %v2656
        %vm2658 = vcmp.eq.s32.totalorder %v2653, 2
        %v2659 = vxor.u32 %v2649, 2147483648
        %v2660 = vsel %vm2658, %v2659, %v2650
        %v2661 = vsel %vm2654, %v2657, %v2660
        %v2662 = vsel %vm2651, nan, %v2661
        %v2663 = vand.u32 2147483647, %v579
        %vm2664 = vcmp.le.f32.partialorder %v2663, 0.7853982
        %vm2665 = vcmp.lt.s32.totalorder %v579, 0
        %v2666 = vand.u32 %v579, 2139095040
        %v2667 = vshrl.u32 %v2666, 23
        %v2668 = vsub.s32 %v2667, 127
        %v2669 = vand.u32 2147483647, %v579
        %v2670 = vand.u32 %v2669, 8388607
        %v2671 = vor.u32 %v2670, 8388608
        %v2672 = vsub.s32 0, %v2671
        %v2673 = vadd.s32 %v2668, 1
        %vm2674 = vcmp.gt.s32.totalorder %v2673, 0
        %v2675 = vsel %vm2674, %v2673, 0
        %v2676 = vshrl.u32 %v2675, 5
        %v2677 = vand.u32 %v2675, 31
        %v2678 = vsub.s32 32, %v2677
        %v2679 = vshrl.u32 683565275, %v2678
        %v2680 = vshll.u32 683565275, %v2677
        %v2681 = vshrl.u32 2475754826, %v2678
        %v2682 = vor.u32 %v2680, %v2681
        %v2683 = vshll.u32 2475754826, %v2677
        %v2684 = vshrl.u32 2131351028, %v2678
        %v2685 = vor.u32 %v2683, %v2684
        %v2686 = vshll.u32 2131351028, %v2677
        %v2687 = vshrl.u32 2102212464, %v2678
        %v2688 = vor.u32 %v2686, %v2687
        %v2689 = vshll.u32 2102212464, %v2677
        %v2690 = vshrl.u32 920167782, %v2678
        %v2691 = vor.u32 %v2689, %v2690
        %v2692 = vshll.u32 920167782, %v2677
        %v2693 = vshrl.u32 1326507024, %v2678
        %v2694 = vor.u32 %v2692, %v2693
        %vm2695 = vcmp.lt.s32.totalorder %v2676, 1
        %vm2696 = vcmp.lt.s32.totalorder %v2676, 2
        %vm2697 = vcmp.lt.s32.totalorder %v2676, 3
        %vm2698 = vcmp.lt.s32.totalorder %v2676, 4
        %v2699 = vsel %vm2695, %v2679, %v2682
        %v2700 = vsel %vm2698, %v2688, 2102212464
        %v2701 = vsel %vm2697, %v2685, %v2700
        %v2702 = vsel %vm2696, %v2699, %v2701
        %v2703 = vsel %vm2695, %v2682, %v2685
        %v2704 = vsel %vm2698, %v2691, 920167782
        %v2705 = vsel %vm2697, %v2688, %v2704
        %v2706 = vsel %vm2696, %v2703, %v2705
        %v2707 = vsel %vm2695, %v2685, %v2688
        %v2708 = vsel %vm2698, %v2694, 1326507024
        %v2709 = vsel %vm2697, %v2691, %v2708
        %v2710 = vsel %vm2696, %v2707, %v2709
        %v2711 = vshll.u32 %v2671, 8
        %v2712 = vmul.u32.u64.compose %v2711, %v2710
        %v2713 = vextract.low.u32 %v2712
        %v2714 = vextract.high.u32 %v2712
        %v2715 = vmul.u32.u64.compose %v2711, %v2706
        %v2716 = vextract.low.u32 %v2715
        %v2717 = vextract.high.u32 %v2715
        %v2718 = vmul.u32 %v2711, %v2702
        %v2719 = vadd.s32 %v2714, %v2716
        %vm2720 = vc.u32 %v2714, %v2716
        %v2721 = vadd.s32 %v2717, 1
        %v2722 = vsel %vm2720, %v2721, %v2717
        %v2723 = vadd.s32 %v2718, %v2722
        %v2724 = vadd.s32 %v2723, 536870912
        %v2725 = vshrl.u32 %v2724, 30
        %v2726 = vshll.u32 %v2725, 30
        %v2727 = vsub.s32 %v2723, %v2726
        %vm2728 = vcmp.lt.s32.totalorder %v2727, 0
        %v2729 = vsub.s32 0, %v2727
        %v2730 = vsel %vm2728, %v2729, %v2727
        %v2731 = vclz %v2730
        %v2732 = vsub.s32 %v2731, 2
        %vm2733 = vcmp.gt.s32.totalorder 0, %v2732
        %v2734 = vsel %vm2733, 0, %v2732
        %v2735 = vsub.s32 32, %v2734
        %v2736 = vshll.u32 %v2727, %v2734
        %v2737 = vshrl.u32 %v2719, %v2735
        %v2738 = vor.u32 %v2736, %v2737
        %v2739 = vsub.s32 4294967266, %v2734
        %v2740 = vadd.s32 %v2739, 127
        %v2741 = vshll.u32 %v2740, 23
        %v2742 = vor.u32 4788187, %v2741
        %v2743 = vand.u32 2147483647, %v2742
        %v2745 = vcvt.s32.f32 %v2738
        %v2746 = vmul.f32 %v2745, %v2743
        %v2747 = vxor.u32 %v2746, 2147483648
        %v2748 = vsel %vm2665, %v2747, %v2746
        %v2749 = vsub.s32 4, %v2725
        %v2750 = vsel %vm2665, %v2749, %v2725
        %v2751 = vsel %vm2664, %v579, %v2748
        %v2752 = vsel %vm2664, 0, %v2750
        %v2753 = vcosq.f32.pop %v2751
        %v2754 = vsinq.f32.pop %v2751
        %vm2755 = vweird.f32 %v579
        %v2756 = vadd.s32 %v2752, 3
        %v2757 = vand.u32 %v2756, 3
        %vm2758 = vcmp.lt.s32.totalorder %v2757, 2
        %vm2759 = vcmp.eq.s32.totalorder %v2757, 0
        %v2760 = vxor.u32 %v2754, 2147483648
        %v2761 = vsel %vm2759, %v2753, %v2760
        %vm2762 = vcmp.eq.s32.totalorder %v2757, 2
        %v2763 = vxor.u32 %v2753, 2147483648
        %v2764 = vsel %vm2762, %v2763, %v2754
        %v2765 = vsel %vm2758, %v2761, %v2764
        %v2766 = vsel %vm2755, nan, %v2765
        %v2767 = vand.u32 2147483647, %v580
        %vm2768 = vcmp.le.f32.partialorder %v2767, 0.7853982
        %vm2769 = vcmp.lt.s32.totalorder %v580, 0
        %v2770 = vand.u32 %v580, 2139095040
        %v2771 = vshrl.u32 %v2770, 23
        %v2772 = vsub.s32 %v2771, 127
        %v2773 = vand.u32 2147483647, %v580
        %v2774 = vand.u32 %v2773, 8388607
        %v2775 = vor.u32 %v2774, 8388608
        %v2776 = vsub.s32 0, %v2775
        %v2777 = vadd.s32 %v2772, 1
        %vm2778 = vcmp.gt.s32.totalorder %v2777, 0
        %v2779 = vsel %vm2778, %v2777, 0
        %v2780 = vshrl.u32 %v2779, 5
        %v2781 = vand.u32 %v2779, 31
        %v2782 = vsub.s32 32, %v2781
        %v2783 = vshrl.u32 683565275, %v2782
        %v2784 = vshll.u32 683565275, %v2781
        %v2785 = vshrl.u32 2475754826, %v2782
        %v2786 = vor.u32 %v2784, %v2785
        %v2787 = vshll.u32 2475754826, %v2781
        %v2788 = vshrl.u32 2131351028, %v2782
        %v2789 = vor.u32 %v2787, %v2788
        %v2790 = vshll.u32 2131351028, %v2781
        %v2791 = vshrl.u32 2102212464, %v2782
        %v2792 = vor.u32 %v2790, %v2791
        %v2793 = vshll.u32 2102212464, %v2781
        %v2794 = vshrl.u32 920167782, %v2782
        %v2795 = vor.u32 %v2793, %v2794
        %v2796 = vshll.u32 920167782, %v2781
        %v2797 = vshrl.u32 1326507024, %v2782
        %v2798 = vor.u32 %v2796, %v2797
        %vm2799 = vcmp.lt.s32.totalorder %v2780, 1
        %vm2800 = vcmp.lt.s32.totalorder %v2780, 2
        %vm2801 = vcmp.lt.s32.totalorder %v2780, 3
        %vm2802 = vcmp.lt.s32.totalorder %v2780, 4
        %v2803 = vsel %vm2799, %v2783, %v2786
        %v2804 = vsel %vm2802, %v2792, 2102212464
        %v2805 = vsel %vm2801, %v2789, %v2804
        %v2806 = vsel %vm2800, %v2803, %v2805
        %v2807 = vsel %vm2799, %v2786, %v2789
        %v2808 = vsel %vm2802, %v2795, 920167782
        %v2809 = vsel %vm2801, %v2792, %v2808
        %v2810 = vsel %vm2800, %v2807, %v2809
        %v2811 = vsel %vm2799, %v2789, %v2792
        %v2812 = vsel %vm2802, %v2798, 1326507024
        %v2813 = vsel %vm2801, %v2795, %v2812
        %v2814 = vsel %vm2800, %v2811, %v2813
        %v2815 = vshll.u32 %v2775, 8
        %v2816 = vmul.u32.u64.compose %v2815, %v2814
        %v2817 = vextract.low.u32 %v2816
        %v2818 = vextract.high.u32 %v2816
        %v2819 = vmul.u32.u64.compose %v2815, %v2810
        %v2820 = vextract.low.u32 %v2819
        %v2821 = vextract.high.u32 %v2819
        %v2822 = vmul.u32 %v2815, %v2806
        %v2823 = vadd.s32 %v2818, %v2820
        %vm2824 = vc.u32 %v2818, %v2820
        %v2825 = vadd.s32 %v2821, 1
        %v2826 = vsel %vm2824, %v2825, %v2821
        %v2827 = vadd.s32 %v2822, %v2826
        %v2828 = vadd.s32 %v2827, 536870912
        %v2829 = vshrl.u32 %v2828, 30
        %v2830 = vshll.u32 %v2829, 30
        %v2831 = vsub.s32 %v2827, %v2830
        %vm2832 = vcmp.lt.s32.totalorder %v2831, 0
        %v2833 = vsub.s32 0, %v2831
        %v2834 = vsel %vm2832, %v2833, %v2831
        %v2835 = vclz %v2834
        %v2836 = vsub.s32 %v2835, 2
        %vm2837 = vcmp.gt.s32.totalorder 0, %v2836
        %v2838 = vsel %vm2837, 0, %v2836
        %v2839 = vsub.s32 32, %v2838
        %v2840 = vshll.u32 %v2831, %v2838
        %v2841 = vshrl.u32 %v2823, %v2839
        %v2842 = vor.u32 %v2840, %v2841
        %v2843 = vsub.s32 4294967266, %v2838
        %v2844 = vadd.s32 %v2843, 127
        %v2845 = vshll.u32 %v2844, 23
        %v2846 = vor.u32 4788187, %v2845
        %v2847 = vand.u32 2147483647, %v2846
        %v2849 = vcvt.s32.f32 %v2842
        %v2850 = vmul.f32 %v2849, %v2847
        %v2851 = vxor.u32 %v2850, 2147483648
        %v2852 = vsel %vm2769, %v2851, %v2850
        %v2853 = vsub.s32 4, %v2829
        %v2854 = vsel %vm2769, %v2853, %v2829
        %v2855 = vsel %vm2768, %v580, %v2852
        %v2856 = vsel %vm2768, 0, %v2854
        %v2857 = vcosq.f32.pop %v2855
        %v2858 = vsinq.f32.pop %v2855
        %vm2859 = vweird.f32 %v580
        %v2860 = vadd.s32 %v2856, 3
        %v2861 = vand.u32 %v2860, 3
        %vm2862 = vcmp.lt.s32.totalorder %v2861, 2
        %vm2863 = vcmp.eq.s32.totalorder %v2861, 0
        %v2864 = vxor.u32 %v2858, 2147483648
        %v2865 = vsel %vm2863, %v2857, %v2864
        %vm2866 = vcmp.eq.s32.totalorder %v2861, 2
        %v2867 = vxor.u32 %v2857, 2147483648
        %v2868 = vsel %vm2866, %v2867, %v2858
        %v2869 = vsel %vm2862, %v2865, %v2868
        %v2870 = vsel %vm2859, nan, %v2869
        %v2871 = vand.u32 2147483647, %v581
        %vm2872 = vcmp.le.f32.partialorder %v2871, 0.7853982
        %vm2873 = vcmp.lt.s32.totalorder %v581, 0
        %v2874 = vand.u32 %v581, 2139095040
        %v2875 = vshrl.u32 %v2874, 23
        %v2876 = vsub.s32 %v2875, 127
        %v2877 = vand.u32 2147483647, %v581
        %v2878 = vand.u32 %v2877, 8388607
        %v2879 = vor.u32 %v2878, 8388608
        %v2880 = vsub.s32 0, %v2879
        %v2881 = vadd.s32 %v2876, 1
        %vm2882 = vcmp.gt.s32.totalorder %v2881, 0
        %v2883 = vsel %vm2882, %v2881, 0
        %v2884 = vshrl.u32 %v2883, 5
        %v2885 = vand.u32 %v2883, 31
        %v2886 = vsub.s32 32, %v2885
        %v2887 = vshrl.u32 683565275, %v2886
        %v2888 = vshll.u32 683565275, %v2885
        %v2889 = vshrl.u32 2475754826, %v2886
        %v2890 = vor.u32 %v2888, %v2889
        %v2891 = vshll.u32 2475754826, %v2885
        %v2892 = vshrl.u32 2131351028, %v2886
        %v2893 = vor.u32 %v2891, %v2892
        %v2894 = vshll.u32 2131351028, %v2885
        %v2895 = vshrl.u32 2102212464, %v2886
        %v2896 = vor.u32 %v2894, %v2895
        %v2897 = vshll.u32 2102212464, %v2885
        %v2898 = vshrl.u32 920167782, %v2886
        %v2899 = vor.u32 %v2897, %v2898
        %v2900 = vshll.u32 920167782, %v2885
        %v2901 = vshrl.u32 1326507024, %v2886
        %v2902 = vor.u32 %v2900, %v2901
        %vm2903 = vcmp.lt.s32.totalorder %v2884, 1
        %vm2904 = vcmp.lt.s32.totalorder %v2884, 2
        %vm2905 = vcmp.lt.s32.totalorder %v2884, 3
        %vm2906 = vcmp.lt.s32.totalorder %v2884, 4
        %v2907 = vsel %vm2903, %v2887, %v2890
        %v2908 = vsel %vm2906, %v2896, 2102212464
        %v2909 = vsel %vm2905, %v2893, %v2908
        %v2910 = vsel %vm2904, %v2907, %v2909
        %v2911 = vsel %vm2903, %v2890, %v2893
        %v2912 = vsel %vm2906, %v2899, 920167782
        %v2913 = vsel %vm2905, %v2896, %v2912
        %v2914 = vsel %vm2904, %v2911, %v2913
        %v2915 = vsel %vm2903, %v2893, %v2896
        %v2916 = vsel %vm2906, %v2902, 1326507024
        %v2917 = vsel %vm2905, %v2899, %v2916
        %v2918 = vsel %vm2904, %v2915, %v2917
        %v2919 = vshll.u32 %v2879, 8
        %v2920 = vmul.u32.u64.compose %v2919, %v2918
        %v2921 = vextract.low.u32 %v2920
        %v2922 = vextract.high.u32 %v2920
        %v2923 = vmul.u32.u64.compose %v2919, %v2914
        %v2924 = vextract.low.u32 %v2923
        %v2925 = vextract.high.u32 %v2923
        %v2926 = vmul.u32 %v2919, %v2910
        %v2927 = vadd.s32 %v2922, %v2924
        %vm2928 = vc.u32 %v2922, %v2924
        %v2929 = vadd.s32 %v2925, 1
        %v2930 = vsel %vm2928, %v2929, %v2925
        %v2931 = vadd.s32 %v2926, %v2930
        %v2932 = vadd.s32 %v2931, 536870912
        %v2933 = vshrl.u32 %v2932, 30
        %v2934 = vshll.u32 %v2933, 30
        %v2935 = vsub.s32 %v2931, %v2934
        %vm2936 = vcmp.lt.s32.totalorder %v2935, 0
        %v2937 = vsub.s32 0, %v2935
        %v2938 = vsel %vm2936, %v2937, %v2935
        %v2939 = vclz %v2938
        %v2940 = vsub.s32 %v2939, 2
        %vm2941 = vcmp.gt.s32.totalorder 0, %v2940
        %v2942 = vsel %vm2941, 0, %v2940
        %v2943 = vsub.s32 32, %v2942
        %v2944 = vshll.u32 %v2935, %v2942
        %v2945 = vshrl.u32 %v2927, %v2943
        %v2946 = vor.u32 %v2944, %v2945
        %v2947 = vsub.s32 4294967266, %v2942
        %v2948 = vadd.s32 %v2947, 127
        %v2949 = vshll.u32 %v2948, 23
        %v2950 = vor.u32 4788187, %v2949
        %v2951 = vand.u32 2147483647, %v2950
        %v2953 = vcvt.s32.f32 %v2946
        %v2954 = vmul.f32 %v2953, %v2951
        %v2955 = vxor.u32 %v2954, 2147483648
        %v2956 = vsel %vm2873, %v2955, %v2954
        %v2957 = vsub.s32 4, %v2933
        %v2958 = vsel %vm2873, %v2957, %v2933
        %v2959 = vsel %vm2872, %v581, %v2956
        %v2960 = vsel %vm2872, 0, %v2958
        %v2961 = vcosq.f32.pop %v2959
        %v2962 = vsinq.f32.pop %v2959
        %vm2963 = vweird.f32 %v581
        %v2964 = vadd.s32 %v2960, 3
        %v2965 = vand.u32 %v2964, 3
        %vm2966 = vcmp.lt.s32.totalorder %v2965, 2
        %vm2967 = vcmp.eq.s32.totalorder %v2965, 0
        %v2968 = vxor.u32 %v2962, 2147483648
        %v2969 = vsel %vm2967, %v2961, %v2968
        %vm2970 = vcmp.eq.s32.totalorder %v2965, 2
        %v2971 = vxor.u32 %v2961, 2147483648
        %v2972 = vsel %vm2970, %v2971, %v2962
        %v2973 = vsel %vm2966, %v2969, %v2972
        %v2974 = vsel %vm2963, nan, %v2973
        %v2975 = vand.u32 2147483647, %v582
        %vm2976 = vcmp.le.f32.partialorder %v2975, 0.7853982
        %vm2977 = vcmp.lt.s32.totalorder %v582, 0
        %v2978 = vand.u32 %v582, 2139095040
        %v2979 = vshrl.u32 %v2978, 23
        %v2980 = vsub.s32 %v2979, 127
        %v2981 = vand.u32 2147483647, %v582
        %v2982 = vand.u32 %v2981, 8388607
        %v2983 = vor.u32 %v2982, 8388608
        %v2984 = vsub.s32 0, %v2983
        %v2985 = vadd.s32 %v2980, 1
        %vm2986 = vcmp.gt.s32.totalorder %v2985, 0
        %v2987 = vsel %vm2986, %v2985, 0
        %v2988 = vshrl.u32 %v2987, 5
        %v2989 = vand.u32 %v2987, 31
        %v2990 = vsub.s32 32, %v2989
        %v2991 = vshrl.u32 683565275, %v2990
        %v2992 = vshll.u32 683565275, %v2989
        %v2993 = vshrl.u32 2475754826, %v2990
        %v2994 = vor.u32 %v2992, %v2993
        %v2995 = vshll.u32 2475754826, %v2989
        %v2996 = vshrl.u32 2131351028, %v2990
        %v2997 = vor.u32 %v2995, %v2996
        %v2998 = vshll.u32 2131351028, %v2989
        %v2999 = vshrl.u32 2102212464, %v2990
        %v3000 = vor.u32 %v2998, %v2999
        %v3001 = vshll.u32 2102212464, %v2989
        %v3002 = vshrl.u32 920167782, %v2990
        %v3003 = vor.u32 %v3001, %v3002
        %v3004 = vshll.u32 920167782, %v2989
        %v3005 = vshrl.u32 1326507024, %v2990
        %v3006 = vor.u32 %v3004, %v3005
        %vm3007 = vcmp.lt.s32.totalorder %v2988, 1
        %vm3008 = vcmp.lt.s32.totalorder %v2988, 2
        %vm3009 = vcmp.lt.s32.totalorder %v2988, 3
        %vm3010 = vcmp.lt.s32.totalorder %v2988, 4
        %v3011 = vsel %vm3007, %v2991, %v2994
        %v3012 = vsel %vm3010, %v3000, 2102212464
        %v3013 = vsel %vm3009, %v2997, %v3012
        %v3014 = vsel %vm3008, %v3011, %v3013
        %v3015 = vsel %vm3007, %v2994, %v2997
        %v3016 = vsel %vm3010, %v3003, 920167782
        %v3017 = vsel %vm3009, %v3000, %v3016
        %v3018 = vsel %vm3008, %v3015, %v3017
        %v3019 = vsel %vm3007, %v2997, %v3000
        %v3020 = vsel %vm3010, %v3006, 1326507024
        %v3021 = vsel %vm3009, %v3003, %v3020
        %v3022 = vsel %vm3008, %v3019, %v3021
        %v3023 = vshll.u32 %v2983, 8
        %v3024 = vmul.u32.u64.compose %v3023, %v3022
        %v3025 = vextract.low.u32 %v3024
        %v3026 = vextract.high.u32 %v3024
        %v3027 = vmul.u32.u64.compose %v3023, %v3018
        %v3028 = vextract.low.u32 %v3027
        %v3029 = vextract.high.u32 %v3027
        %v3030 = vmul.u32 %v3023, %v3014
        %v3031 = vadd.s32 %v3026, %v3028
        %vm3032 = vc.u32 %v3026, %v3028
        %v3033 = vadd.s32 %v3029, 1
        %v3034 = vsel %vm3032, %v3033, %v3029
        %v3035 = vadd.s32 %v3030, %v3034
        %v3036 = vadd.s32 %v3035, 536870912
        %v3037 = vshrl.u32 %v3036, 30
        %v3038 = vshll.u32 %v3037, 30
        %v3039 = vsub.s32 %v3035, %v3038
        %vm3040 = vcmp.lt.s32.totalorder %v3039, 0
        %v3041 = vsub.s32 0, %v3039
        %v3042 = vsel %vm3040, %v3041, %v3039
        %v3043 = vclz %v3042
        %v3044 = vsub.s32 %v3043, 2
        %vm3045 = vcmp.gt.s32.totalorder 0, %v3044
        %v3046 = vsel %vm3045, 0, %v3044
        %v3047 = vsub.s32 32, %v3046
        %v3048 = vshll.u32 %v3039, %v3046
        %v3049 = vshrl.u32 %v3031, %v3047
        %v3050 = vor.u32 %v3048, %v3049
        %v3051 = vsub.s32 4294967266, %v3046
        %v3052 = vadd.s32 %v3051, 127
        %v3053 = vshll.u32 %v3052, 23
        %v3054 = vor.u32 4788187, %v3053
        %v3055 = vand.u32 2147483647, %v3054
        %v3057 = vcvt.s32.f32 %v3050
        %v3058 = vmul.f32 %v3057, %v3055
        %v3059 = vxor.u32 %v3058, 2147483648
        %v3060 = vsel %vm2977, %v3059, %v3058
        %v3061 = vsub.s32 4, %v3037
        %v3062 = vsel %vm2977, %v3061, %v3037
        %v3063 = vsel %vm2976, %v582, %v3060
        %v3064 = vsel %vm2976, 0, %v3062
        %v3065 = vcosq.f32.pop %v3063
        %v3066 = vsinq.f32.pop %v3063
        %vm3067 = vweird.f32 %v582
        %v3068 = vadd.s32 %v3064, 3
        %v3069 = vand.u32 %v3068, 3
        %vm3070 = vcmp.lt.s32.totalorder %v3069, 2
        %vm3071 = vcmp.eq.s32.totalorder %v3069, 0
        %v3072 = vxor.u32 %v3066, 2147483648
        %v3073 = vsel %vm3071, %v3065, %v3072
        %vm3074 = vcmp.eq.s32.totalorder %v3069, 2
        %v3075 = vxor.u32 %v3065, 2147483648
        %v3076 = vsel %vm3074, %v3075, %v3066
        %v3077 = vsel %vm3070, %v3073, %v3076
        %v3078 = vsel %vm3067, nan, %v3077
        %v3079 = vpack.c.bf16 %v790, %v686
        %v3080 = vpack.c.bf16 %v998, %v894
        %v3081 = vpack.c.bf16 %v1206, %v1102
        %v3082 = vpack.c.bf16 %v1414, %v1310
        %v3083 = vpack.c.bf16 %v1622, %v1518
        %v3084 = vpack.c.bf16 %v1830, %v1726
        %v3085 = vpack.c.bf16 %v2038, %v1934
        %v3086 = vpack.c.bf16 %v2246, %v2142
        %v3087 = vpack.c.bf16 %v2454, %v2350
        %v3088 = vpack.c.bf16 %v2662, %v2558
        %v3089 = vpack.c.bf16 %v2870, %v2766
        %v3090 = vpack.c.bf16 %v3078, %v2974
        %v3091 = vld [vmem:[%s3] sm:$0xff]
        %v3092 = vld [vmem:[%s3 + $0x8] sm:$0xff]
        %v3093 = vld [vmem:[%s3 + $0x10] sm:$0xff]
        %v3094 = vld [vmem:[%s3 + $0x18] sm:$0xff]
        %v3095 = vld [vmem:[%s3 + $0x20] sm:$0xff]
        %v3096 = vld [vmem:[%s3 + $0x28] sm:$0xff]
        %v3097 = vld [vmem:[%s3 + $0x30] sm:$0xff]
        %v3098 = vld [vmem:[%s3 + $0x38] sm:$0xff]
        %v3099 = vld [vmem:[%s3 + $0x40] sm:$0xff]
        %v3100 = vld [vmem:[%s3 + $0x48] sm:$0xff]
        %v3101 = vld [vmem:[%s3 + $0x50] sm:$0xff]
        %v3102 = vld [vmem:[%s3 + $0x58] sm:$0xff]
        %v3103 = vld [vmem:[%s3 + $0x60] sm:$0xff]
        %v3104 = vld [vmem:[%s3 + $0x68] sm:$0xff]
        %v3105 = vld [vmem:[%s3 + $0x70] sm:$0xff]
        %v3106 = vld [vmem:[%s3 + $0x78] sm:$0xff]
        %v3123 = vunpack.c.l.b16 %v3091
        %v3124 = vunpack.c.h.b16 %v3091
        %v3125 = vunpack.c.l.b16 %v3092
        %v3126 = vunpack.c.h.b16 %v3092
        %v3127 = vunpack.c.l.b16 %v3093
        %v3128 = vunpack.c.h.b16 %v3093
        %v3129 = vunpack.c.l.b16 %v3094
        %v3130 = vunpack.c.h.b16 %v3094
        %v3131 = vunpack.c.l.b16 %v3095
        %v3132 = vunpack.c.h.b16 %v3095
        %v3133 = vunpack.c.l.b16 %v3096
        %v3134 = vunpack.c.h.b16 %v3096
        %v3135 = vunpack.c.l.b16 %v3097
        %v3136 = vunpack.c.h.b16 %v3097
        %v3137 = vunpack.c.l.b16 %v3098
        %v3138 = vunpack.c.h.b16 %v3098
        %v3139 = vunpack.c.l.b16 %v3099
        %v3140 = vunpack.c.h.b16 %v3099
        %v3141 = vunpack.c.l.b16 %v3100
        %v3142 = vunpack.c.h.b16 %v3100
        %v3143 = vunpack.c.l.b16 %v3101
        %v3144 = vunpack.c.h.b16 %v3101
        %v3145 = vunpack.c.l.b16 %v3102
        %v3146 = vunpack.c.h.b16 %v3102
        %v3147 = vunpack.c.l.b16 %v3103
        %v3148 = vunpack.c.h.b16 %v3103
        %v3149 = vunpack.c.l.b16 %v3104
        %v3150 = vunpack.c.h.b16 %v3104
        %v3151 = vunpack.c.l.b16 %v3105
        %v3152 = vunpack.c.h.b16 %v3105
        %v3153 = vunpack.c.l.b16 %v3106
        %v3154 = vunpack.c.h.b16 %v3106
        %v3155 = vpack.c.b16 %v3125, %v3123
        %v3156 = vpack.c.b16 %v3126, %v3124
        %v3157 = vpack.c.b16 %v3129, %v3127
        %v3158 = vpack.c.b16 %v3130, %v3128
        %v3159 = vpack.c.b16 %v3133, %v3131
        %v3160 = vpack.c.b16 %v3134, %v3132
        %v3161 = vpack.c.b16 %v3137, %v3135
        %v3162 = vpack.c.b16 %v3138, %v3136
        %v3163 = vpack.c.b16 %v3141, %v3139
        %v3164 = vpack.c.b16 %v3142, %v3140
        %v3165 = vpack.c.b16 %v3145, %v3143
        %v3166 = vpack.c.b16 %v3146, %v3144
        %v3167 = vpack.c.b16 %v3149, %v3147
        %v3168 = vpack.c.b16 %v3150, %v3148
        %v3169 = vpack.c.b16 %v3153, %v3151
        %v3170 = vpack.c.b16 %v3154, %v3152
        %vm3179 = vcmask 523264
        %v3181 = vsel %vm3179, %v3156, 0
        %v3184 = vsel %vm3179, %v3158, 0
        %v3187 = vsel %vm3179, %v3160, 0
        %v3190 = vsel %vm3179, %v3162, 0
        %v3193 = vsel %vm3179, %v3164, 0
        %v3196 = vsel %vm3179, %v3166, 0
        %v3199 = vsel %vm3179, %v3168, 0
        %v3202 = vsel %vm3179, %v3170, 0
        %3204 = vmatprep.subr.bf16.mxu0 0
        %3205 = vmatpush1.bf16.msra.mxu0 %v3079
        %3206 = vmatprep.subr.bf16.mxu0 0
        %3207 = vmatpush1.bf16.msra.mxu0 %v3080
        %3208 = vmatprep.subr.bf16.mxu0 0
        %3209 = vmatpush1.bf16.msra.mxu0 %v3081
        %3210 = vmatprep.subr.bf16.mxu0 0
        %3211 = vmatpush1.bf16.msra.mxu0 %v3082
        %3212 = vmatprep.subr.bf16.mxu0 0
        %3213 = vmatpush1.bf16.msra.mxu0 %v3083
        %3214 = vmatprep.subr.bf16.mxu0 0
        %3215 = vmatpush1.bf16.msra.mxu0 %v3084
        %3216 = vmatprep.subr.bf16.mxu0 0
        %3217 = vmatpush1.bf16.msra.mxu0 %v3085
        %3218 = vmatprep.subr.bf16.mxu0 0
        %3219 = vmatpush1.bf16.msra.mxu0 %v3086
        %3220 = vmatprep.subr.bf16.mxu0 0
        %3221 = vmatpush1.bf16.msra.mxu0 %v3087
        %3222 = vmatprep.subr.bf16.mxu0 0
        %3223 = vmatpush1.bf16.msra.mxu0 %v3088
        %3224 = vmatprep.subr.bf16.mxu0 0
        %3225 = vmatpush1.bf16.msra.mxu0 %v3089
        %3226 = vmatprep.subr.bf16.mxu0 0
        %3227 = vmatpush1.bf16.msra.mxu0 %v3090
        %3228 = vmatprep.subr.bf16.mxu0 0
        %3229 = vmatpush1.bf16.msra.mxu0 0
        %3230 = vmatprep.subr.bf16.mxu0 0
        %3231 = vmatpush1.bf16.msra.mxu0 0
        %3232 = vmatprep.subr.bf16.mxu0 0
        %3233 = vmatpush1.bf16.msra.mxu0 0
        %3234 = vmatprep.subr.bf16.mxu0 0
        %3235 = vmatpush1.bf16.msra.mxu0 0
        %3236 = vmatprep.mubr.bf16.mxu0 %v3181
        %3237 = vmatmul.mubr.bf16.gmra.mrb[0].mxu0 %v3155
        %v3238 = vpop.f32.mrb[0].mxu0
        %v3239 = vadd.f32 0.0, %v3238
        %v3240 = vpop.f32.mrb[0].mxu0
        %v3241 = vpop.f32.mrb[0].mxu0
        %v3242 = vadd.f32 0.0, %v3241
        %v3243 = vpop.f32.mrb[0].mxu0
        %3244 = vmatprep.mubr.bf16.mxu0 %v3184
        %3245 = vmatmul.mubr.bf16.gmra.mrb[0].mxu0 %v3157
        %v3246 = vpop.f32.mrb[0].mxu0
        %v3247 = vadd.f32 0.0, %v3246
        %v3248 = vpop.f32.mrb[0].mxu0
        %v3249 = vpop.f32.mrb[0].mxu0
        %v3250 = vadd.f32 0.0, %v3249
        %v3251 = vpop.f32.mrb[0].mxu0
        %3252 = vmatprep.mubr.bf16.mxu0 %v3187
        %3253 = vmatmul.mubr.bf16.gmra.mrb[0].mxu0 %v3159
        %v3254 = vpop.f32.mrb[0].mxu0
        %v3255 = vadd.f32 0.0, %v3254
        %v3256 = vpop.f32.mrb[0].mxu0
        %v3257 = vpop.f32.mrb[0].mxu0
        %v3258 = vadd.f32 0.0, %v3257
        %v3259 = vpop.f32.mrb[0].mxu0
        %3260 = vmatprep.mubr.bf16.mxu0 %v3190
        %3261 = vmatmul.mubr.bf16.gmra.mrb[0].mxu0 %v3161
        %v3262 = vpop.f32.mrb[0].mxu0
        %v3263 = vadd.f32 0.0, %v3262
        %v3264 = vpop.f32.mrb[0].mxu0
        %v3265 = vpop.f32.mrb[0].mxu0
        %v3266 = vadd.f32 0.0, %v3265
        %v3267 = vpop.f32.mrb[0].mxu0
        %3268 = vmatprep.mubr.bf16.mxu0 %v3193
        %3269 = vmatmul.mubr.bf16.gmra.mrb[0].mxu0 %v3163
        %v3270 = vpop.f32.mrb[0].mxu0
        %v3271 = vadd.f32 0.0, %v3270
        %v3272 = vpop.f32.mrb[0].mxu0
        %v3273 = vpop.f32.mrb[0].mxu0
        %v3274 = vadd.f32 0.0, %v3273
        %v3275 = vpop.f32.mrb[0].mxu0
        %3276 = vmatprep.mubr.bf16.mxu0 %v3196
        %3277 = vmatmul.mubr.bf16.gmra.mrb[0].mxu0 %v3165
        %v3278 = vpop.f32.mrb[0].mxu0
        %v3279 = vadd.f32 0.0, %v3278
        %v3280 = vpop.f32.mrb[0].mxu0
        %v3281 = vpop.f32.mrb[0].mxu0
        %v3282 = vadd.f32 0.0, %v3281
        %v3283 = vpop.f32.mrb[0].mxu0
        %3284 = vmatprep.mubr.bf16.mxu0 %v3199
        %3285 = vmatmul.mubr.bf16.gmra.mrb[0].mxu0 %v3167
        %v3286 = vpop.f32.mrb[0].mxu0
        %v3287 = vadd.f32 0.0, %v3286
        %v3288 = vpop.f32.mrb[0].mxu0
        %v3289 = vpop.f32.mrb[0].mxu0
        %v3290 = vadd.f32 0.0, %v3289
        %v3291 = vpop.f32.mrb[0].mxu0
        %3292 = vmatprep.mubr.bf16.mxu0 %v3202
        %3293 = vmatmul.mubr.bf16.gmra.mrb[0].mxu0 %v3169
        %v3294 = vpop.f32.mrb[0].mxu0
        %v3295 = vadd.f32 0.0, %v3294
        %v3296 = vpop.f32.mrb[0].mxu0
        %v3297 = vpop.f32.mrb[0].mxu0
        %v3298 = vadd.f32 0.0, %v3297
        %v3299 = vpop.f32.mrb[0].mxu0
        %3300 = vdwg.mxu0
        %v3301 = vmax.f32 %v3239, 0.0
        %v3302 = vmax.f32 %v3242, 0.0
        %v3303 = vmax.f32 %v3247, 0.0
        %v3304 = vmax.f32 %v3250, 0.0
        %v3305 = vmax.f32 %v3255, 0.0
        %v3306 = vmax.f32 %v3258, 0.0
        %v3307 = vmax.f32 %v3263, 0.0
        %v3308 = vmax.f32 %v3266, 0.0
        %v3309 = vmax.f32 %v3271, 0.0
        %v3310 = vmax.f32 %v3274, 0.0
        %v3311 = vmax.f32 %v3279, 0.0
        %v3312 = vmax.f32 %v3282, 0.0
        %v3313 = vmax.f32 %v3287, 0.0
        %v3314 = vmax.f32 %v3290, 0.0
        %v3315 = vmax.f32 %v3295, 0.0
        %v3316 = vmax.f32 %v3298, 0.0
        %v3317 = vld [vmem:[%s4] sm:$0xff]
        %3318 = vmatprep.subr.mxu0 0.0
        %3319 = vmatpush1.msra.mxu0 %v3301
        %3320 = vmatprep.subr.mxu0 0.0
        %3321 = vmatpush1.msra.mxu0 %v3302
        %3322 = vmatprep.subr.mxu0 0.0
        %3323 = vmatpush1.msra.mxu0 %v3303
        %3324 = vmatprep.subr.mxu0 0.0
        %3325 = vmatpush1.msra.mxu0 %v3304
        %3326 = vmatprep.subr.mxu0 0.0
        %3327 = vmatpush1.msra.mxu0 %v3305
        %3328 = vmatprep.subr.mxu0 0.0
        %3329 = vmatpush1.msra.mxu0 %v3306
        %3330 = vmatprep.subr.mxu0 0.0
        %3331 = vmatpush1.msra.mxu0 %v3307
        %3332 = vmatprep.subr.mxu0 0.0
        %3333 = vmatpush1.msra.mxu0 %v3308
        %3334 = vmatprep.subr.mxu0 0.0
        %3335 = vmatpush1.msra.mxu0 %v3309
        %3336 = vmatprep.subr.mxu0 0.0
        %3337 = vmatpush1.msra.mxu0 %v3310
        %3338 = vmatprep.subr.mxu0 0.0
        %3339 = vmatpush1.msra.mxu0 %v3311
        %3340 = vmatprep.subr.mxu0 0.0
        %3341 = vmatpush1.msra.mxu0 %v3312
        %3342 = vmatprep.subr.mxu0 0.0
        %3343 = vmatpush1.msra.mxu0 %v3313
        %3344 = vmatprep.subr.mxu0 0.0
        %3345 = vmatpush1.msra.mxu0 %v3314
        %3346 = vmatprep.subr.mxu0 0.0
        %3347 = vmatpush1.msra.mxu0 %v3315
        %3348 = vmatprep.subr.mxu0 0.0
        %3349 = vmatpush1.msra.mxu0 %v3316
        %3350 = vmatprep.subr.mxu0 0.0
        %3351 = vmatpush1.msra.mxu0 0.0
        %3352 = vmatprep.subr.mxu0 0.0
        %3353 = vmatpush1.msra.mxu0 0.0
        %3354 = vmatprep.subr.mxu0 0.0
        %3355 = vmatpush1.msra.mxu0 0.0
        %3356 = vmatprep.subr.mxu0 0.0
        %3357 = vmatpush1.msra.mxu0 0.0
        %3358 = vmatprep.subr.mxu0 0.0
        %3359 = vmatpush1.msra.mxu0 0.0
        %3360 = vmatprep.subr.mxu0 0.0
        %3361 = vmatpush1.msra.mxu0 0.0
        %3362 = vmatprep.subr.mxu0 0.0
        %3363 = vmatpush1.msra.mxu0 0.0
        %3364 = vmatprep.subr.mxu0 0.0
        %3365 = vmatpush1.msra.mxu0 0.0
        %3366 = vmatprep.subr.mxu0 0.0
        %3367 = vmatpush1.msra.mxu0 0.0
        %3368 = vmatprep.subr.mxu0 0.0
        %3369 = vmatpush1.msra.mxu0 0.0
        %3370 = vmatprep.subr.mxu0 0.0
        %3371 = vmatpush1.msra.mxu0 0.0
        %3372 = vmatprep.subr.mxu0 0.0
        %3373 = vmatpush1.msra.mxu0 0.0
        %3374 = vmatprep.subr.mxu0 0.0
        %3375 = vmatpush1.msra.mxu0 0.0
        %3376 = vmatprep.subr.mxu0 0.0
        %3377 = vmatpush1.msra.mxu0 0.0
        %3378 = vmatprep.subr.mxu0 0.0
        %3379 = vmatpush1.msra.mxu0 0.0
        %3380 = vmatprep.subr.mxu0 0.0
        %3381 = vmatpush1.msra.mxu0 0.0
        %3382 = vmatprep.mubr.f32.mxu0 0.0
        %3383 = vmatmul.mubr.f32.gmra.mrb[0].mxu0 %v3317
        %v3384 = vpop.f32.mrb[0].mxu0
        %v3385 = vadd.f32 0.0, %v3384
        %v3386 = vpop.f32.mrb[0].mxu0
        %3387 = vdwg.mxu0
        %v3388 = vmul.f32 %v3385, 0.5
        %v3389 = vtanh.pop %v3388
        %v3390 = vadd.f32 %v3389, 1.0
        %v3391 = vmul.f32 %v3390, 0.5
        %3392 = vst [vmem:[%s215] sm:$0xff] %v3391
        %s3393 = sand.u32 %s137, 1
        %s3394 = scalar_lea.sflag [#allocation3], %s3393
        %s3395 = sand.u32 %s137, 1
        %s3396 = smul.addr %s3395, 8
        %s3397 = scalar_lea.vmem [#allocation2], %s3396
        // Predicated region
        $region41: #{tpu_custom_call.1} parent=39 // pred_check
          %p3398 = pneg %p147
        $region42: #{tpu_custom_call.1} parent=39 // pred_check_branch
          %3400 = sbr.rel (%p3398) target = $region44
        $region43: #{tpu_custom_call.1} parent=39 // pred_region
          %s3402 = ssub.s32 128, 128
          %3403 = vsyncadd %s3394, %s3402
          %s3404 = smul.addr %s19, 128
          %s3405 = scalar_lea.hbm %s5, %s3404
          %s3407 = sshll.u32 %s3397, 4
          %s3408 = int_to_ptr.vmem [resolvable:$true] %s3407
          %3410 = dma.vmem_to_hbm [thread:$0]  %s3408, 128, %s3405, %s3394
        $region44: #{tpu_custom_call.1} parent=39 // pred_fallthru
          _
      $region40: #{tpu_custom_call.1} parent=5 // pred_fallthru
        _
      %p3411 = scmp.le.s32.totalorder 2, %s14
      // Predicated region
      $region45: #{tpu_custom_call.1} parent=5 // pred_check
        %p3412 = pneg %p3411
      $region46: #{tpu_custom_call.1} parent=5 // pred_check_branch
        %3414 = sbr.rel (%p3412) target = $region48
      $region47: #{tpu_custom_call.1} parent=5 // pred_region
        %s3415 = ssub.s32 %s14, 2
        // Predicated region
        $region49: #{tpu_custom_call.1} parent=47 // pred_check
          %p3416 = pneg %p153
        $region50: #{tpu_custom_call.1} parent=47 // pred_check_branch
          %3418 = sbr.rel (%p3416) target = $region52
        $region51: #{tpu_custom_call.1} parent=47 // pred_region
          %s3419 = sand.u32 %s138, 1
          %s3420 = scalar_lea.sflag [#allocation3], %s3419
          %s3421 = sand.u32 %s138, 1
          %s3422 = smul.addr %s3421, 8
          %s3423 = scalar_lea.vmem [#allocation2], %s3422
          %3424 = dma.done %s3420, 128
        $region52: #{tpu_custom_call.1} parent=47 // pred_fallthru
          _
      $region48: #{tpu_custom_call.1} parent=5 // pred_fallthru
        _
    $region6: #{tpu_custom_call.1} parent=1 // loop_footer
      %s18 = sadd.s32 1, %s14
    $region7: #{tpu_custom_call.1} parent=1 // loop_footer_branch
      %13 = sbr.rel target = $region3
    $region8: #{tpu_custom_call.1} parent=1 // loop_exit
      _
    %3425 = vsyncpa [#allocation3], 1
    %s3426 = scalar_lea.sflag [#allocation3], 1
    %3427 = vsyncpa %s3426, 1

</llo_original>
